<compile_context>
chip_gen: v7x
topology: tpu7x:2x2x1
jax: 0.10.0
libtpu: 0.0.40
codegen_flags: <defaults>
</compile_context>

<pallas_src>
import math
from functools import partial

import jax
import jax.numpy as jnp
import numpy as np
from jax import lax
from jax.experimental import pallas as pl
from jax.experimental.pallas import tpu as pltpu

H = W = 14
HW = H * W                  # 196 patches per modality
NMOD = 3                    # three modalities
NPATCH = NMOD * HW          # 588
NTOK = 1 + NPATCH           # 589 tokens (1 CLS + 3 * 14*14)
HIDDEN = 768                # hard-coded in the module (nn.Linear(768, adapterdim))
NPAD = 640                  # 589 padded to a lane-aligned multiple of 128

# tap order t = kh*3 + kw ; token-column shift for tap (kh, kw) inside one 14x14 image
_TAP_SHIFTS = tuple((kh - 1) * W + (kw - 1) for kh in range(3) for kw in range(3))


# ----------------------------- Pallas kernel -----------------------------

def _adapter_kernel(x_ref, dw_ref, db_ref, w2_ref, uw_ref, ub_ref, m9_ref,
                    o_ref, pad_scr, cat_scr, *, dim, bb):
    qgelu = lambda t: t * jax.nn.sigmoid(1.702 * t)

    dw = dw_ref[...]       # (768, dim)    x.dtype
    db = db_ref[...]       # (dim, 1)      f32
    w2 = w2_ref[...]       # (dim, 9*dim)  f32, CDC folded, output-major tap blocks
    uw = uw_ref[...]       # (dim, 768)    f32
    ub = ub_ref[...]       # (1, 768)      f32
    m9 = m9_ref[...]       # (9, NPAD)     f32 per-tap border mask over token columns

    # Zero the padded token tail once per grid step so rolled-in pad columns are finite
    # (masked contributions must be 0 * finite, never 0 * NaN).
    pad_scr[NTOK:, :] = jnp.zeros((NPAD - NTOK, dim), jnp.float32)

    for b in range(bb):
        # ---- adapter_down (MXU): (589, 768) @ (768, dim) ----
        xd = jnp.dot(x_ref[b], dw, preferred_element_type=jnp.float32)   # (589, dim)

        # ---- go lane-dense: pad tokens to 640 and transpose to (dim, 640) ----
        pad_scr[0:NTOK, :] = xd
        xaT = qgelu(jnp.transpose(pad_scr[...]) + db)                    # (dim, 640)

        # ---- 3x3 CDC conv for all 3 modalities (+ CLS) as ONE matmul ----
        # Tap t is a lane-roll of the whole slab; the mask zeroes image borders,
        # cross-modality leakage and the CLS column for off-centre taps, so conv
        # column 0 is exactly the CLS 1x1 (folded centre tap) path.
        taps = []
        for t, s in enumerate(_TAP_SHIFTS):
            r = xaT if s == 0 else pltpu.roll(xaT, shift=(-s) % NPAD, axis=1)
            if t != 4:                                    # centre tap needs no mask
                r = r * m9[t:t + 1, :]
            taps.append(r)
        tapsT = jnp.concatenate(taps, axis=0)                            # (9*dim, 640)
        convT = jnp.dot(w2, tapsT, preferred_element_type=jnp.float32)   # (dim, 640)
        aT = qgelu(convT)

        # ---- modality sum BEFORE adapter_up (adapter_up is linear) ----
        psumT = (aT[:, 1:1 + HW] + aT[:, 1 + HW:1 + 2 * HW]
                 + aT[:, 1 + 2 * HW:1 + 3 * HW])                         # (dim, 196)

        # ---- adapter_up: one (197, dim) @ (dim, 768) matmul (CLS folded in) ----
        cat_scr[:, 0:1] = aT[:, 0:1]         # CLS conv output
        cat_scr[:, 1:1 + HW] = psumT         # summed patches
        cat = jnp.transpose(cat_scr[...])[0:1 + HW, :]                   # (197, dim)
        up = jnp.dot(cat, uw, preferred_element_type=jnp.float32)        # (197, 768)

        cls_up = (up[0:1, :] + ub).astype(o_ref.dtype)
        patch_up = (up[1:1 + HW, :] + 3.0 * ub).astype(o_ref.dtype)      # cast once

        # Module's post-projection sum + broadcast: three identical patch regions.
        o_ref[b, 0:1, :] = cls_up
        o_ref[b, 1:1 + HW, :] = patch_up
        o_ref[b, 1 + HW:1 + 2 * HW, :] = patch_up
        o_ref[b, 1 + 2 * HW:1 + 3 * HW, :] = patch_up


# ----------------------------- host-side helpers (glue) -----------------------------

def _fold_cdc_weight_T(w_oihw, theta):
    """OIHW torch conv weight -> (O, 9*I) with the CDC term folded into the centre tap.

    Row layout matches the in-kernel tap stacking: W2[o, t*I + i] = w_hwio[kh, kw, i, o],
    t = kh*3 + kw."""
    w_hwio = jnp.transpose(w_oihw.astype(jnp.float32), (2, 3, 1, 0))     # (3,3,I,O)
    if math.fabs(theta - 0.0) >= 1e-8:
        w_hwio = w_hwio.at[1, 1].add(-theta * w_hwio.sum(axis=(0, 1)))
    o, i = w_oihw.shape[0], w_oihw.shape[1]
    return jnp.transpose(w_hwio, (3, 0, 1, 2)).reshape(o, 9 * i)


def _make_tap_mask():
    """(9, NPAD) f32 mask: mask[t, c] = 1 iff token column c (a patch) has an in-image
    neighbour for tap t.  Column 0 (CLS) and columns >= 589 (padding) stay 0, which also
    kills cross-modality / wrap-around leakage from the full-slab lane rolls."""
    q = np.arange(HW)
    qi, qj = q // W, q % W
    m = np.zeros((9, NPAD), np.float32)
    for t in range(9):
        di, dj = t // 3 - 1, t % 3 - 1
        valid = ((qi + di >= 0) & (qi + di < H) &
                 (qj + dj >= 0) & (qj + dj < W)).astype(np.float32)
        m[t, 1:1 + NPATCH] = np.tile(valid, NMOD)
    return jnp.asarray(m)


def _pick_block_batch(batch):
    # Amortize per-grid-step overhead, but keep >= 2 grid steps so the two v7x
    # TensorCores stay load balanced on the "parallel" batch axis.
    for bb in (4, 3, 2):
        if batch % bb == 0 and batch // bb >= 2:
            return bb
    return 1


def convpass_3modality_forward(x, params, theta=0.0):
    """Fused forward of Convpass_3modality_independent_AllAdded. x: (B, 589, 768)."""
    B, N, C = x.shape
    assert N == NTOK and C == HIDDEN, "module hard-codes 768 hidden and 1+3*14*14 tokens"
    dim = params["down_w"].shape[1]

    dw = params["down_w"].astype(x.dtype)                   # MXU eats the I/O dtype
    db = params["down_b"].astype(jnp.float32).reshape(dim, 1)
    w2 = _fold_cdc_weight_T(params["conv_w_oihw"], theta)   # (dim, 9*dim)
    uw = params["up_w"].astype(jnp.float32)                 # (dim, 768)
    ub = params["up_b"].astype(jnp.float32).reshape(1, C)
    mask9 = _make_tap_mask()                                # (9, 640), ~23 KB

    BB = _pick_block_batch(B)
    grid = (B // BB,)

    itemsize = x.dtype.itemsize
    io_bytes = 2 * BB * N * C * itemsize                    # one input + one output buffer
    vmem_limit = int(min(max(2 * io_bytes + (8 << 20), 24 << 20), 64 << 20))
    cost = pl.CostEstimate(
        flops=2 * B * (N * C * dim + 9 * dim * dim * NPAD + (HW + 1) * dim * C),
        transcendentals=B * dim * 2 * NPAD,
        bytes_accessed=2 * B * N * C * itemsize,
    )

    return pl.pallas_call(
        partial(_adapter_kernel, dim=dim, bb=BB),
        out_shape=jax.ShapeDtypeStruct((B, N, C), x.dtype),
        grid_spec=pltpu.PrefetchScalarGridSpec(
            num_scalar_prefetch=0,
            grid=grid,
            in_specs=[
                pl.BlockSpec((BB, N, C), lambda b: (b, 0, 0)),      # x (batch block)
                pl.BlockSpec((C, dim), lambda b: (0, 0)),           # down_w
                pl.BlockSpec((dim, 1), lambda b: (0, 0)),           # down_b (column)
                pl.BlockSpec((dim, 9 * dim), lambda b: (0, 0)),     # folded conv taps
                pl.BlockSpec((dim, C), lambda b: (0, 0)),           # up_w
                pl.BlockSpec((1, C), lambda b: (0, 0)),             # up_b
                pl.BlockSpec((9, NPAD), lambda b: (0, 0)),          # per-tap border mask
            ],
            out_specs=pl.BlockSpec((BB, N, C), lambda b: (b, 0, 0)),
            scratch_shapes=[
                pltpu.VMEM((NPAD, dim), jnp.float32),               # token-padded bottleneck
                pltpu.VMEM((dim, 256), jnp.float32),                # [CLS | summed patches]
            ],
        ),
        compiler_params=pltpu.CompilerParams(
            dimension_semantics=("parallel",),
            vmem_limit_bytes=vmem_limit,
        ),
        cost_estimate=cost,
    )(x, dw, db, w2, uw, ub, mask9)


# ----------------------------- pure-JAX literal reference -----------------------------

def reference_forward(x, params, theta=0.0):
    B, N, C = x.shape
    dim = params["down_w"].shape[1]
    prec = lax.Precision.HIGHEST
    qg = lambda t: t * jax.nn.sigmoid(1.702 * t)

    xd = qg(jnp.einsum("bnc,cd->bnd", x, params["down_w"], precision=prec)
            + params["down_b"])                                         # (B, 589, dim)
    w_hwio = jnp.transpose(params["conv_w_oihw"], (2, 3, 1, 0))         # (3,3,I,O)
    kdiff = w_hwio.sum(axis=(0, 1))                                     # (I,O)
    use_cdc = math.fabs(theta - 0.0) >= 1e-8

    def conv_cd(img):                                                   # img: (B,h,w,dim)
        h, w = img.shape[1], img.shape[2]
        pad = jnp.pad(img, ((0, 0), (1, 1), (1, 1), (0, 0)))
        out = jnp.zeros_like(img)
        for kh in range(3):
            for kw in range(3):
                out = out + jnp.einsum("bhwc,cd->bhwd",
                                       pad[:, kh:kh + h, kw:kw + w, :],
                                       w_hwio[kh, kw], precision=prec)
        if use_cdc:
            out = out - theta * jnp.einsum("bhwc,cd->bhwd", img, kdiff, precision=prec)
        return out

    patches = []
    for m in range(NMOD):
        img = xd[:, 1 + HW * m:1 + HW * (m + 1), :].reshape(B, H, W, dim)
        patches.append(conv_cd(img).reshape(B, HW, dim))
    cls_img = xd[:, :1, :].reshape(B, 1, 1, dim)
    cls_out = conv_cd(cls_img).reshape(B, 1, dim)

    cat = qg(jnp.concatenate([cls_out] + patches, axis=1))              # (B, 589, dim)
    xup = jnp.einsum("bnd,dc->bnc", cat, params["up_w"], precision=prec) + params["up_b"]
    s = xup[:, 1:1 + HW] + xup[:, 1 + HW:1 + 2 * HW] + xup[:, 1 + 2 * HW:]
    xup = xup.at[:, 1:1 + HW].set(s)
    xup = xup.at[:, 1 + HW:1 + 2 * HW].set(s)
    xup = xup.at[:, 1 + 2 * HW:].set(s)
    return xup


# ----------------------------- main -----------------------------

def make_params(key, dim):
    # PyTorch zero-inits adapter_up (output would be identically zero), so use
    # deterministic non-zero values to make the test meaningful.
    k1, k2, k3, k4, k5 = jax.random.split(key, 5)
    return dict(
        down_w=0.05 * jax.random.normal(k1, (HIDDEN, dim), jnp.float32),
        down_b=0.02 * jax.random.normal(k2, (dim,), jnp.float32),
        up_w=0.02 * jax.random.normal(k3, (dim, HIDDEN), jnp.float32),
        up_b=0.02 * jax.random.normal(k4, (HIDDEN,), jnp.float32),
        conv_w_oihw=0.1 * jax.random.normal(k5, (dim, dim, 3, 3), jnp.float32),
    )


if __name__ == "__main__":
    ADAPTER_DIM = 8
    key = jax.random.PRNGKey(0)
    kp, kx = jax.random.split(key)
    params = make_params(kp, ADAPTER_DIM)

    # Cover both CDC modes (theta=0 / 0.7) and both batch-blocking paths
    # (B=2 -> one item per grid step, B=4 -> two items per grid step).
    for batch, theta in ((2, 0.0), (2, 0.7), (4, 0.7)):
        x = jax.random.normal(jax.random.fold_in(kx, batch),
                              (batch, NTOK, HIDDEN), jnp.float32)
        out = jax.block_until_ready(convpass_3modality_forward(x, params, theta=theta))
        ref = reference_forward(x, params, theta=theta)
        assert out.shape == (batch, NTOK, HIDDEN)
        np.testing.assert_allclose(np.asarray(out), np.asarray(ref),
                                   rtol=5e-3, atol=5e-3)

    print("KERNEL_OK")
</pallas_src>

<mosaic_0001>
module attributes {stable_mosaic.version = 11 : i64} {
  func.func @_adapter_kernel(%arg0: i32, %arg1: memref<1x589x768xf32, #tpu.memory_space<vmem>>, %arg2: memref<768x8xf32, #tpu.memory_space<vmem>>, %arg3: memref<8x1xf32, #tpu.memory_space<vmem>>, %arg4: memref<8x72xf32, #tpu.memory_space<vmem>>, %arg5: memref<8x768xf32, #tpu.memory_space<vmem>>, %arg6: memref<1x768xf32, #tpu.memory_space<vmem>>, %arg7: memref<9x640xf32, #tpu.memory_space<vmem>>, %arg8: memref<1x589x768xf32, #tpu.memory_space<vmem>>, %arg9: memref<640x8xf32, #tpu.memory_space<vmem>>, %arg10: memref<8x256xf32, #tpu.memory_space<vmem>>) attributes {dimension_semantics = [#tpu.dimension_semantics<parallel>], iteration_bounds = array<i64: 2>, scalar_prefetch = 0 : i64, scratch_operands = 2 : i64, tpu.core_type = #tpu.core_type<tc>, window_params = [{transform_indices = @transform_0, window_bounds = array<i64: 1, 589, 768>}, {pipeline_mode = #tpu.pipeline_mode<synchronous>, transform_indices = @transform_1, window_bounds = array<i64: 768, 8>}, {pipeline_mode = #tpu.pipeline_mode<synchronous>, transform_indices = @transform_2, window_bounds = array<i64: 8, 1>}, {pipeline_mode = #tpu.pipeline_mode<synchronous>, transform_indices = @transform_3, window_bounds = array<i64: 8, 72>}, {pipeline_mode = #tpu.pipeline_mode<synchronous>, transform_indices = @transform_4, window_bounds = array<i64: 8, 768>}, {pipeline_mode = #tpu.pipeline_mode<synchronous>, transform_indices = @transform_5, window_bounds = array<i64: 1, 768>}, {pipeline_mode = #tpu.pipeline_mode<synchronous>, transform_indices = @transform_6, window_bounds = array<i64: 9, 640>}, {transform_indices = @transform_7, window_bounds = array<i64: 1, 589, 768>}]} {
    %c0 = arith.constant 0 : index
    %c0_0 = arith.constant 0 : index
    %0 = vector.load %arg2[%c0, %c0_0] : memref<768x8xf32, #tpu.memory_space<vmem>>, vector<768x8xf32>
    %c0_1 = arith.constant 0 : index
    %c0_2 = arith.constant 0 : index
    %1 = vector.load %arg3[%c0_1, %c0_2] : memref<8x1xf32, #tpu.memory_space<vmem>>, vector<8x1xf32>
    %c0_3 = arith.constant 0 : index
    %c0_4 = arith.constant 0 : index
    %2 = vector.load %arg4[%c0_3, %c0_4] : memref<8x72xf32, #tpu.memory_space<vmem>>, vector<8x72xf32>
    %c0_5 = arith.constant 0 : index
    %c0_6 = arith.constant 0 : index
    %3 = vector.load %arg5[%c0_5, %c0_6] : memref<8x768xf32, #tpu.memory_space<vmem>>, vector<8x768xf32>
    %c0_7 = arith.constant 0 : index
    %c0_8 = arith.constant 0 : index
    %4 = vector.load %arg6[%c0_7, %c0_8] : memref<1x768xf32, #tpu.memory_space<vmem>>, vector<1x768xf32>
    %c0_9 = arith.constant 0 : index
    %c0_10 = arith.constant 0 : index
    %5 = vector.load %arg7[%c0_9, %c0_10] : memref<9x640xf32, #tpu.memory_space<vmem>>, vector<9x640xf32>
    %cst = arith.constant 0.000000e+00 : f32
    %6 = vector.broadcast %cst : f32 to vector<51x8xf32>
    %c589 = arith.constant 589 : index
    %c0_11 = arith.constant 0 : index
    %7 = vector.load %arg9[%c589, %c0_11] : memref<640x8xf32, #tpu.memory_space<vmem>>, vector<51x8xf32>
    tpu.vector_store %arg9[%c589, %c0_11], %6 {strides = array<i32>} : memref<640x8xf32, #tpu.memory_space<vmem>>, vector<51x8xf32>,
    %c0_12 = arith.constant 0 : index
    %c0_13 = arith.constant 0 : index
    %c0_14 = arith.constant 0 : index
    %8 = vector.load %arg1[%c0_12, %c0_13, %c0_14] : memref<1x589x768xf32, #tpu.memory_space<vmem>>, vector<1x589x768xf32>
    %9 = vector.shape_cast %8 : vector<1x589x768xf32> to vector<589x768xf32>
    %cst_15 = arith.constant dense<0.000000e+00> : vector<589x8xf32>
    %10 = tpu.matmul %9, %0, %cst_15 {dimension_numbers = #tpu.dot_dimension_numbers<[1], [0], [0], [1], [0, 0, 1, 1], [], []>} : vector<589x768xf32>, vector<768x8xf32>, vector<589x8xf32> -> vector<589x8xf32>
    %c0_16 = arith.constant 0 : index
    %c0_17 = arith.constant 0 : index
    %11 = vector.load %arg9[%c0_16, %c0_17] : memref<640x8xf32, #tpu.memory_space<vmem>>, vector<589x8xf32>
    tpu.vector_store %arg9[%c0_16, %c0_17], %10 {strides = array<i32>} : memref<640x8xf32, #tpu.memory_space<vmem>>, vector<589x8xf32>,
    %c0_18 = arith.constant 0 : index
    %c0_19 = arith.constant 0 : index
    %12 = vector.load %arg9[%c0_18, %c0_19] : memref<640x8xf32, #tpu.memory_space<vmem>>, vector<640x8xf32>
    %13 = tpu.transpose %12, [1, 0] : vector<640x8xf32> -> vector<8x640xf32>
    %14 = vector.broadcast %1 : vector<8x1xf32> to vector<8x640xf32>
    %15 = arith.addf %13, %14 : vector<8x640xf32>
    %cst_20 = arith.constant 1.702000e+00 : f32
    %16 = vector.broadcast %cst_20 : f32 to vector<8x640xf32>
    %17 = arith.mulf %16, %15 : vector<8x640xf32>
    %18 = arith.negf %17 : vector<8x640xf32>
    %19 = math.exp %18 : vector<8x640xf32>
    %cst_21 = arith.constant 1.000000e+00 : f32
    %20 = vector.broadcast %cst_21 : f32 to vector<8x640xf32>
    %21 = arith.addf %20, %19 : vector<8x640xf32>
    %22 = arith.divf %20, %21 : vector<8x640xf32>
    %23 = arith.mulf %15, %22 : vector<8x640xf32>
    %c15_i32 = arith.constant 15 : i32
    %24 = tpu.dynamic_rotate %23 by %c15_i32 dim 1 : vector<8x640xf32>, i32 -> vector<8x640xf32>
    %25 = vector.extract_strided_slice %5 {offsets = [0, 0], sizes = [1, 640], strides = [1, 1]} : vector<9x640xf32> to vector<1x640xf32>
    %26 = vector.broadcast %25 : vector<1x640xf32> to vector<8x640xf32>
    %27 = arith.mulf %24, %26 : vector<8x640xf32>
    %c14_i32 = arith.constant 14 : i32
    %28 = tpu.dynamic_rotate %23 by %c14_i32 dim 1 : vector<8x640xf32>, i32 -> vector<8x640xf32>
    %29 = vector.extract_strided_slice %5 {offsets = [1, 0], sizes = [1, 640], strides = [1, 1]} : vector<9x640xf32> to vector<1x640xf32>
    %30 = vector.broadcast %29 : vector<1x640xf32> to vector<8x640xf32>
    %31 = arith.mulf %28, %30 : vector<8x640xf32>
    %c13_i32 = arith.constant 13 : i32
    %32 = tpu.dynamic_rotate %23 by %c13_i32 dim 1 : vector<8x640xf32>, i32 -> vector<8x640xf32>
    %33 = vector.extract_strided_slice %5 {offsets = [2, 0], sizes = [1, 640], strides = [1, 1]} : vector<9x640xf32> to vector<1x640xf32>
    %34 = vector.broadcast %33 : vector<1x640xf32> to vector<8x640xf32>
    %35 = arith.mulf %32, %34 : vector<8x640xf32>
    %c1_i32 = arith.constant 1 : i32
    %36 = tpu.dynamic_rotate %23 by %c1_i32 dim 1 : vector<8x640xf32>, i32 -> vector<8x640xf32>
    %37 = vector.extract_strided_slice %5 {offsets = [3, 0], sizes = [1, 640], strides = [1, 1]} : vector<9x640xf32> to vector<1x640xf32>
    %38 = vector.broadcast %37 : vector<1x640xf32> to vector<8x640xf32>
    %39 = arith.mulf %36, %38 : vector<8x640xf32>
    %c639_i32 = arith.constant 639 : i32
    %40 = tpu.dynamic_rotate %23 by %c639_i32 dim 1 : vector<8x640xf32>, i32 -> vector<8x640xf32>
    %41 = vector.extract_strided_slice %5 {offsets = [5, 0], sizes = [1, 640], strides = [1, 1]} : vector<9x640xf32> to vector<1x640xf32>
    %42 = vector.broadcast %41 : vector<1x640xf32> to vector<8x640xf32>
    %43 = arith.mulf %40, %42 : vector<8x640xf32>
    %c627_i32 = arith.constant 627 : i32
    %44 = tpu.dynamic_rotate %23 by %c627_i32 dim 1 : vector<8x640xf32>, i32 -> vector<8x640xf32>
    %45 = vector.extract_strided_slice %5 {offsets = [6, 0], sizes = [1, 640], strides = [1, 1]} : vector<9x640xf32> to vector<1x640xf32>
    %46 = vector.broadcast %45 : vector<1x640xf32> to vector<8x640xf32>
    %47 = arith.mulf %44, %46 : vector<8x640xf32>
    %c626_i32 = arith.constant 626 : i32
    %48 = tpu.dynamic_rotate %23 by %c626_i32 dim 1 : vector<8x640xf32>, i32 -> vector<8x640xf32>
    %49 = vector.extract_strided_slice %5 {offsets = [7, 0], sizes = [1, 640], strides = [1, 1]} : vector<9x640xf32> to vector<1x640xf32>
    %50 = vector.broadcast %49 : vector<1x640xf32> to vector<8x640xf32>
    %51 = arith.mulf %48, %50 : vector<8x640xf32>
    %c625_i32 = arith.constant 625 : i32
    %52 = tpu.dynamic_rotate %23 by %c625_i32 dim 1 : vector<8x640xf32>, i32 -> vector<8x640xf32>
    %53 = vector.extract_strided_slice %5 {offsets = [8, 0], sizes = [1, 640], strides = [1, 1]} : vector<9x640xf32> to vector<1x640xf32>
    %54 = vector.broadcast %53 : vector<1x640xf32> to vector<8x640xf32>
    %55 = arith.mulf %52, %54 : vector<8x640xf32>
    %56 = tpu.concatenate %27, %31, %35, %39, %23, %43, %47, %51, %55 in 0 : vector<8x640xf32>, vector<8x640xf32>, vector<8x640xf32>, vector<8x640xf32>, vector<8x640xf32>, vector<8x640xf32>, vector<8x640xf32>, vector<8x640xf32>, vector<8x640xf32> -> vector<72x640xf32>
    %cst_22 = arith.constant dense<0.000000e+00> : vector<8x640xf32>
    %57 = tpu.matmul %2, %56, %cst_22 {dimension_numbers = #tpu.dot_dimension_numbers<[1], [0], [0], [1], [0, 0, 1, 1], [], []>} : vector<8x72xf32>, vector<72x640xf32>, vector<8x640xf32> -> vector<8x640xf32>
    %cst_23 = arith.constant 1.702000e+00 : f32
    %58 = vector.broadcast %cst_23 : f32 to vector<8x640xf32>
    %59 = arith.mulf %58, %57 : vector<8x640xf32>
    %60 = arith.negf %59 : vector<8x640xf32>
    %61 = math.exp %60 : vector<8x640xf32>
    %cst_24 = arith.constant 1.000000e+00 : f32
    %62 = vector.broadcast %cst_24 : f32 to vector<8x640xf32>
    %63 = arith.addf %62, %61 : vector<8x640xf32>
    %64 = arith.divf %62, %63 : vector<8x640xf32>
    %65 = arith.mulf %57, %64 : vector<8x640xf32>
    %66 = vector.extract_strided_slice %65 {offsets = [0, 1], sizes = [8, 196], strides = [1, 1]} : vector<8x640xf32> to vector<8x196xf32>
    %67 = vector.extract_strided_slice %65 {offsets = [0, 197], sizes = [8, 196], strides = [1, 1]} : vector<8x640xf32> to vector<8x196xf32>
    %68 = arith.addf %66, %67 : vector<8x196xf32>
    %69 = vector.extract_strided_slice %65 {offsets = [0, 393], sizes = [8, 196], strides = [1, 1]} : vector<8x640xf32> to vector<8x196xf32>
    %70 = arith.addf %68, %69 : vector<8x196xf32>
    %71 = vector.extract_strided_slice %65 {offsets = [0, 0], sizes = [8, 1], strides = [1, 1]} : vector<8x640xf32> to vector<8x1xf32>
    %c0_25 = arith.constant 0 : index
    %c0_26 = arith.constant 0 : index
    %72 = vector.load %arg10[%c0_25, %c0_26] : memref<8x256xf32, #tpu.memory_space<vmem>>, vector<8x1xf32>
    tpu.vector_store %arg10[%c0_25, %c0_26], %71 {strides = array<i32>} : memref<8x256xf32, #tpu.memory_space<vmem>>, vector<8x1xf32>,
    %c0_27 = arith.constant 0 : index
    %c1 = arith.constant 1 : index
    %73 = vector.load %arg10[%c0_27, %c1] : memref<8x256xf32, #tpu.memory_space<vmem>>, vector<8x196xf32>
    tpu.vector_store %arg10[%c0_27, %c1], %70 {strides = array<i32>} : memref<8x256xf32, #tpu.memory_space<vmem>>, vector<8x196xf32>,
    %c0_28 = arith.constant 0 : index
    %c0_29 = arith.constant 0 : index
    %74 = vector.load %arg10[%c0_28, %c0_29] : memref<8x256xf32, #tpu.memory_space<vmem>>, vector<8x256xf32>
    %75 = tpu.transpose %74, [1, 0] : vector<8x256xf32> -> vector<256x8xf32>
    %76 = vector.extract_strided_slice %75 {offsets = [0, 0], sizes = [197, 8], strides = [1, 1]} : vector<256x8xf32> to vector<197x8xf32>
    %cst_30 = arith.constant dense<0.000000e+00> : vector<197x768xf32>
    %77 = tpu.matmul %76, %3, %cst_30 {dimension_numbers = #tpu.dot_dimension_numbers<[1], [0], [0], [1], [0, 0, 1, 1], [], []>} : vector<197x8xf32>, vector<8x768xf32>, vector<197x768xf32> -> vector<197x768xf32>
    %78 = vector.extract_strided_slice %77 {offsets = [0, 0], sizes = [1, 768], strides = [1, 1]} : vector<197x768xf32> to vector<1x768xf32>
    %79 = arith.addf %78, %4 : vector<1x768xf32>
    %80 = vector.extract_strided_slice %77 {offsets = [1, 0], sizes = [196, 768], strides = [1, 1]} : vector<197x768xf32> to vector<196x768xf32>
    %cst_31 = arith.constant 3.000000e+00 : f32
    %81 = vector.broadcast %cst_31 : f32 to vector<1x768xf32>
    %82 = arith.mulf %81, %4 : vector<1x768xf32>
    %83 = vector.broadcast %82 : vector<1x768xf32> to vector<196x768xf32>
    %84 = arith.addf %80, %83 : vector<196x768xf32>
    %c0_32 = arith.constant 0 : index
    %c0_33 = arith.constant 0 : index
    %c0_34 = arith.constant 0 : index
    %85 = vector.load %arg8[%c0_32, %c0_33, %c0_34] : memref<1x589x768xf32, #tpu.memory_space<vmem>>, vector<1x1x768xf32>
    %86 = vector.shape_cast %85 : vector<1x1x768xf32> to vector<1x768xf32>
    %87 = vector.shape_cast %79 : vector<1x768xf32> to vector<1x1x768xf32>
    tpu.vector_store %arg8[%c0_32, %c0_33, %c0_34], %87 {strides = array<i32>} : memref<1x589x768xf32, #tpu.memory_space<vmem>>, vector<1x1x768xf32>,
    %c0_35 = arith.constant 0 : index
    %c1_36 = arith.constant 1 : index
    %c0_37 = arith.constant 0 : index
    %88 = vector.load %arg8[%c0_35, %c1_36, %c0_37] : memref<1x589x768xf32, #tpu.memory_space<vmem>>, vector<1x196x768xf32>
    %89 = vector.shape_cast %88 : vector<1x196x768xf32> to vector<196x768xf32>
    %90 = vector.shape_cast %84 : vector<196x768xf32> to vector<1x196x768xf32>
    tpu.vector_store %arg8[%c0_35, %c1_36, %c0_37], %90 {strides = array<i32>} : memref<1x589x768xf32, #tpu.memory_space<vmem>>, vector<1x196x768xf32>,
    %c0_38 = arith.constant 0 : index
    %c197 = arith.constant 197 : index
    %c0_39 = arith.constant 0 : index
    %91 = vector.load %arg8[%c0_38, %c197, %c0_39] : memref<1x589x768xf32, #tpu.memory_space<vmem>>, vector<1x196x768xf32>
    %92 = vector.shape_cast %91 : vector<1x196x768xf32> to vector<196x768xf32>
    %93 = vector.shape_cast %84 : vector<196x768xf32> to vector<1x196x768xf32>
    tpu.vector_store %arg8[%c0_38, %c197, %c0_39], %93 {strides = array<i32>} : memref<1x589x768xf32, #tpu.memory_space<vmem>>, vector<1x196x768xf32>,
    %c0_40 = arith.constant 0 : index
    %c393 = arith.constant 393 : index
    %c0_41 = arith.constant 0 : index
    %94 = vector.load %arg8[%c0_40, %c393, %c0_41] : memref<1x589x768xf32, #tpu.memory_space<vmem>>, vector<1x196x768xf32>
    %95 = vector.shape_cast %94 : vector<1x196x768xf32> to vector<196x768xf32>
    %96 = vector.shape_cast %84 : vector<196x768xf32> to vector<1x196x768xf32>
    tpu.vector_store %arg8[%c0_40, %c393, %c0_41], %96 {strides = array<i32>} : memref<1x589x768xf32, #tpu.memory_space<vmem>>, vector<1x196x768xf32>,
    return
  }
  func.func @transform_0(%arg0: i32) -> (i32, i32, i32) {
    %c0_i32 = arith.constant 0 : i32
    %c0_i32_0 = arith.constant 0 : i32
    %c0_i32_1 = arith.constant 0 : i32
    return %arg0, %c0_i32, %c0_i32_0 : i32, i32, i32
  }
  func.func @transform_1(%arg0: i32) -> (i32, i32) {
    %c0_i32 = arith.constant 0 : i32
    %c0_i32_0 = arith.constant 0 : i32
    %c0_i32_1 = arith.constant 0 : i32
    return %c0_i32, %c0_i32_0 : i32, i32
  }
  func.func @transform_2(%arg0: i32) -> (i32, i32) {
    %c0_i32 = arith.constant 0 : i32
    %c0_i32_0 = arith.constant 0 : i32
    %c0_i32_1 = arith.constant 0 : i32
    return %c0_i32, %c0_i32_0 : i32, i32
  }
  func.func @transform_3(%arg0: i32) -> (i32, i32) {
    %c0_i32 = arith.constant 0 : i32
    %c0_i32_0 = arith.constant 0 : i32
    %c0_i32_1 = arith.constant 0 : i32
    return %c0_i32, %c0_i32_0 : i32, i32
  }
  func.func @transform_4(%arg0: i32) -> (i32, i32) {
    %c0_i32 = arith.constant 0 : i32
    %c0_i32_0 = arith.constant 0 : i32
    %c0_i32_1 = arith.constant 0 : i32
    return %c0_i32, %c0_i32_0 : i32, i32
  }
  func.func @transform_5(%arg0: i32) -> (i32, i32) {
    %c0_i32 = arith.constant 0 : i32
    %c0_i32_0 = arith.constant 0 : i32
    %c0_i32_1 = arith.constant 0 : i32
    return %c0_i32, %c0_i32_0 : i32, i32
  }
  func.func @transform_6(%arg0: i32) -> (i32, i32) {
    %c0_i32 = arith.constant 0 : i32
    %c0_i32_0 = arith.constant 0 : i32
    %c0_i32_1 = arith.constant 0 : i32
    return %c0_i32, %c0_i32_0 : i32, i32
  }
  func.func @transform_7(%arg0: i32) -> (i32, i32, i32) {
    %c0_i32 = arith.constant 0 : i32
    %c0_i32_0 = arith.constant 0 : i32
    %c0_i32_1 = arith.constant 0 : i32
    return %arg0, %c0_i32, %c0_i32_0 : i32, i32, i32
  }
}

</mosaic_0001>

<llo_original>
// kernel: tpu_custom_call.1
$region0: #{tpu_custom_call.1}
  #allocation0 [shape = 'u32[]', space=smem, size = 0x4, offset = 0x4, fixed_abs, tag = 'smem constant byte address 0x4 - core index']
  #allocation1 [shape = 'u32[144,128]{1,0:T(1,128)}', space=vmem, size = 0x12000, scoped, tag = 'internal scratch']
  #allocation2 [shape = 'f32[640,8]{1,0:T(8,128)}', space=vmem, size = 0x50000, scoped, tag = 'scratch operand']
  #allocation3 [shape = 'f32[8,256]{1,0:T(8,128)}', space=vmem, size = 0x2000, scoped, tag = 'scratch operand']
  %s0 = inlined_call_operand.vmem [shape: f32[2,589,768], index: 0, kind: input, shape index: {}]
  %s1 = inlined_call_operand.vmem [shape: f32[768,8], index: 1, kind: input, shape index: {}]
  %s2 = inlined_call_operand.vmem [shape: f32[8,1], index: 2, kind: input, shape index: {}]
  %s3 = inlined_call_operand.vmem [shape: f32[8,72], index: 3, kind: input, shape index: {}]
  %s4 = inlined_call_operand.vmem [shape: f32[8,768], index: 4, kind: input, shape index: {}]
  %s5 = inlined_call_operand.vmem [shape: f32[1,768], index: 5, kind: input, shape index: {}]
  %s6 = inlined_call_operand.vmem [shape: f32[9,640], index: 6, kind: input, shape index: {}]
  %s7 = inlined_call_operand.vmem [shape: f32[2,589,768], index: 7, kind: output, shape index: {}]
  %s8 = sld [smem:[#allocation0]]
  $region61: #{tpu_custom_call.1} parent=0
    _
  %s10 = ssub.s32 1, %s8
  %s11 = scalar_select 0, %s10, %s8
  loop: start=0, step=1, limit=4
  $region2: #{tpu_custom_call.1} parent=0 // loop_pre_header
    _
  $region3: #{tpu_custom_call.1} parent=0 // loop_header
    %s13 = sphi 0, %s17
    %p14 = scmp.ge.s32.totalorder %s13, 4
    %s23 = sphi 0, %s25
    %s26 = sphi 0, %s23
    %s27 = sphi 0, %s26
    %s43 = sphi 0, %s27
    %s47 = sphi 0, %s47
    %s49 = sphi 0, %s47
    %s50 = sphi 0, %s49
    %s64 = sphi 0, %s50
    %s68 = sphi 0, %s68
    %s70 = sphi 0, %s68
    %s71 = sphi 0, %s70
    %s85 = sphi 0, %s71
    %s89 = sphi 0, %s89
    %s91 = sphi 0, %s89
    %s92 = sphi 0, %s91
    %s106 = sphi 0, %s92
    %s110 = sphi 0, %s110
    %s112 = sphi 0, %s110
    %s113 = sphi 0, %s112
    %s127 = sphi 0, %s113
    %s131 = sphi 0, %s131
    %s133 = sphi 0, %s131
    %s134 = sphi 0, %s133
    %s148 = sphi 0, %s134
    %s152 = sphi 0, %s152
    %s154 = sphi 0, %s152
    %s155 = sphi 0, %s154
    %s169 = sphi 0, %s155
    %s175 = sphi 0, %s177
    %s178 = sphi 0, %s175
    %s179 = sphi 0, %s178
    %s195 = sphi 0, %s179
  $region4: #{tpu_custom_call.1} parent=0 // loop_header_branch
    %16 = sbr.rel (%p14) target = $region8
  $region5: #{tpu_custom_call.1} parent=0 // loop_body
    %s18 = ssub.s32 %s13, 1
    %s19 = ssub.s32 %s13, 2
    %s20 = sadd.s32 %s13, 1
    %s21 = ssub.s32 %s13, %s20
    %p22 = scmp.eq.s32.totalorder %s21, 0
    %s24 = sadd.s32 %s23, 1
    %s25 = scalar_select %p22, %s23, %s24
    %p28 = pneg %p22
    %p29 = scmp.eq.s32.totalorder %s13, 1
    %p30 = por %p28, %p29
    %p31 = scmp.ne.s32.totalorder %s23, %s26
    %p32 = scmp.eq.s32.totalorder %s13, 0
    %p33 = por %p31, %p32
    %p34 = scmp.ne.s32.totalorder %s23, %s26
    %p35 = scmp.eq.s32.totalorder %s18, 1
    %p36 = por %p34, %p35
    %p37 = scmp.ne.s32.totalorder %s26, %s27
    %p38 = scmp.eq.s32.totalorder %s18, 0
    %p39 = por %p37, %p38
    %p40 = scmp.ne.s32.totalorder %s26, %s27
    %p41 = scmp.eq.s32.totalorder %s19, 1
    %p42 = por %p40, %p41
    %p44 = scmp.ne.s32.totalorder %s27, %s43
    %p45 = scmp.eq.s32.totalorder %s19, 0
    %p46 = por %p44, %p45
    %s48 = sadd.s32 %s47, 1
    %p51 = scmp.eq.s32.totalorder %s13, 1
    %p52 = scmp.ne.s32.totalorder %s47, %s49
    %p53 = scmp.eq.s32.totalorder %s13, 0
    %p54 = por %p52, %p53
    %p55 = scmp.ne.s32.totalorder %s47, %s49
    %p56 = scmp.eq.s32.totalorder %s18, 1
    %p57 = por %p55, %p56
    %p58 = scmp.ne.s32.totalorder %s49, %s50
    %p59 = scmp.eq.s32.totalorder %s18, 0
    %p60 = por %p58, %p59
    %p61 = scmp.ne.s32.totalorder %s49, %s50
    %p62 = scmp.eq.s32.totalorder %s19, 1
    %p63 = por %p61, %p62
    %p65 = scmp.ne.s32.totalorder %s50, %s64
    %p66 = scmp.eq.s32.totalorder %s19, 0
    %p67 = por %p65, %p66
    %s69 = sadd.s32 %s68, 1
    %p72 = scmp.eq.s32.totalorder %s13, 1
    %p73 = scmp.ne.s32.totalorder %s68, %s70
    %p74 = scmp.eq.s32.totalorder %s13, 0
    %p75 = por %p73, %p74
    %p76 = scmp.ne.s32.totalorder %s68, %s70
    %p77 = scmp.eq.s32.totalorder %s18, 1
    %p78 = por %p76, %p77
    %p79 = scmp.ne.s32.totalorder %s70, %s71
    %p80 = scmp.eq.s32.totalorder %s18, 0
    %p81 = por %p79, %p80
    %p82 = scmp.ne.s32.totalorder %s70, %s71
    %p83 = scmp.eq.s32.totalorder %s19, 1
    %p84 = por %p82, %p83
    %p86 = scmp.ne.s32.totalorder %s71, %s85
    %p87 = scmp.eq.s32.totalorder %s19, 0
    %p88 = por %p86, %p87
    %s90 = sadd.s32 %s89, 1
    %p93 = scmp.eq.s32.totalorder %s13, 1
    %p94 = scmp.ne.s32.totalorder %s89, %s91
    %p95 = scmp.eq.s32.totalorder %s13, 0
    %p96 = por %p94, %p95
    %p97 = scmp.ne.s32.totalorder %s89, %s91
    %p98 = scmp.eq.s32.totalorder %s18, 1
    %p99 = por %p97, %p98
    %p100 = scmp.ne.s32.totalorder %s91, %s92
    %p101 = scmp.eq.s32.totalorder %s18, 0
    %p102 = por %p100, %p101
    %p103 = scmp.ne.s32.totalorder %s91, %s92
    %p104 = scmp.eq.s32.totalorder %s19, 1
    %p105 = por %p103, %p104
    %p107 = scmp.ne.s32.totalorder %s92, %s106
    %p108 = scmp.eq.s32.totalorder %s19, 0
    %p109 = por %p107, %p108
    %s111 = sadd.s32 %s110, 1
    %p114 = scmp.eq.s32.totalorder %s13, 1
    %p115 = scmp.ne.s32.totalorder %s110, %s112
    %p116 = scmp.eq.s32.totalorder %s13, 0
    %p117 = por %p115, %p116
    %p118 = scmp.ne.s32.totalorder %s110, %s112
    %p119 = scmp.eq.s32.totalorder %s18, 1
    %p120 = por %p118, %p119
    %p121 = scmp.ne.s32.totalorder %s112, %s113
    %p122 = scmp.eq.s32.totalorder %s18, 0
    %p123 = por %p121, %p122
    %p124 = scmp.ne.s32.totalorder %s112, %s113
    %p125 = scmp.eq.s32.totalorder %s19, 1
    %p126 = por %p124, %p125
    %p128 = scmp.ne.s32.totalorder %s113, %s127
    %p129 = scmp.eq.s32.totalorder %s19, 0
    %p130 = por %p128, %p129
    %s132 = sadd.s32 %s131, 1
    %p135 = scmp.eq.s32.totalorder %s13, 1
    %p136 = scmp.ne.s32.totalorder %s131, %s133
    %p137 = scmp.eq.s32.totalorder %s13, 0
    %p138 = por %p136, %p137
    %p139 = scmp.ne.s32.totalorder %s131, %s133
    %p140 = scmp.eq.s32.totalorder %s18, 1
    %p141 = por %p139, %p140
    %p142 = scmp.ne.s32.totalorder %s133, %s134
    %p143 = scmp.eq.s32.totalorder %s18, 0
    %p144 = por %p142, %p143
    %p145 = scmp.ne.s32.totalorder %s133, %s134
    %p146 = scmp.eq.s32.totalorder %s19, 1
    %p147 = por %p145, %p146
    %p149 = scmp.ne.s32.totalorder %s134, %s148
    %p150 = scmp.eq.s32.totalorder %s19, 0
    %p151 = por %p149, %p150
    %s153 = sadd.s32 %s152, 1
    %p156 = scmp.eq.s32.totalorder %s13, 1
    %p157 = scmp.ne.s32.totalorder %s152, %s154
    %p158 = scmp.eq.s32.totalorder %s13, 0
    %p159 = por %p157, %p158
    %p160 = scmp.ne.s32.totalorder %s152, %s154
    %p161 = scmp.eq.s32.totalorder %s18, 1
    %p162 = por %p160, %p161
    %p163 = scmp.ne.s32.totalorder %s154, %s155
    %p164 = scmp.eq.s32.totalorder %s18, 0
    %p165 = por %p163, %p164
    %p166 = scmp.ne.s32.totalorder %s154, %s155
    %p167 = scmp.eq.s32.totalorder %s19, 1
    %p168 = por %p166, %p167
    %p170 = scmp.ne.s32.totalorder %s155, %s169
    %p171 = scmp.eq.s32.totalorder %s19, 0
    %p172 = por %p170, %p171
    %s173 = ssub.s32 %s13, %s20
    %p174 = scmp.eq.s32.totalorder %s173, 0
    %s176 = sadd.s32 %s175, 1
    %s177 = scalar_select %p174, %s175, %s176
    %p180 = pneg %p174
    %p181 = scmp.eq.s32.totalorder %s13, 1
    %p182 = por %p180, %p181
    %p183 = scmp.ne.s32.totalorder %s175, %s178
    %p184 = scmp.eq.s32.totalorder %s13, 0
    %p185 = por %p183, %p184
    %p186 = scmp.ne.s32.totalorder %s175, %s178
    %p187 = scmp.eq.s32.totalorder %s18, 1
    %p188 = por %p186, %p187
    %p189 = scmp.ne.s32.totalorder %s178, %s179
    %p190 = scmp.eq.s32.totalorder %s18, 0
    %p191 = por %p189, %p190
    %p192 = scmp.ne.s32.totalorder %s178, %s179
    %p193 = scmp.eq.s32.totalorder %s19, 1
    %p194 = por %p192, %p193
    %p196 = scmp.ne.s32.totalorder %s179, %s195
    %p197 = scmp.eq.s32.totalorder %s19, 0
    %p198 = por %p196, %p197
    %p199 = scmp.le.s32.totalorder 1, %s13
    %p200 = scmp.lt.s32.totalorder %s13, 3
    %p201 = pnand %p199, %p200
    %p202 = pneg %p201
    // Predicated region
    $region9: #{tpu_custom_call.1} parent=5 // pred_check
      _
    $region10: #{tpu_custom_call.1} parent=5 // pred_check_branch
      %204 = sbr.rel (%p201) target = $region12
    $region11: #{tpu_custom_call.1} parent=5 // pred_region
      %s205 = ssub.s32 %s13, 1
      // Predicated region
      $region13: #{tpu_custom_call.1} parent=11 // pred_check
        %p206 = pneg %p60
      $region14: #{tpu_custom_call.1} parent=11 // pred_check_branch
        %208 = sbr.rel (%p206) target = $region16
      $region15: #{tpu_custom_call.1} parent=11 // pred_region
        _
      $region16: #{tpu_custom_call.1} parent=11 // pred_fallthru
        _
      // Predicated region
      $region17: #{tpu_custom_call.1} parent=11 // pred_check
        %p209 = pneg %p81
      $region18: #{tpu_custom_call.1} parent=11 // pred_check_branch
        %211 = sbr.rel (%p209) target = $region20
      $region19: #{tpu_custom_call.1} parent=11 // pred_region
        _
      $region20: #{tpu_custom_call.1} parent=11 // pred_fallthru
        _
      // Predicated region
      $region21: #{tpu_custom_call.1} parent=11 // pred_check
        %p212 = pneg %p102
      $region22: #{tpu_custom_call.1} parent=11 // pred_check_branch
        %214 = sbr.rel (%p212) target = $region24
      $region23: #{tpu_custom_call.1} parent=11 // pred_region
        _
      $region24: #{tpu_custom_call.1} parent=11 // pred_fallthru
        _
      // Predicated region
      $region25: #{tpu_custom_call.1} parent=11 // pred_check
        %p215 = pneg %p123
      $region26: #{tpu_custom_call.1} parent=11 // pred_check_branch
        %217 = sbr.rel (%p215) target = $region28
      $region27: #{tpu_custom_call.1} parent=11 // pred_region
        _
      $region28: #{tpu_custom_call.1} parent=11 // pred_fallthru
        _
      // Predicated region
      $region29: #{tpu_custom_call.1} parent=11 // pred_check
        %p218 = pneg %p144
      $region30: #{tpu_custom_call.1} parent=11 // pred_check_branch
        %220 = sbr.rel (%p218) target = $region32
      $region31: #{tpu_custom_call.1} parent=11 // pred_region
        _
      $region32: #{tpu_custom_call.1} parent=11 // pred_fallthru
        _
      // Predicated region
      $region33: #{tpu_custom_call.1} parent=11 // pred_check
        %p221 = pneg %p165
      $region34: #{tpu_custom_call.1} parent=11 // pred_check_branch
        %223 = sbr.rel (%p221) target = $region36
      $region35: #{tpu_custom_call.1} parent=11 // pred_region
        _
      $region36: #{tpu_custom_call.1} parent=11 // pred_fallthru
        _
    $region12: #{tpu_custom_call.1} parent=5 // pred_fallthru
      _
    %p224 = scmp.lt.s32.totalorder %s13, 2
    // Predicated region
    $region37: #{tpu_custom_call.1} parent=5 // pred_check
      %p225 = pneg %p224
    $region38: #{tpu_custom_call.1} parent=5 // pred_check_branch
      %227 = sbr.rel (%p225) target = $region40
    $region39: #{tpu_custom_call.1} parent=5 // pred_region
      // Predicated region
      $region41: #{tpu_custom_call.1} parent=39 // pred_check
        %p228 = pneg %p33
      $region42: #{tpu_custom_call.1} parent=39 // pred_check_branch
        %230 = sbr.rel (%p228) target = $region44
      $region43: #{tpu_custom_call.1} parent=39 // pred_region
        %p231 = scmp.lt.s32.totalorder %s13, 1
        %s232 = scalar_select %p231, %s13, 1
        %s233 = smul.addr %s232, 444
        %s234 = smul.addr %s233, 8
        %s235 = scalar_lea.vmem %s0, %s234
      $region44: #{tpu_custom_call.1} parent=39 // pred_fallthru
        _
    $region40: #{tpu_custom_call.1} parent=5 // pred_fallthru
      _
    %p236 = scmp.le.s32.totalorder 1, %s13
    %p237 = scmp.lt.s32.totalorder %s13, 3
    %p238 = pnand %p236, %p237
    %p239 = pneg %p238
    // Predicated region
    $region45: #{tpu_custom_call.1} parent=5 // pred_check
      _
    $region46: #{tpu_custom_call.1} parent=5 // pred_check_branch
      %241 = sbr.rel (%p238) target = $region48
    $region47: #{tpu_custom_call.1} parent=5 // pred_region
      %s242 = ssub.s32 %s13, 1
      %p243 = scmp.lt.s32.totalorder %s18, 1
      %s244 = scalar_select %p243, %s18, 1
      %s245 = smul.addr %s244, 444
      %s246 = smul.addr %s245, 8
      %s247 = scalar_lea.vmem %s0, %s246
      %p248 = pneg %p39
      %p249 = pneg %p36
      %p250 = pneg %p60
      %p251 = pneg %p57
      %p252 = pneg %p81
      %p253 = pneg %p78
      %p254 = pneg %p102
      %p255 = pneg %p99
      %p256 = pneg %p123
      %p257 = pneg %p120
      %p258 = pneg %p144
      %p259 = pneg %p141
      %p260 = pneg %p165
      %p261 = pneg %p162
      %p262 = pneg %p191
      %p263 = pneg %p188
      %p264 = scmp.lt.s32.totalorder %s18, 1
      %s265 = scalar_select %p264, %s18, 1
      %s266 = smul.addr %s265, 444
      %s267 = smul.addr %s266, 8
      %s268 = scalar_lea.vmem %s7, %s267
      %p269 = scmp.lt.s32.totalorder %s18, 1
      %s270 = scalar_select %p269, %s18, 1
      %s271 = smul.addr %s270, 444
      %s272 = smul.addr %s271, 8
      %s273 = scalar_lea.vmem %s0, %s272
      %p274 = scmp.lt.s32.totalorder %s18, 1
      %s275 = scalar_select %p274, %s18, 1
      %s276 = smul.addr %s275, 444
      %s277 = smul.addr %s276, 8
      %s278 = scalar_lea.vmem %s7, %s277
      %v279 = vld [vmem:[%s1] sm:$0xff]
      %v280 = vld [vmem:[%s1 + $0x8] sm:$0xff]
      %v281 = vld [vmem:[%s1 + $0x10] sm:$0xff]
      %v282 = vld [vmem:[%s1 + $0x18] sm:$0xff]
      %v283 = vld [vmem:[%s1 + $0x20] sm:$0xff]
      %v284 = vld [vmem:[%s1 + $0x28] sm:$0xff]
      %v285 = vld [vmem:[%s1 + $0x30] sm:$0xff]
      %v286 = vld [vmem:[%s1 + $0x38] sm:$0xff]
      %v287 = vld [vmem:[%s1 + $0x40] sm:$0xff]
      %v288 = vld [vmem:[%s1 + $0x48] sm:$0xff]
      %v289 = vld [vmem:[%s1 + $0x50] sm:$0xff]
      %v290 = vld [vmem:[%s1 + $0x58] sm:$0xff]
      %v291 = vld [vmem:[%s1 + $0x60] sm:$0xff]
      %v292 = vld [vmem:[%s1 + $0x68] sm:$0xff]
      %v293 = vld [vmem:[%s1 + $0x70] sm:$0xff]
      %v294 = vld [vmem:[%s1 + $0x78] sm:$0xff]
      %v295 = vld [vmem:[%s1 + $0x80] sm:$0xff]
      %v296 = vld [vmem:[%s1 + $0x88] sm:$0xff]
      %v297 = vld [vmem:[%s1 + $0x90] sm:$0xff]
      %v298 = vld [vmem:[%s1 + $0x98] sm:$0xff]
      %v299 = vld [vmem:[%s1 + $0xa0] sm:$0xff]
      %v300 = vld [vmem:[%s1 + $0xa8] sm:$0xff]
      %v301 = vld [vmem:[%s1 + $0xb0] sm:$0xff]
      %v302 = vld [vmem:[%s1 + $0xb8] sm:$0xff]
      %v303 = vld [vmem:[%s1 + $0xc0] sm:$0xff]
      %v304 = vld [vmem:[%s1 + $0xc8] sm:$0xff]
      %v305 = vld [vmem:[%s1 + $0xd0] sm:$0xff]
      %v306 = vld [vmem:[%s1 + $0xd8] sm:$0xff]
      %v307 = vld [vmem:[%s1 + $0xe0] sm:$0xff]
      %v308 = vld [vmem:[%s1 + $0xe8] sm:$0xff]
      %v309 = vld [vmem:[%s1 + $0xf0] sm:$0xff]
      %v310 = vld [vmem:[%s1 + $0xf8] sm:$0xff]
      %v311 = vld [vmem:[%s1 + $0x100] sm:$0xff]
      %v312 = vld [vmem:[%s1 + $0x108] sm:$0xff]
      %v313 = vld [vmem:[%s1 + $0x110] sm:$0xff]
      %v314 = vld [vmem:[%s1 + $0x118] sm:$0xff]
      %v315 = vld [vmem:[%s1 + $0x120] sm:$0xff]
      %v316 = vld [vmem:[%s1 + $0x128] sm:$0xff]
      %v317 = vld [vmem:[%s1 + $0x130] sm:$0xff]
      %v318 = vld [vmem:[%s1 + $0x138] sm:$0xff]
      %v319 = vld [vmem:[%s1 + $0x140] sm:$0xff]
      %v320 = vld [vmem:[%s1 + $0x148] sm:$0xff]
      %v321 = vld [vmem:[%s1 + $0x150] sm:$0xff]
      %v322 = vld [vmem:[%s1 + $0x158] sm:$0xff]
      %v323 = vld [vmem:[%s1 + $0x160] sm:$0xff]
      %v324 = vld [vmem:[%s1 + $0x168] sm:$0xff]
      %v325 = vld [vmem:[%s1 + $0x170] sm:$0xff]
      %v326 = vld [vmem:[%s1 + $0x178] sm:$0xff]
      %v327 = vld [vmem:[%s1 + $0x180] sm:$0xff]
      %v328 = vld [vmem:[%s1 + $0x188] sm:$0xff]
      %v329 = vld [vmem:[%s1 + $0x190] sm:$0xff]
      %v330 = vld [vmem:[%s1 + $0x198] sm:$0xff]
      %v331 = vld [vmem:[%s1 + $0x1a0] sm:$0xff]
      %v332 = vld [vmem:[%s1 + $0x1a8] sm:$0xff]
      %v333 = vld [vmem:[%s1 + $0x1b0] sm:$0xff]
      %v334 = vld [vmem:[%s1 + $0x1b8] sm:$0xff]
      %v335 = vld [vmem:[%s1 + $0x1c0] sm:$0xff]
      %v336 = vld [vmem:[%s1 + $0x1c8] sm:$0xff]
      %v337 = vld [vmem:[%s1 + $0x1d0] sm:$0xff]
      %v338 = vld [vmem:[%s1 + $0x1d8] sm:$0xff]
      %v339 = vld [vmem:[%s1 + $0x1e0] sm:$0xff]
      %v340 = vld [vmem:[%s1 + $0x1e8] sm:$0xff]
      %v341 = vld [vmem:[%s1 + $0x1f0] sm:$0xff]
      %v342 = vld [vmem:[%s1 + $0x1f8] sm:$0xff]
      %v343 = vld [vmem:[%s1 + $0x200] sm:$0xff]
      %v344 = vld [vmem:[%s1 + $0x208] sm:$0xff]
      %v345 = vld [vmem:[%s1 + $0x210] sm:$0xff]
      %v346 = vld [vmem:[%s1 + $0x218] sm:$0xff]
      %v347 = vld [vmem:[%s1 + $0x220] sm:$0xff]
      %v348 = vld [vmem:[%s1 + $0x228] sm:$0xff]
      %v349 = vld [vmem:[%s1 + $0x230] sm:$0xff]
      %v350 = vld [vmem:[%s1 + $0x238] sm:$0xff]
      %v351 = vld [vmem:[%s1 + $0x240] sm:$0xff]
      %v352 = vld [vmem:[%s1 + $0x248] sm:$0xff]
      %v353 = vld [vmem:[%s1 + $0x250] sm:$0xff]
      %v354 = vld [vmem:[%s1 + $0x258] sm:$0xff]
      %v355 = vld [vmem:[%s1 + $0x260] sm:$0xff]
      %v356 = vld [vmem:[%s1 + $0x268] sm:$0xff]
      %v357 = vld [vmem:[%s1 + $0x270] sm:$0xff]
      %v358 = vld [vmem:[%s1 + $0x278] sm:$0xff]
      %v359 = vld [vmem:[%s1 + $0x280] sm:$0xff]
      %v360 = vld [vmem:[%s1 + $0x288] sm:$0xff]
      %v361 = vld [vmem:[%s1 + $0x290] sm:$0xff]
      %v362 = vld [vmem:[%s1 + $0x298] sm:$0xff]
      %v363 = vld [vmem:[%s1 + $0x2a0] sm:$0xff]
      %v364 = vld [vmem:[%s1 + $0x2a8] sm:$0xff]
      %v365 = vld [vmem:[%s1 + $0x2b0] sm:$0xff]
      %v366 = vld [vmem:[%s1 + $0x2b8] sm:$0xff]
      %v367 = vld [vmem:[%s1 + $0x2c0] sm:$0xff]
      %v368 = vld [vmem:[%s1 + $0x2c8] sm:$0xff]
      %v369 = vld [vmem:[%s1 + $0x2d0] sm:$0xff]
      %v370 = vld [vmem:[%s1 + $0x2d8] sm:$0xff]
      %v371 = vld [vmem:[%s1 + $0x2e0] sm:$0xff]
      %v372 = vld [vmem:[%s1 + $0x2e8] sm:$0xff]
      %v373 = vld [vmem:[%s1 + $0x2f0] sm:$0xff]
      %v374 = vld [vmem:[%s1 + $0x2f8] sm:$0xff]
      %v375 = vld [vmem:[%s2] sm:$0xff]
      %v376 = vld [vmem:[%s3] sm:$0xff]
      %v377 = vld [vmem:[%s4] sm:$0xff]
      %v378 = vld [vmem:[%s4 + $0x8] sm:$0xff]
      %v379 = vld [vmem:[%s4 + $0x10] sm:$0xff]
      %v380 = vld [vmem:[%s4 + $0x18] sm:$0xff]
      %v381 = vld [vmem:[%s4 + $0x20] sm:$0xff]
      %v382 = vld [vmem:[%s4 + $0x28] sm:$0xff]
      %v383 = vld [vmem:[%s5] sm:$0x3f]
      %v384 = vld [vmem:[%s6] sm:$0xff]
      %v385 = vld [vmem:[%s6 + $0x8] sm:$0xff]
      %v386 = vld [vmem:[%s6 + $0x10] sm:$0xff]
      %v387 = vld [vmem:[%s6 + $0x18] sm:$0xff]
      %v388 = vld [vmem:[%s6 + $0x20] sm:$0xff]
      %v389 = vld [vmem:[%s6 + $0x28] sm:$0x1]
      %v390 = vld [vmem:[%s6 + $0x30] sm:$0x1]
      %v391 = vld [vmem:[%s6 + $0x38] sm:$0x1]
      %v392 = vld [vmem:[%s6 + $0x40] sm:$0x1]
      %v393 = vld [vmem:[%s6 + $0x48] sm:$0x1]
      %vm394 = vcmask 64512
      %395 = vst.msk [vmem:[#allocation2 + $0x24d] sm:$0xff] %vm394, 0.0
      %396 = vst.msk [vmem:[#allocation2 + $0x255] sm:$0xff] %vm394, 0.0
      %397 = vst.msk [vmem:[#allocation2 + $0x25d] sm:$0xff] %vm394, 0.0
      %398 = vst.msk [vmem:[#allocation2 + $0x265] sm:$0xff] %vm394, 0.0
      %399 = vst.msk [vmem:[#allocation2 + $0x26d] sm:$0xff] %vm394, 0.0
      %400 = vst.msk [vmem:[#allocation2 + $0x275] sm:$0xff] %vm394, 0.0
      %vm401 = vcmask 59392
      %402 = vst.msk [vmem:[#allocation2 + $0x27d] sm:$0x7] %vm401, 0.0
      %v403 = vld [vmem:[%s273] sm:$0xff]
      %v404 = vld [vmem:[%s273 + $0x8] sm:$0xff]
      %v405 = vld [vmem:[%s273 + $0x10] sm:$0xff]
      %v406 = vld [vmem:[%s273 + $0x18] sm:$0xff]
      %v407 = vld [vmem:[%s273 + $0x20] sm:$0xff]
      %v408 = vld [vmem:[%s273 + $0x28] sm:$0xff]
      %v409 = vld [vmem:[%s273 + $0x30] sm:$0xff]
      %v410 = vld [vmem:[%s273 + $0x38] sm:$0xff]
      %v411 = vld [vmem:[%s273 + $0x40] sm:$0xff]
      %v412 = vld [vmem:[%s273 + $0x48] sm:$0xff]
      %v413 = vld [vmem:[%s273 + $0x50] sm:$0xff]
      %v414 = vld [vmem:[%s273 + $0x58] sm:$0xff]
      %v415 = vld [vmem:[%s273 + $0x60] sm:$0xff]
      %v416 = vld [vmem:[%s273 + $0x68] sm:$0xff]
      %v417 = vld [vmem:[%s273 + $0x70] sm:$0xff]
      %v418 = vld [vmem:[%s273 + $0x78] sm:$0xff]
      %v419 = vld [vmem:[%s273 + $0x80] sm:$0xff]
      %v420 = vld [vmem:[%s273 + $0x88] sm:$0xff]
      %v421 = vld [vmem:[%s273 + $0x90] sm:$0xff]
      %v422 = vld [vmem:[%s273 + $0x98] sm:$0xff]
      %v423 = vld [vmem:[%s273 + $0xa0] sm:$0xff]
      %v424 = vld [vmem:[%s273 + $0xa8] sm:$0xff]
      %v425 = vld [vmem:[%s273 + $0xb0] sm:$0xff]
      %v426 = vld [vmem:[%s273 + $0xb8] sm:$0xff]
      %v427 = vld [vmem:[%s273 + $0xc0] sm:$0xff]
      %v428 = vld [vmem:[%s273 + $0xc8] sm:$0xff]
      %v429 = vld [vmem:[%s273 + $0xd0] sm:$0xff]
      %v430 = vld [vmem:[%s273 + $0xd8] sm:$0xff]
      %v431 = vld [vmem:[%s273 + $0xe0] sm:$0xff]
      %v432 = vld [vmem:[%s273 + $0xe8] sm:$0xff]
      %v433 = vld [vmem:[%s273 + $0xf0] sm:$0xff]
      %v434 = vld [vmem:[%s273 + $0xf8] sm:$0xff]
      %v435 = vld [vmem:[%s273 + $0x100] sm:$0xff]
      %v436 = vld [vmem:[%s273 + $0x108] sm:$0xff]
      %v437 = vld [vmem:[%s273 + $0x110] sm:$0xff]
      %v438 = vld [vmem:[%s273 + $0x118] sm:$0xff]
      %v439 = vld [vmem:[%s273 + $0x120] sm:$0xff]
      %v440 = vld [vmem:[%s273 + $0x128] sm:$0xff]
      %v441 = vld [vmem:[%s273 + $0x130] sm:$0xff]
      %v442 = vld [vmem:[%s273 + $0x138] sm:$0xff]
      %v443 = vld [vmem:[%s273 + $0x140] sm:$0xff]
      %v444 = vld [vmem:[%s273 + $0x148] sm:$0xff]
      %v445 = vld [vmem:[%s273 + $0x150] sm:$0xff]
      %v446 = vld [vmem:[%s273 + $0x158] sm:$0xff]
      %v447 = vld [vmem:[%s273 + $0x160] sm:$0xff]
      %v448 = vld [vmem:[%s273 + $0x168] sm:$0xff]
      %v449 = vld [vmem:[%s273 + $0x170] sm:$0xff]
      %v450 = vld [vmem:[%s273 + $0x178] sm:$0xff]
      %v451 = vld [vmem:[%s273 + $0x180] sm:$0xff]
      %v452 = vld [vmem:[%s273 + $0x188] sm:$0xff]
      %v453 = vld [vmem:[%s273 + $0x190] sm:$0xff]
      %v454 = vld [vmem:[%s273 + $0x198] sm:$0xff]
      %v455 = vld [vmem:[%s273 + $0x1a0] sm:$0xff]
      %v456 = vld [vmem:[%s273 + $0x1a8] sm:$0xff]
      %v457 = vld [vmem:[%s273 + $0x1b0] sm:$0xff]
      %v458 = vld [vmem:[%s273 + $0x1b8] sm:$0xff]
      %v459 = vld [vmem:[%s273 + $0x1c0] sm:$0xff]
      %v460 = vld [vmem:[%s273 + $0x1c8] sm:$0xff]
      %v461 = vld [vmem:[%s273 + $0x1d0] sm:$0xff]
      %v462 = vld [vmem:[%s273 + $0x1d8] sm:$0xff]
      %v463 = vld [vmem:[%s273 + $0x1e0] sm:$0xff]
      %v464 = vld [vmem:[%s273 + $0x1e8] sm:$0xff]
      %v465 = vld [vmem:[%s273 + $0x1f0] sm:$0xff]
      %v466 = vld [vmem:[%s273 + $0x1f8] sm:$0xff]
      %v467 = vld [vmem:[%s273 + $0x200] sm:$0xff]
      %v468 = vld [vmem:[%s273 + $0x208] sm:$0xff]
      %v469 = vld [vmem:[%s273 + $0x210] sm:$0xff]
      %v470 = vld [vmem:[%s273 + $0x218] sm:$0xff]
      %v471 = vld [vmem:[%s273 + $0x220] sm:$0xff]
      %v472 = vld [vmem:[%s273 + $0x228] sm:$0xff]
      %v473 = vld [vmem:[%s273 + $0x230] sm:$0xff]
      %v474 = vld [vmem:[%s273 + $0x238] sm:$0xff]
      %v475 = vld [vmem:[%s273 + $0x240] sm:$0xff]
      %v476 = vld [vmem:[%s273 + $0x248] sm:$0xff]
      %v477 = vld [vmem:[%s273 + $0x250] sm:$0xff]
      %v478 = vld [vmem:[%s273 + $0x258] sm:$0xff]
      %v479 = vld [vmem:[%s273 + $0x260] sm:$0xff]
      %v480 = vld [vmem:[%s273 + $0x268] sm:$0xff]
      %v481 = vld [vmem:[%s273 + $0x270] sm:$0xff]
      %v482 = vld [vmem:[%s273 + $0x278] sm:$0xff]
      %v483 = vld [vmem:[%s273 + $0x280] sm:$0xff]
      %v484 = vld [vmem:[%s273 + $0x288] sm:$0xff]
      %v485 = vld [vmem:[%s273 + $0x290] sm:$0xff]
      %v486 = vld [vmem:[%s273 + $0x298] sm:$0xff]
      %v487 = vld [vmem:[%s273 + $0x2a0] sm:$0xff]
      %v488 = vld [vmem:[%s273 + $0x2a8] sm:$0xff]
      %v489 = vld [vmem:[%s273 + $0x2b0] sm:$0xff]
      %v490 = vld [vmem:[%s273 + $0x2b8] sm:$0xff]
      %v491 = vld [vmem:[%s273 + $0x2c0] sm:$0xff]
      %v492 = vld [vmem:[%s273 + $0x2c8] sm:$0xff]
      %v493 = vld [vmem:[%s273 + $0x2d0] sm:$0xff]
      %v494 = vld [vmem:[%s273 + $0x2d8] sm:$0xff]
      %v495 = vld [vmem:[%s273 + $0x2e0] sm:$0xff]
      %v496 = vld [vmem:[%s273 + $0x2e8] sm:$0xff]
      %v497 = vld [vmem:[%s273 + $0x2f0] sm:$0xff]
      %v498 = vld [vmem:[%s273 + $0x2f8] sm:$0xff]
      %v499 = vld [vmem:[%s273 + $0x300] sm:$0xff]
      %v500 = vld [vmem:[%s273 + $0x308] sm:$0xff]
      %v501 = vld [vmem:[%s273 + $0x310] sm:$0xff]
      %v502 = vld [vmem:[%s273 + $0x318] sm:$0xff]
      %v503 = vld [vmem:[%s273 + $0x320] sm:$0xff]
      %v504 = vld [vmem:[%s273 + $0x328] sm:$0xff]
      %v505 = vld [vmem:[%s273 + $0x330] sm:$0xff]
      %v506 = vld [vmem:[%s273 + $0x338] sm:$0xff]
      %v507 = vld [vmem:[%s273 + $0x340] sm:$0xff]
      %v508 = vld [vmem:[%s273 + $0x348] sm:$0xff]
      %v509 = vld [vmem:[%s273 + $0x350] sm:$0xff]
      %v510 = vld [vmem:[%s273 + $0x358] sm:$0xff]
      %v511 = vld [vmem:[%s273 + $0x360] sm:$0xff]
      %v512 = vld [vmem:[%s273 + $0x368] sm:$0xff]
      %v513 = vld [vmem:[%s273 + $0x370] sm:$0xff]
      %v514 = vld [vmem:[%s273 + $0x378] sm:$0xff]
      %v515 = vld [vmem:[%s273 + $0x380] sm:$0xff]
      %v516 = vld [vmem:[%s273 + $0x388] sm:$0xff]
      %v517 = vld [vmem:[%s273 + $0x390] sm:$0xff]
      %v518 = vld [vmem:[%s273 + $0x398] sm:$0xff]
      %v519 = vld [vmem:[%s273 + $0x3a0] sm:$0xff]
      %v520 = vld [vmem:[%s273 + $0x3a8] sm:$0xff]
      %v521 = vld [vmem:[%s273 + $0x3b0] sm:$0xff]
      %v522 = vld [vmem:[%s273 + $0x3b8] sm:$0xff]
      %v523 = vld [vmem:[%s273 + $0x3c0] sm:$0xff]
      %v524 = vld [vmem:[%s273 + $0x3c8] sm:$0xff]
      %v525 = vld [vmem:[%s273 + $0x3d0] sm:$0xff]
      %v526 = vld [vmem:[%s273 + $0x3d8] sm:$0xff]
      %v527 = vld [vmem:[%s273 + $0x3e0] sm:$0xff]
      %v528 = vld [vmem:[%s273 + $0x3e8] sm:$0xff]
      %v529 = vld [vmem:[%s273 + $0x3f0] sm:$0xff]
      %v530 = vld [vmem:[%s273 + $0x3f8] sm:$0xff]
      %v531 = vld [vmem:[%s273 + $0x400] sm:$0xff]
      %v532 = vld [vmem:[%s273 + $0x408] sm:$0xff]
      %v533 = vld [vmem:[%s273 + $0x410] sm:$0xff]
      %v534 = vld [vmem:[%s273 + $0x418] sm:$0xff]
      %v535 = vld [vmem:[%s273 + $0x420] sm:$0xff]
      %v536 = vld [vmem:[%s273 + $0x428] sm:$0xff]
      %v537 = vld [vmem:[%s273 + $0x430] sm:$0xff]
      %v538 = vld [vmem:[%s273 + $0x438] sm:$0xff]
      %v539 = vld [vmem:[%s273 + $0x440] sm:$0xff]
      %v540 = vld [vmem:[%s273 + $0x448] sm:$0xff]
      %v541 = vld [vmem:[%s273 + $0x450] sm:$0xff]
      %v542 = vld [vmem:[%s273 + $0x458] sm:$0xff]
      %v543 = vld [vmem:[%s273 + $0x460] sm:$0xff]
      %v544 = vld [vmem:[%s273 + $0x468] sm:$0xff]
      %v545 = vld [vmem:[%s273 + $0x470] sm:$0xff]
      %v546 = vld [vmem:[%s273 + $0x478] sm:$0xff]
      %v547 = vld [vmem:[%s273 + $0x480] sm:$0xff]
      %v548 = vld [vmem:[%s273 + $0x488] sm:$0xff]
      %v549 = vld [vmem:[%s273 + $0x490] sm:$0xff]
      %v550 = vld [vmem:[%s273 + $0x498] sm:$0xff]
      %v551 = vld [vmem:[%s273 + $0x4a0] sm:$0xff]
      %v552 = vld [vmem:[%s273 + $0x4a8] sm:$0xff]
      %v553 = vld [vmem:[%s273 + $0x4b0] sm:$0xff]
      %v554 = vld [vmem:[%s273 + $0x4b8] sm:$0xff]
      %v555 = vld [vmem:[%s273 + $0x4c0] sm:$0xff]
      %v556 = vld [vmem:[%s273 + $0x4c8] sm:$0xff]
      %v557 = vld [vmem:[%s273 + $0x4d0] sm:$0xff]
      %v558 = vld [vmem:[%s273 + $0x4d8] sm:$0xff]
      %v559 = vld [vmem:[%s273 + $0x4e0] sm:$0xff]
      %v560 = vld [vmem:[%s273 + $0x4e8] sm:$0xff]
      %v561 = vld [vmem:[%s273 + $0x4f0] sm:$0xff]
      %v562 = vld [vmem:[%s273 + $0x4f8] sm:$0xff]
      %v563 = vld [vmem:[%s273 + $0x500] sm:$0xff]
      %v564 = vld [vmem:[%s273 + $0x508] sm:$0xff]
      %v565 = vld [vmem:[%s273 + $0x510] sm:$0xff]
      %v566 = vld [vmem:[%s273 + $0x518] sm:$0xff]
      %v567 = vld [vmem:[%s273 + $0x520] sm:$0xff]
      %v568 = vld [vmem:[%s273 + $0x528] sm:$0xff]
      %v569 = vld [vmem:[%s273 + $0x530] sm:$0xff]
      %v570 = vld [vmem:[%s273 + $0x538] sm:$0xff]
      %v571 = vld [vmem:[%s273 + $0x540] sm:$0xff]
      %v572 = vld [vmem:[%s273 + $0x548] sm:$0xff]
      %v573 = vld [vmem:[%s273 + $0x550] sm:$0xff]
      %v574 = vld [vmem:[%s273 + $0x558] sm:$0xff]
      %v575 = vld [vmem:[%s273 + $0x560] sm:$0xff]
      %v576 = vld [vmem:[%s273 + $0x568] sm:$0xff]
      %v577 = vld [vmem:[%s273 + $0x570] sm:$0xff]
      %v578 = vld [vmem:[%s273 + $0x578] sm:$0xff]
      %v579 = vld [vmem:[%s273 + $0x580] sm:$0xff]
      %v580 = vld [vmem:[%s273 + $0x588] sm:$0xff]
      %v581 = vld [vmem:[%s273 + $0x590] sm:$0xff]
      %v582 = vld [vmem:[%s273 + $0x598] sm:$0xff]
      %v583 = vld [vmem:[%s273 + $0x5a0] sm:$0xff]
      %v584 = vld [vmem:[%s273 + $0x5a8] sm:$0xff]
      %v585 = vld [vmem:[%s273 + $0x5b0] sm:$0xff]
      %v586 = vld [vmem:[%s273 + $0x5b8] sm:$0xff]
      %v587 = vld [vmem:[%s273 + $0x5c0] sm:$0xff]
      %v588 = vld [vmem:[%s273 + $0x5c8] sm:$0xff]
      %v589 = vld [vmem:[%s273 + $0x5d0] sm:$0xff]
      %v590 = vld [vmem:[%s273 + $0x5d8] sm:$0xff]
      %v591 = vld [vmem:[%s273 + $0x5e0] sm:$0xff]
      %v592 = vld [vmem:[%s273 + $0x5e8] sm:$0xff]
      %v593 = vld [vmem:[%s273 + $0x5f0] sm:$0xff]
      %v594 = vld [vmem:[%s273 + $0x5f8] sm:$0xff]
      %v595 = vld [vmem:[%s273 + $0x600] sm:$0xff]
      %v596 = vld [vmem:[%s273 + $0x608] sm:$0xff]
      %v597 = vld [vmem:[%s273 + $0x610] sm:$0xff]
      %v598 = vld [vmem:[%s273 + $0x618] sm:$0xff]
      %v599 = vld [vmem:[%s273 + $0x620] sm:$0xff]
      %v600 = vld [vmem:[%s273 + $0x628] sm:$0xff]
      %v601 = vld [vmem:[%s273 + $0x630] sm:$0xff]
      %v602 = vld [vmem:[%s273 + $0x638] sm:$0xff]
      %v603 = vld [vmem:[%s273 + $0x640] sm:$0xff]
      %v604 = vld [vmem:[%s273 + $0x648] sm:$0xff]
      %v605 = vld [vmem:[%s273 + $0x650] sm:$0xff]
      %v606 = vld [vmem:[%s273 + $0x658] sm:$0xff]
      %v607 = vld [vmem:[%s273 + $0x660] sm:$0xff]
      %v608 = vld [vmem:[%s273 + $0x668] sm:$0xff]
      %v609 = vld [vmem:[%s273 + $0x670] sm:$0xff]
      %v610 = vld [vmem:[%s273 + $0x678] sm:$0xff]
      %v611 = vld [vmem:[%s273 + $0x680] sm:$0xff]
      %v612 = vld [vmem:[%s273 + $0x688] sm:$0xff]
      %v613 = vld [vmem:[%s273 + $0x690] sm:$0xff]
      %v614 = vld [vmem:[%s273 + $0x698] sm:$0xff]
      %v615 = vld [vmem:[%s273 + $0x6a0] sm:$0xff]
      %v616 = vld [vmem:[%s273 + $0x6a8] sm:$0xff]
      %v617 = vld [vmem:[%s273 + $0x6b0] sm:$0xff]
      %v618 = vld [vmem:[%s273 + $0x6b8] sm:$0xff]
      %v619 = vld [vmem:[%s273 + $0x6c0] sm:$0xff]
      %v620 = vld [vmem:[%s273 + $0x6c8] sm:$0xff]
      %v621 = vld [vmem:[%s273 + $0x6d0] sm:$0xff]
      %v622 = vld [vmem:[%s273 + $0x6d8] sm:$0xff]
      %v623 = vld [vmem:[%s273 + $0x6e0] sm:$0xff]
      %v624 = vld [vmem:[%s273 + $0x6e8] sm:$0xff]
      %v625 = vld [vmem:[%s273 + $0x6f0] sm:$0xff]
      %v626 = vld [vmem:[%s273 + $0x6f8] sm:$0xff]
      %v627 = vld [vmem:[%s273 + $0x700] sm:$0xff]
      %v628 = vld [vmem:[%s273 + $0x708] sm:$0xff]
      %v629 = vld [vmem:[%s273 + $0x710] sm:$0xff]
      %v630 = vld [vmem:[%s273 + $0x718] sm:$0xff]
      %v631 = vld [vmem:[%s273 + $0x720] sm:$0xff]
      %v632 = vld [vmem:[%s273 + $0x728] sm:$0xff]
      %v633 = vld [vmem:[%s273 + $0x730] sm:$0xff]
      %v634 = vld [vmem:[%s273 + $0x738] sm:$0xff]
      %v635 = vld [vmem:[%s273 + $0x740] sm:$0xff]
      %v636 = vld [vmem:[%s273 + $0x748] sm:$0xff]
      %v637 = vld [vmem:[%s273 + $0x750] sm:$0xff]
      %v638 = vld [vmem:[%s273 + $0x758] sm:$0xff]
      %v639 = vld [vmem:[%s273 + $0x760] sm:$0xff]
      %v640 = vld [vmem:[%s273 + $0x768] sm:$0xff]
      %v641 = vld [vmem:[%s273 + $0x770] sm:$0xff]
      %v642 = vld [vmem:[%s273 + $0x778] sm:$0xff]
      %v643 = vld [vmem:[%s273 + $0x780] sm:$0xff]
      %v644 = vld [vmem:[%s273 + $0x788] sm:$0xff]
      %v645 = vld [vmem:[%s273 + $0x790] sm:$0xff]
      %v646 = vld [vmem:[%s273 + $0x798] sm:$0xff]
      %v647 = vld [vmem:[%s273 + $0x7a0] sm:$0xff]
      %v648 = vld [vmem:[%s273 + $0x7a8] sm:$0xff]
      %v649 = vld [vmem:[%s273 + $0x7b0] sm:$0xff]
      %v650 = vld [vmem:[%s273 + $0x7b8] sm:$0xff]
      %v651 = vld [vmem:[%s273 + $0x7c0] sm:$0xff]
      %v652 = vld [vmem:[%s273 + $0x7c8] sm:$0xff]
      %v653 = vld [vmem:[%s273 + $0x7d0] sm:$0xff]
      %v654 = vld [vmem:[%s273 + $0x7d8] sm:$0xff]
      %v655 = vld [vmem:[%s273 + $0x7e0] sm:$0xff]
      %v656 = vld [vmem:[%s273 + $0x7e8] sm:$0xff]
      %v657 = vld [vmem:[%s273 + $0x7f0] sm:$0xff]
      %v658 = vld [vmem:[%s273 + $0x7f8] sm:$0xff]
      %v659 = vld [vmem:[%s273 + $0x800] sm:$0xff]
      %v660 = vld [vmem:[%s273 + $0x808] sm:$0xff]
      %v661 = vld [vmem:[%s273 + $0x810] sm:$0xff]
      %v662 = vld [vmem:[%s273 + $0x818] sm:$0xff]
      %v663 = vld [vmem:[%s273 + $0x820] sm:$0xff]
      %v664 = vld [vmem:[%s273 + $0x828] sm:$0xff]
      %v665 = vld [vmem:[%s273 + $0x830] sm:$0xff]
      %v666 = vld [vmem:[%s273 + $0x838] sm:$0xff]
      %v667 = vld [vmem:[%s273 + $0x840] sm:$0xff]
      %v668 = vld [vmem:[%s273 + $0x848] sm:$0xff]
      %v669 = vld [vmem:[%s273 + $0x850] sm:$0xff]
      %v670 = vld [vmem:[%s273 + $0x858] sm:$0xff]
      %v671 = vld [vmem:[%s273 + $0x860] sm:$0xff]
      %v672 = vld [vmem:[%s273 + $0x868] sm:$0xff]
      %v673 = vld [vmem:[%s273 + $0x870] sm:$0xff]
      %v674 = vld [vmem:[%s273 + $0x878] sm:$0xff]
      %v675 = vld [vmem:[%s273 + $0x880] sm:$0xff]
      %v676 = vld [vmem:[%s273 + $0x888] sm:$0xff]
      %v677 = vld [vmem:[%s273 + $0x890] sm:$0xff]
      %v678 = vld [vmem:[%s273 + $0x898] sm:$0xff]
      %v679 = vld [vmem:[%s273 + $0x8a0] sm:$0xff]
      %v680 = vld [vmem:[%s273 + $0x8a8] sm:$0xff]
      %v681 = vld [vmem:[%s273 + $0x8b0] sm:$0xff]
      %v682 = vld [vmem:[%s273 + $0x8b8] sm:$0xff]
      %v683 = vld [vmem:[%s273 + $0x8c0] sm:$0xff]
      %v684 = vld [vmem:[%s273 + $0x8c8] sm:$0xff]
      %v685 = vld [vmem:[%s273 + $0x8d0] sm:$0xff]
      %v686 = vld [vmem:[%s273 + $0x8d8] sm:$0xff]
      %v687 = vld [vmem:[%s273 + $0x8e0] sm:$0xff]
      %v688 = vld [vmem:[%s273 + $0x8e8] sm:$0xff]
      %v689 = vld [vmem:[%s273 + $0x8f0] sm:$0xff]
      %v690 = vld [vmem:[%s273 + $0x8f8] sm:$0xff]
      %v691 = vld [vmem:[%s273 + $0x900] sm:$0xff]
      %v692 = vld [vmem:[%s273 + $0x908] sm:$0xff]
      %v693 = vld [vmem:[%s273 + $0x910] sm:$0xff]
      %v694 = vld [vmem:[%s273 + $0x918] sm:$0xff]
      %v695 = vld [vmem:[%s273 + $0x920] sm:$0xff]
      %v696 = vld [vmem:[%s273 + $0x928] sm:$0xff]
      %v697 = vld [vmem:[%s273 + $0x930] sm:$0xff]
      %v698 = vld [vmem:[%s273 + $0x938] sm:$0xff]
      %v699 = vld [vmem:[%s273 + $0x940] sm:$0xff]
      %v700 = vld [vmem:[%s273 + $0x948] sm:$0xff]
      %v701 = vld [vmem:[%s273 + $0x950] sm:$0xff]
      %v702 = vld [vmem:[%s273 + $0x958] sm:$0xff]
      %v703 = vld [vmem:[%s273 + $0x960] sm:$0xff]
      %v704 = vld [vmem:[%s273 + $0x968] sm:$0xff]
      %v705 = vld [vmem:[%s273 + $0x970] sm:$0xff]
      %v706 = vld [vmem:[%s273 + $0x978] sm:$0xff]
      %v707 = vld [vmem:[%s273 + $0x980] sm:$0xff]
      %v708 = vld [vmem:[%s273 + $0x988] sm:$0xff]
      %v709 = vld [vmem:[%s273 + $0x990] sm:$0xff]
      %v710 = vld [vmem:[%s273 + $0x998] sm:$0xff]
      %v711 = vld [vmem:[%s273 + $0x9a0] sm:$0xff]
      %v712 = vld [vmem:[%s273 + $0x9a8] sm:$0xff]
      %v713 = vld [vmem:[%s273 + $0x9b0] sm:$0xff]
      %v714 = vld [vmem:[%s273 + $0x9b8] sm:$0xff]
      %v715 = vld [vmem:[%s273 + $0x9c0] sm:$0xff]
      %v716 = vld [vmem:[%s273 + $0x9c8] sm:$0xff]
      %v717 = vld [vmem:[%s273 + $0x9d0] sm:$0xff]
      %v718 = vld [vmem:[%s273 + $0x9d8] sm:$0xff]
      %v719 = vld [vmem:[%s273 + $0x9e0] sm:$0xff]
      %v720 = vld [vmem:[%s273 + $0x9e8] sm:$0xff]
      %v721 = vld [vmem:[%s273 + $0x9f0] sm:$0xff]
      %v722 = vld [vmem:[%s273 + $0x9f8] sm:$0xff]
      %v723 = vld [vmem:[%s273 + $0xa00] sm:$0xff]
      %v724 = vld [vmem:[%s273 + $0xa08] sm:$0xff]
      %v725 = vld [vmem:[%s273 + $0xa10] sm:$0xff]
      %v726 = vld [vmem:[%s273 + $0xa18] sm:$0xff]
      %v727 = vld [vmem:[%s273 + $0xa20] sm:$0xff]
      %v728 = vld [vmem:[%s273 + $0xa28] sm:$0xff]
      %v729 = vld [vmem:[%s273 + $0xa30] sm:$0xff]
      %v730 = vld [vmem:[%s273 + $0xa38] sm:$0xff]
      %v731 = vld [vmem:[%s273 + $0xa40] sm:$0xff]
      %v732 = vld [vmem:[%s273 + $0xa48] sm:$0xff]
      %v733 = vld [vmem:[%s273 + $0xa50] sm:$0xff]
      %v734 = vld [vmem:[%s273 + $0xa58] sm:$0xff]
      %v735 = vld [vmem:[%s273 + $0xa60] sm:$0xff]
      %v736 = vld [vmem:[%s273 + $0xa68] sm:$0xff]
      %v737 = vld [vmem:[%s273 + $0xa70] sm:$0xff]
      %v738 = vld [vmem:[%s273 + $0xa78] sm:$0xff]
      %v739 = vld [vmem:[%s273 + $0xa80] sm:$0xff]
      %v740 = vld [vmem:[%s273 + $0xa88] sm:$0xff]
      %v741 = vld [vmem:[%s273 + $0xa90] sm:$0xff]
      %v742 = vld [vmem:[%s273 + $0xa98] sm:$0xff]
      %v743 = vld [vmem:[%s273 + $0xaa0] sm:$0xff]
      %v744 = vld [vmem:[%s273 + $0xaa8] sm:$0xff]
      %v745 = vld [vmem:[%s273 + $0xab0] sm:$0xff]
      %v746 = vld [vmem:[%s273 + $0xab8] sm:$0xff]
      %v747 = vld [vmem:[%s273 + $0xac0] sm:$0xff]
      %v748 = vld [vmem:[%s273 + $0xac8] sm:$0xff]
      %v749 = vld [vmem:[%s273 + $0xad0] sm:$0xff]
      %v750 = vld [vmem:[%s273 + $0xad8] sm:$0xff]
      %v751 = vld [vmem:[%s273 + $0xae0] sm:$0xff]
      %v752 = vld [vmem:[%s273 + $0xae8] sm:$0xff]
      %v753 = vld [vmem:[%s273 + $0xaf0] sm:$0xff]
      %v754 = vld [vmem:[%s273 + $0xaf8] sm:$0xff]
      %v755 = vld [vmem:[%s273 + $0xb00] sm:$0xff]
      %v756 = vld [vmem:[%s273 + $0xb08] sm:$0xff]
      %v757 = vld [vmem:[%s273 + $0xb10] sm:$0xff]
      %v758 = vld [vmem:[%s273 + $0xb18] sm:$0xff]
      %v759 = vld [vmem:[%s273 + $0xb20] sm:$0xff]
      %v760 = vld [vmem:[%s273 + $0xb28] sm:$0xff]
      %v761 = vld [vmem:[%s273 + $0xb30] sm:$0xff]
      %v762 = vld [vmem:[%s273 + $0xb38] sm:$0xff]
      %v763 = vld [vmem:[%s273 + $0xb40] sm:$0xff]
      %v764 = vld [vmem:[%s273 + $0xb48] sm:$0xff]
      %v765 = vld [vmem:[%s273 + $0xb50] sm:$0xff]
      %v766 = vld [vmem:[%s273 + $0xb58] sm:$0xff]
      %v767 = vld [vmem:[%s273 + $0xb60] sm:$0xff]
      %v768 = vld [vmem:[%s273 + $0xb68] sm:$0xff]
      %v769 = vld [vmem:[%s273 + $0xb70] sm:$0xff]
      %v770 = vld [vmem:[%s273 + $0xb78] sm:$0xff]
      %v771 = vld [vmem:[%s273 + $0xb80] sm:$0xff]
      %v772 = vld [vmem:[%s273 + $0xb88] sm:$0xff]
      %v773 = vld [vmem:[%s273 + $0xb90] sm:$0xff]
      %v774 = vld [vmem:[%s273 + $0xb98] sm:$0xff]
      %v775 = vld [vmem:[%s273 + $0xba0] sm:$0xff]
      %v776 = vld [vmem:[%s273 + $0xba8] sm:$0xff]
      %v777 = vld [vmem:[%s273 + $0xbb0] sm:$0xff]
      %v778 = vld [vmem:[%s273 + $0xbb8] sm:$0xff]
      %v779 = vld [vmem:[%s273 + $0xbc0] sm:$0xff]
      %v780 = vld [vmem:[%s273 + $0xbc8] sm:$0xff]
      %v781 = vld [vmem:[%s273 + $0xbd0] sm:$0xff]
      %v782 = vld [vmem:[%s273 + $0xbd8] sm:$0xff]
      %v783 = vld [vmem:[%s273 + $0xbe0] sm:$0xff]
      %v784 = vld [vmem:[%s273 + $0xbe8] sm:$0xff]
      %v785 = vld [vmem:[%s273 + $0xbf0] sm:$0xff]
      %v786 = vld [vmem:[%s273 + $0xbf8] sm:$0xff]
      %v787 = vld [vmem:[%s273 + $0xc00] sm:$0xff]
      %v788 = vld [vmem:[%s273 + $0xc08] sm:$0xff]
      %v789 = vld [vmem:[%s273 + $0xc10] sm:$0xff]
      %v790 = vld [vmem:[%s273 + $0xc18] sm:$0xff]
      %v791 = vld [vmem:[%s273 + $0xc20] sm:$0xff]
      %v792 = vld [vmem:[%s273 + $0xc28] sm:$0xff]
      %v793 = vld [vmem:[%s273 + $0xc30] sm:$0xff]
      %v794 = vld [vmem:[%s273 + $0xc38] sm:$0xff]
      %v795 = vld [vmem:[%s273 + $0xc40] sm:$0xff]
      %v796 = vld [vmem:[%s273 + $0xc48] sm:$0xff]
      %v797 = vld [vmem:[%s273 + $0xc50] sm:$0xff]
      %v798 = vld [vmem:[%s273 + $0xc58] sm:$0xff]
      %v799 = vld [vmem:[%s273 + $0xc60] sm:$0xff]
      %v800 = vld [vmem:[%s273 + $0xc68] sm:$0xff]
      %v801 = vld [vmem:[%s273 + $0xc70] sm:$0xff]
      %v802 = vld [vmem:[%s273 + $0xc78] sm:$0xff]
      %v803 = vld [vmem:[%s273 + $0xc80] sm:$0xff]
      %v804 = vld [vmem:[%s273 + $0xc88] sm:$0xff]
      %v805 = vld [vmem:[%s273 + $0xc90] sm:$0xff]
      %v806 = vld [vmem:[%s273 + $0xc98] sm:$0xff]
      %v807 = vld [vmem:[%s273 + $0xca0] sm:$0xff]
      %v808 = vld [vmem:[%s273 + $0xca8] sm:$0xff]
      %v809 = vld [vmem:[%s273 + $0xcb0] sm:$0xff]
      %v810 = vld [vmem:[%s273 + $0xcb8] sm:$0xff]
      %v811 = vld [vmem:[%s273 + $0xcc0] sm:$0xff]
      %v812 = vld [vmem:[%s273 + $0xcc8] sm:$0xff]
      %v813 = vld [vmem:[%s273 + $0xcd0] sm:$0xff]
      %v814 = vld [vmem:[%s273 + $0xcd8] sm:$0xff]
      %v815 = vld [vmem:[%s273 + $0xce0] sm:$0xff]
      %v816 = vld [vmem:[%s273 + $0xce8] sm:$0xff]
      %v817 = vld [vmem:[%s273 + $0xcf0] sm:$0xff]
      %v818 = vld [vmem:[%s273 + $0xcf8] sm:$0xff]
      %v819 = vld [vmem:[%s273 + $0xd00] sm:$0xff]
      %v820 = vld [vmem:[%s273 + $0xd08] sm:$0xff]
      %v821 = vld [vmem:[%s273 + $0xd10] sm:$0xff]
      %v822 = vld [vmem:[%s273 + $0xd18] sm:$0xff]
      %v823 = vld [vmem:[%s273 + $0xd20] sm:$0xff]
      %v824 = vld [vmem:[%s273 + $0xd28] sm:$0xff]
      %v825 = vld [vmem:[%s273 + $0xd30] sm:$0xff]
      %v826 = vld [vmem:[%s273 + $0xd38] sm:$0xff]
      %v827 = vld [vmem:[%s273 + $0xd40] sm:$0xff]
      %v828 = vld [vmem:[%s273 + $0xd48] sm:$0xff]
      %v829 = vld [vmem:[%s273 + $0xd50] sm:$0xff]
      %v830 = vld [vmem:[%s273 + $0xd58] sm:$0xff]
      %v831 = vld [vmem:[%s273 + $0xd60] sm:$0xff]
      %v832 = vld [vmem:[%s273 + $0xd68] sm:$0xff]
      %v833 = vld [vmem:[%s273 + $0xd70] sm:$0xff]
      %v834 = vld [vmem:[%s273 + $0xd78] sm:$0xff]
      %v835 = vld [vmem:[%s273 + $0xd80] sm:$0xff]
      %v836 = vld [vmem:[%s273 + $0xd88] sm:$0xff]
      %v837 = vld [vmem:[%s273 + $0xd90] sm:$0xff]
      %v838 = vld [vmem:[%s273 + $0xd98] sm:$0xff]
      %v839 = vld [vmem:[%s273 + $0xda0] sm:$0xff]
      %v840 = vld [vmem:[%s273 + $0xda8] sm:$0xff]
      %v841 = vld [vmem:[%s273 + $0xdb0] sm:$0x1f]
      %v842 = vld [vmem:[%s273 + $0xdb8] sm:$0x1f]
      %v843 = vld [vmem:[%s273 + $0xdc0] sm:$0x1f]
      %v844 = vld [vmem:[%s273 + $0xdc8] sm:$0x1f]
      %v845 = vld [vmem:[%s273 + $0xdd0] sm:$0x1f]
      %v846 = vld [vmem:[%s273 + $0xdd8] sm:$0x1f]
      %847 = vmatprep.subr.mxu0 0.0
      %848 = vmatpush1.msra.mxu0 %v279
      %849 = vmatprep.subr.mxu0 0.0
      %850 = vmatpush1.msra.mxu0 %v280
      %851 = vmatprep.subr.mxu0 0.0
      %852 = vmatpush1.msra.mxu0 %v281
      %853 = vmatprep.subr.mxu0 0.0
      %854 = vmatpush1.msra.mxu0 %v282
      %855 = vmatprep.subr.mxu0 0.0
      %856 = vmatpush1.msra.mxu0 %v283
      %857 = vmatprep.subr.mxu0 0.0
      %858 = vmatpush1.msra.mxu0 %v284
      %859 = vmatprep.subr.mxu0 0.0
      %860 = vmatpush1.msra.mxu0 %v285
      %861 = vmatprep.subr.mxu0 0.0
      %862 = vmatpush1.msra.mxu0 %v286
      %863 = vmatprep.subr.mxu0 0.0
      %864 = vmatpush1.msra.mxu0 %v287
      %865 = vmatprep.subr.mxu0 0.0
      %866 = vmatpush1.msra.mxu0 %v288
      %867 = vmatprep.subr.mxu0 0.0
      %868 = vmatpush1.msra.mxu0 %v289
      %869 = vmatprep.subr.mxu0 0.0
      %870 = vmatpush1.msra.mxu0 %v290
      %871 = vmatprep.subr.mxu0 0.0
      %872 = vmatpush1.msra.mxu0 %v291
      %873 = vmatprep.subr.mxu0 0.0
      %874 = vmatpush1.msra.mxu0 %v292
      %875 = vmatprep.subr.mxu0 0.0
      %876 = vmatpush1.msra.mxu0 %v293
      %877 = vmatprep.subr.mxu0 0.0
      %878 = vmatpush1.msra.mxu0 %v294
      %879 = vmatprep.subr.mxu0 0.0
      %880 = vmatpush1.msra.mxu0 %v295
      %881 = vmatprep.subr.mxu0 0.0
      %882 = vmatpush1.msra.mxu0 %v296
      %883 = vmatprep.subr.mxu0 0.0
      %884 = vmatpush1.msra.mxu0 %v297
      %885 = vmatprep.subr.mxu0 0.0
      %886 = vmatpush1.msra.mxu0 %v298
      %887 = vmatprep.subr.mxu0 0.0
      %888 = vmatpush1.msra.mxu0 %v299
      %889 = vmatprep.subr.mxu0 0.0
      %890 = vmatpush1.msra.mxu0 %v300
      %891 = vmatprep.subr.mxu0 0.0
      %892 = vmatpush1.msra.mxu0 %v301
      %893 = vmatprep.subr.mxu0 0.0
      %894 = vmatpush1.msra.mxu0 %v302
      %895 = vmatprep.subr.mxu0 0.0
      %896 = vmatpush1.msra.mxu0 %v303
      %897 = vmatprep.subr.mxu0 0.0
      %898 = vmatpush1.msra.mxu0 %v304
      %899 = vmatprep.subr.mxu0 0.0
      %900 = vmatpush1.msra.mxu0 %v305
      %901 = vmatprep.subr.mxu0 0.0
      %902 = vmatpush1.msra.mxu0 %v306
      %903 = vmatprep.subr.mxu0 0.0
      %904 = vmatpush1.msra.mxu0 %v307
      %905 = vmatprep.subr.mxu0 0.0
      %906 = vmatpush1.msra.mxu0 %v308
      %907 = vmatprep.subr.mxu0 0.0
      %908 = vmatpush1.msra.mxu0 %v309
      %909 = vmatprep.subr.mxu0 0.0
      %910 = vmatpush1.msra.mxu0 %v310
      %911 = vmatprep.mubr.f32.mxu0 %v404
      %912 = vmatmul.mubr.f32.gmra.mrb[0].mxu0 %v403
      %v913 = vpop.f32.mrb[0].mxu0
      %v914 = vadd.f32 0.0, %v913
      %v915 = vpop.f32.mrb[0].mxu0
      %916 = vmatprep.mubr.f32.mxu0 %v410
      %917 = vmatmul.mubr.f32.gmra.mrb[0].mxu0 %v409
      %v918 = vpop.f32.mrb[0].mxu0
      %v919 = vadd.f32 0.0, %v918
      %v920 = vpop.f32.mrb[0].mxu0
      %921 = vmatprep.mubr.f32.mxu0 %v416
      %922 = vmatmul.mubr.f32.gmra.mrb[0].mxu0 %v415
      %v923 = vpop.f32.mrb[0].mxu0
      %v924 = vadd.f32 0.0, %v923
      %v925 = vpop.f32.mrb[0].mxu0
      %926 = vmatprep.mubr.f32.mxu0 %v422
      %927 = vmatmul.mubr.f32.gmra.mrb[0].mxu0 %v421
      %v928 = vpop.f32.mrb[0].mxu0
      %v929 = vadd.f32 0.0, %v928
      %v930 = vpop.f32.mrb[0].mxu0
      %931 = vmatprep.mubr.f32.mxu0 %v428
      %932 = vmatmul.mubr.f32.gmra.mrb[0].mxu0 %v427
      %v933 = vpop.f32.mrb[0].mxu0
      %v934 = vadd.f32 0.0, %v933
      %v935 = vpop.f32.mrb[0].mxu0
      %936 = vmatprep.mubr.f32.mxu0 %v434
      %937 = vmatmul.mubr.f32.gmra.mrb[0].mxu0 %v433
      %v938 = vpop.f32.mrb[0].mxu0
      %v939 = vadd.f32 0.0, %v938
      %v940 = vpop.f32.mrb[0].mxu0
      %941 = vmatprep.mubr.f32.mxu0 %v440
      %942 = vmatmul.mubr.f32.gmra.mrb[0].mxu0 %v439
      %v943 = vpop.f32.mrb[0].mxu0
      %v944 = vadd.f32 0.0, %v943
      %v945 = vpop.f32.mrb[0].mxu0
      %946 = vmatprep.mubr.f32.mxu0 %v446
      %947 = vmatmul.mubr.f32.gmra.mrb[0].mxu0 %v445
      %v948 = vpop.f32.mrb[0].mxu0
      %v949 = vadd.f32 0.0, %v948
      %v950 = vpop.f32.mrb[0].mxu0
      %951 = vmatprep.mubr.f32.mxu0 %v452
      %952 = vmatmul.mubr.f32.gmra.mrb[0].mxu0 %v451
      %v953 = vpop.f32.mrb[0].mxu0
      %v954 = vadd.f32 0.0, %v953
      %v955 = vpop.f32.mrb[0].mxu0
      %956 = vmatprep.mubr.f32.mxu0 %v458
      %957 = vmatmul.mubr.f32.gmra.mrb[0].mxu0 %v457
      %v958 = vpop.f32.mrb[0].mxu0
      %v959 = vadd.f32 0.0, %v958
      %v960 = vpop.f32.mrb[0].mxu0
      %961 = vmatprep.mubr.f32.mxu0 %v464
      %962 = vmatmul.mubr.f32.gmra.mrb[0].mxu0 %v463
      %v963 = vpop.f32.mrb[0].mxu0
      %v964 = vadd.f32 0.0, %v963
      %v965 = vpop.f32.mrb[0].mxu0
      %966 = vmatprep.mubr.f32.mxu0 %v470
      %967 = vmatmul.mubr.f32.gmra.mrb[0].mxu0 %v469
      %v968 = vpop.f32.mrb[0].mxu0
      %v969 = vadd.f32 0.0, %v968
      %v970 = vpop.f32.mrb[0].mxu0
      %971 = vmatprep.mubr.f32.mxu0 %v476
      %972 = vmatmul.mubr.f32.gmra.mrb[0].mxu0 %v475
      %v973 = vpop.f32.mrb[0].mxu0
      %v974 = vadd.f32 0.0, %v973
      %v975 = vpop.f32.mrb[0].mxu0
      %976 = vmatprep.mubr.f32.mxu0 %v482
      %977 = vmatmul.mubr.f32.gmra.mrb[0].mxu0 %v481
      %v978 = vpop.f32.mrb[0].mxu0
      %v979 = vadd.f32 0.0, %v978
      %v980 = vpop.f32.mrb[0].mxu0
      %981 = vmatprep.mubr.f32.mxu0 %v488
      %982 = vmatmul.mubr.f32.gmra.mrb[0].mxu0 %v487
      %v983 = vpop.f32.mrb[0].mxu0
      %v984 = vadd.f32 0.0, %v983
      %v985 = vpop.f32.mrb[0].mxu0
      %986 = vmatprep.mubr.f32.mxu0 %v494
      %987 = vmatmul.mubr.f32.gmra.mrb[0].mxu0 %v493
      %v988 = vpop.f32.mrb[0].mxu0
      %v989 = vadd.f32 0.0, %v988
      %v990 = vpop.f32.mrb[0].mxu0
      %991 = vmatprep.mubr.f32.mxu0 %v500
      %992 = vmatmul.mubr.f32.gmra.mrb[0].mxu0 %v499
      %v993 = vpop.f32.mrb[0].mxu0
      %v994 = vadd.f32 0.0, %v993
      %v995 = vpop.f32.mrb[0].mxu0
      %996 = vmatprep.mubr.f32.mxu0 %v506
      %997 = vmatmul.mubr.f32.gmra.mrb[0].mxu0 %v505
      %v998 = vpop.f32.mrb[0].mxu0
      %v999 = vadd.f32 0.0, %v998
      %v1000 = vpop.f32.mrb[0].mxu0
      %1001 = vmatprep.mubr.f32.mxu0 %v512
      %1002 = vmatmul.mubr.f32.gmra.mrb[0].mxu0 %v511
      %v1003 = vpop.f32.mrb[0].mxu0
      %v1004 = vadd.f32 0.0, %v1003
      %v1005 = vpop.f32.mrb[0].mxu0
      %1006 = vmatprep.mubr.f32.mxu0 %v518
      %1007 = vmatmul.mubr.f32.gmra.mrb[0].mxu0 %v517
      %v1008 = vpop.f32.mrb[0].mxu0
      %v1009 = vadd.f32 0.0, %v1008
      %v1010 = vpop.f32.mrb[0].mxu0
      %1011 = vmatprep.mubr.f32.mxu0 %v524
      %1012 = vmatmul.mubr.f32.gmra.mrb[0].mxu0 %v523
      %v1013 = vpop.f32.mrb[0].mxu0
      %v1014 = vadd.f32 0.0, %v1013
      %v1015 = vpop.f32.mrb[0].mxu0
      %1016 = vmatprep.mubr.f32.mxu0 %v530
      %1017 = vmatmul.mubr.f32.gmra.mrb[0].mxu0 %v529
      %v1018 = vpop.f32.mrb[0].mxu0
      %v1019 = vadd.f32 0.0, %v1018
      %v1020 = vpop.f32.mrb[0].mxu0
      %1021 = vmatprep.mubr.f32.mxu0 %v536
      %1022 = vmatmul.mubr.f32.gmra.mrb[0].mxu0 %v535
      %v1023 = vpop.f32.mrb[0].mxu0
      %v1024 = vadd.f32 0.0, %v1023
      %v1025 = vpop.f32.mrb[0].mxu0
      %1026 = vmatprep.mubr.f32.mxu0 %v542
      %1027 = vmatmul.mubr.f32.gmra.mrb[0].mxu0 %v541
      %v1028 = vpop.f32.mrb[0].mxu0
      %v1029 = vadd.f32 0.0, %v1028
      %v1030 = vpop.f32.mrb[0].mxu0
      %1031 = vmatprep.mubr.f32.mxu0 %v548
      %1032 = vmatmul.mubr.f32.gmra.mrb[0].mxu0 %v547
      %v1033 = vpop.f32.mrb[0].mxu0
      %v1034 = vadd.f32 0.0, %v1033
      %v1035 = vpop.f32.mrb[0].mxu0
      %1036 = vmatprep.mubr.f32.mxu0 %v554
      %1037 = vmatmul.mubr.f32.gmra.mrb[0].mxu0 %v553
      %v1038 = vpop.f32.mrb[0].mxu0
      %v1039 = vadd.f32 0.0, %v1038
      %v1040 = vpop.f32.mrb[0].mxu0
      %1041 = vmatprep.mubr.f32.mxu0 %v560
      %1042 = vmatmul.mubr.f32.gmra.mrb[0].mxu0 %v559
      %v1043 = vpop.f32.mrb[0].mxu0
      %v1044 = vadd.f32 0.0, %v1043
      %v1045 = vpop.f32.mrb[0].mxu0
      %1046 = vmatprep.mubr.f32.mxu0 %v566
      %1047 = vmatmul.mubr.f32.gmra.mrb[0].mxu0 %v565
      %v1048 = vpop.f32.mrb[0].mxu0
      %v1049 = vadd.f32 0.0, %v1048
      %v1050 = vpop.f32.mrb[0].mxu0
      %1051 = vmatprep.mubr.f32.mxu0 %v572
      %1052 = vmatmul.mubr.f32.gmra.mrb[0].mxu0 %v571
      %v1053 = vpop.f32.mrb[0].mxu0
      %v1054 = vadd.f32 0.0, %v1053
      %v1055 = vpop.f32.mrb[0].mxu0
      %1056 = vmatprep.mubr.f32.mxu0 %v578
      %1057 = vmatmul.mubr.f32.gmra.mrb[0].mxu0 %v577
      %v1058 = vpop.f32.mrb[0].mxu0
      %v1059 = vadd.f32 0.0, %v1058
      %v1060 = vpop.f32.mrb[0].mxu0
      %1061 = vmatprep.mubr.f32.mxu0 %v584
      %1062 = vmatmul.mubr.f32.gmra.mrb[0].mxu0 %v583
      %v1063 = vpop.f32.mrb[0].mxu0
      %v1064 = vadd.f32 0.0, %v1063
      %v1065 = vpop.f32.mrb[0].mxu0
      %1066 = vmatprep.mubr.f32.mxu0 %v590
      %1067 = vmatmul.mubr.f32.gmra.mrb[0].mxu0 %v589
      %v1068 = vpop.f32.mrb[0].mxu0
      %v1069 = vadd.f32 0.0, %v1068
      %v1070 = vpop.f32.mrb[0].mxu0
      %1071 = vmatprep.mubr.f32.mxu0 %v596
      %1072 = vmatmul.mubr.f32.gmra.mrb[0].mxu0 %v595
      %v1073 = vpop.f32.mrb[0].mxu0
      %v1074 = vadd.f32 0.0, %v1073
      %v1075 = vpop.f32.mrb[0].mxu0
      %1076 = vmatprep.mubr.f32.mxu0 %v602
      %1077 = vmatmul.mubr.f32.gmra.mrb[0].mxu0 %v601
      %v1078 = vpop.f32.mrb[0].mxu0
      %v1079 = vadd.f32 0.0, %v1078
      %v1080 = vpop.f32.mrb[0].mxu0
      %1081 = vmatprep.mubr.f32.mxu0 %v608
      %1082 = vmatmul.mubr.f32.gmra.mrb[0].mxu0 %v607
      %v1083 = vpop.f32.mrb[0].mxu0
      %v1084 = vadd.f32 0.0, %v1083
      %v1085 = vpop.f32.mrb[0].mxu0
      %1086 = vmatprep.mubr.f32.mxu0 %v614
      %1087 = vmatmul.mubr.f32.gmra.mrb[0].mxu0 %v613
      %v1088 = vpop.f32.mrb[0].mxu0
      %v1089 = vadd.f32 0.0, %v1088
      %v1090 = vpop.f32.mrb[0].mxu0
      %1091 = vmatprep.mubr.f32.mxu0 %v620
      %1092 = vmatmul.mubr.f32.gmra.mrb[0].mxu0 %v619
      %v1093 = vpop.f32.mrb[0].mxu0
      %v1094 = vadd.f32 0.0, %v1093
      %v1095 = vpop.f32.mrb[0].mxu0
      %1096 = vmatprep.mubr.f32.mxu0 %v626
      %1097 = vmatmul.mubr.f32.gmra.mrb[0].mxu0 %v625
      %v1098 = vpop.f32.mrb[0].mxu0
      %v1099 = vadd.f32 0.0, %v1098
      %v1100 = vpop.f32.mrb[0].mxu0
      %1101 = vmatprep.mubr.f32.mxu0 %v632
      %1102 = vmatmul.mubr.f32.gmra.mrb[0].mxu0 %v631
      %v1103 = vpop.f32.mrb[0].mxu0
      %v1104 = vadd.f32 0.0, %v1103
      %v1105 = vpop.f32.mrb[0].mxu0
      %1106 = vmatprep.mubr.f32.mxu0 %v638
      %1107 = vmatmul.mubr.f32.gmra.mrb[0].mxu0 %v637
      %v1108 = vpop.f32.mrb[0].mxu0
      %v1109 = vadd.f32 0.0, %v1108
      %v1110 = vpop.f32.mrb[0].mxu0
      %1111 = vmatprep.mubr.f32.mxu0 %v644
      %1112 = vmatmul.mubr.f32.gmra.mrb[0].mxu0 %v643
      %v1113 = vpop.f32.mrb[0].mxu0
      %v1114 = vadd.f32 0.0, %v1113
      %v1115 = vpop.f32.mrb[0].mxu0
      %1116 = vmatprep.mubr.f32.mxu0 %v650
      %1117 = vmatmul.mubr.f32.gmra.mrb[0].mxu0 %v649
      %v1118 = vpop.f32.mrb[0].mxu0
      %v1119 = vadd.f32 0.0, %v1118
      %v1120 = vpop.f32.mrb[0].mxu0
      %1121 = vmatprep.mubr.f32.mxu0 %v656
      %1122 = vmatmul.mubr.f32.gmra.mrb[0].mxu0 %v655
      %v1123 = vpop.f32.mrb[0].mxu0
      %v1124 = vadd.f32 0.0, %v1123
      %v1125 = vpop.f32.mrb[0].mxu0
      %1126 = vmatprep.mubr.f32.mxu0 %v662
      %1127 = vmatmul.mubr.f32.gmra.mrb[0].mxu0 %v661
      %v1128 = vpop.f32.mrb[0].mxu0
      %v1129 = vadd.f32 0.0, %v1128
      %v1130 = vpop.f32.mrb[0].mxu0
      %1131 = vmatprep.mubr.f32.mxu0 %v668
      %1132 = vmatmul.mubr.f32.gmra.mrb[0].mxu0 %v667
      %v1133 = vpop.f32.mrb[0].mxu0
      %v1134 = vadd.f32 0.0, %v1133
      %v1135 = vpop.f32.mrb[0].mxu0
      %1136 = vmatprep.mubr.f32.mxu0 %v674
      %1137 = vmatmul.mubr.f32.gmra.mrb[0].mxu0 %v673
      %v1138 = vpop.f32.mrb[0].mxu0
      %v1139 = vadd.f32 0.0, %v1138
      %v1140 = vpop.f32.mrb[0].mxu0
      %1141 = vmatprep.mubr.f32.mxu0 %v680
      %1142 = vmatmul.mubr.f32.gmra.mrb[0].mxu0 %v679
      %v1143 = vpop.f32.mrb[0].mxu0
      %v1144 = vadd.f32 0.0, %v1143
      %v1145 = vpop.f32.mrb[0].mxu0
      %1146 = vmatprep.mubr.f32.mxu0 %v686
      %1147 = vmatmul.mubr.f32.gmra.mrb[0].mxu0 %v685
      %v1148 = vpop.f32.mrb[0].mxu0
      %v1149 = vadd.f32 0.0, %v1148
      %v1150 = vpop.f32.mrb[0].mxu0
      %1151 = vmatprep.mubr.f32.mxu0 %v692
      %1152 = vmatmul.mubr.f32.gmra.mrb[0].mxu0 %v691
      %v1153 = vpop.f32.mrb[0].mxu0
      %v1154 = vadd.f32 0.0, %v1153
      %v1155 = vpop.f32.mrb[0].mxu0
      %1156 = vmatprep.mubr.f32.mxu0 %v698
      %1157 = vmatmul.mubr.f32.gmra.mrb[0].mxu0 %v697
      %v1158 = vpop.f32.mrb[0].mxu0
      %v1159 = vadd.f32 0.0, %v1158
      %v1160 = vpop.f32.mrb[0].mxu0
      %1161 = vmatprep.mubr.f32.mxu0 %v704
      %1162 = vmatmul.mubr.f32.gmra.mrb[0].mxu0 %v703
      %v1163 = vpop.f32.mrb[0].mxu0
      %v1164 = vadd.f32 0.0, %v1163
      %v1165 = vpop.f32.mrb[0].mxu0
      %1166 = vmatprep.mubr.f32.mxu0 %v710
      %1167 = vmatmul.mubr.f32.gmra.mrb[0].mxu0 %v709
      %v1168 = vpop.f32.mrb[0].mxu0
      %v1169 = vadd.f32 0.0, %v1168
      %v1170 = vpop.f32.mrb[0].mxu0
      %1171 = vmatprep.mubr.f32.mxu0 %v716
      %1172 = vmatmul.mubr.f32.gmra.mrb[0].mxu0 %v715
      %v1173 = vpop.f32.mrb[0].mxu0
      %v1174 = vadd.f32 0.0, %v1173
      %v1175 = vpop.f32.mrb[0].mxu0
      %1176 = vmatprep.mubr.f32.mxu0 %v722
      %1177 = vmatmul.mubr.f32.gmra.mrb[0].mxu0 %v721
      %v1178 = vpop.f32.mrb[0].mxu0
      %v1179 = vadd.f32 0.0, %v1178
      %v1180 = vpop.f32.mrb[0].mxu0
      %1181 = vmatprep.mubr.f32.mxu0 %v728
      %1182 = vmatmul.mubr.f32.gmra.mrb[0].mxu0 %v727
      %v1183 = vpop.f32.mrb[0].mxu0
      %v1184 = vadd.f32 0.0, %v1183
      %v1185 = vpop.f32.mrb[0].mxu0
      %1186 = vmatprep.mubr.f32.mxu0 %v734
      %1187 = vmatmul.mubr.f32.gmra.mrb[0].mxu0 %v733
      %v1188 = vpop.f32.mrb[0].mxu0
      %v1189 = vadd.f32 0.0, %v1188
      %v1190 = vpop.f32.mrb[0].mxu0
      %1191 = vmatprep.mubr.f32.mxu0 %v740
      %1192 = vmatmul.mubr.f32.gmra.mrb[0].mxu0 %v739
      %v1193 = vpop.f32.mrb[0].mxu0
      %v1194 = vadd.f32 0.0, %v1193
      %v1195 = vpop.f32.mrb[0].mxu0
      %1196 = vmatprep.mubr.f32.mxu0 %v746
      %1197 = vmatmul.mubr.f32.gmra.mrb[0].mxu0 %v745
      %v1198 = vpop.f32.mrb[0].mxu0
      %v1199 = vadd.f32 0.0, %v1198
      %v1200 = vpop.f32.mrb[0].mxu0
      %1201 = vmatprep.mubr.f32.mxu0 %v752
      %1202 = vmatmul.mubr.f32.gmra.mrb[0].mxu0 %v751
      %v1203 = vpop.f32.mrb[0].mxu0
      %v1204 = vadd.f32 0.0, %v1203
      %v1205 = vpop.f32.mrb[0].mxu0
      %1206 = vmatprep.mubr.f32.mxu0 %v758
      %1207 = vmatmul.mubr.f32.gmra.mrb[0].mxu0 %v757
      %v1208 = vpop.f32.mrb[0].mxu0
      %v1209 = vadd.f32 0.0, %v1208
      %v1210 = vpop.f32.mrb[0].mxu0
      %1211 = vmatprep.mubr.f32.mxu0 %v764
      %1212 = vmatmul.mubr.f32.gmra.mrb[0].mxu0 %v763
      %v1213 = vpop.f32.mrb[0].mxu0
      %v1214 = vadd.f32 0.0, %v1213
      %v1215 = vpop.f32.mrb[0].mxu0
      %1216 = vmatprep.mubr.f32.mxu0 %v770
      %1217 = vmatmul.mubr.f32.gmra.mrb[0].mxu0 %v769
      %v1218 = vpop.f32.mrb[0].mxu0
      %v1219 = vadd.f32 0.0, %v1218
      %v1220 = vpop.f32.mrb[0].mxu0
      %1221 = vmatprep.mubr.f32.mxu0 %v776
      %1222 = vmatmul.mubr.f32.gmra.mrb[0].mxu0 %v775
      %v1223 = vpop.f32.mrb[0].mxu0
      %v1224 = vadd.f32 0.0, %v1223
      %v1225 = vpop.f32.mrb[0].mxu0
      %1226 = vmatprep.mubr.f32.mxu0 %v782
      %1227 = vmatmul.mubr.f32.gmra.mrb[0].mxu0 %v781
      %v1228 = vpop.f32.mrb[0].mxu0
      %v1229 = vadd.f32 0.0, %v1228
      %v1230 = vpop.f32.mrb[0].mxu0
      %1231 = vmatprep.mubr.f32.mxu0 %v788
      %1232 = vmatmul.mubr.f32.gmra.mrb[0].mxu0 %v787
      %v1233 = vpop.f32.mrb[0].mxu0
      %v1234 = vadd.f32 0.0, %v1233
      %v1235 = vpop.f32.mrb[0].mxu0
      %1236 = vmatprep.mubr.f32.mxu0 %v794
      %1237 = vmatmul.mubr.f32.gmra.mrb[0].mxu0 %v793
      %v1238 = vpop.f32.mrb[0].mxu0
      %v1239 = vadd.f32 0.0, %v1238
      %v1240 = vpop.f32.mrb[0].mxu0
      %1241 = vmatprep.mubr.f32.mxu0 %v800
      %1242 = vmatmul.mubr.f32.gmra.mrb[0].mxu0 %v799
      %v1243 = vpop.f32.mrb[0].mxu0
      %v1244 = vadd.f32 0.0, %v1243
      %v1245 = vpop.f32.mrb[0].mxu0
      %1246 = vmatprep.mubr.f32.mxu0 %v806
      %1247 = vmatmul.mubr.f32.gmra.mrb[0].mxu0 %v805
      %v1248 = vpop.f32.mrb[0].mxu0
      %v1249 = vadd.f32 0.0, %v1248
      %v1250 = vpop.f32.mrb[0].mxu0
      %1251 = vmatprep.mubr.f32.mxu0 %v812
      %1252 = vmatmul.mubr.f32.gmra.mrb[0].mxu0 %v811
      %v1253 = vpop.f32.mrb[0].mxu0
      %v1254 = vadd.f32 0.0, %v1253
      %v1255 = vpop.f32.mrb[0].mxu0
      %1256 = vmatprep.mubr.f32.mxu0 %v818
      %1257 = vmatmul.mubr.f32.gmra.mrb[0].mxu0 %v817
      %v1258 = vpop.f32.mrb[0].mxu0
      %v1259 = vadd.f32 0.0, %v1258
      %v1260 = vpop.f32.mrb[0].mxu0
      %1261 = vmatprep.mubr.f32.mxu0 %v824
      %1262 = vmatmul.mubr.f32.gmra.mrb[0].mxu0 %v823
      %v1263 = vpop.f32.mrb[0].mxu0
      %v1264 = vadd.f32 0.0, %v1263
      %v1265 = vpop.f32.mrb[0].mxu0
      %1266 = vmatprep.mubr.f32.mxu0 %v830
      %1267 = vmatmul.mubr.f32.gmra.mrb[0].mxu0 %v829
      %v1268 = vpop.f32.mrb[0].mxu0
      %v1269 = vadd.f32 0.0, %v1268
      %v1270 = vpop.f32.mrb[0].mxu0
      %1271 = vmatprep.mubr.f32.mxu0 %v836
      %1272 = vmatmul.mubr.f32.gmra.mrb[0].mxu0 %v835
      %v1273 = vpop.f32.mrb[0].mxu0
      %v1274 = vadd.f32 0.0, %v1273
      %v1275 = vpop.f32.mrb[0].mxu0
      %1276 = vmatprep.mubr.f32.mxu0 %v842
      %1277 = vmatmul.mubr.f32.gmra.mrb[0].mxu0 %v841
      %v1278 = vpop.f32.mrb[0].mxu0
      %v1279 = vadd.f32 0.0, %v1278
      %v1280 = vpop.f32.mrb[0].mxu0
      %1281 = vdwg.mxu0
      %1282 = vmatprep.subr.mxu0 0.0
      %1283 = vmatpush1.msra.mxu0 %v311
      %1284 = vmatprep.subr.mxu0 0.0
      %1285 = vmatpush1.msra.mxu0 %v312
      %1286 = vmatprep.subr.mxu0 0.0
      %1287 = vmatpush1.msra.mxu0 %v313
      %1288 = vmatprep.subr.mxu0 0.0
      %1289 = vmatpush1.msra.mxu0 %v314
      %1290 = vmatprep.subr.mxu0 0.0
      %1291 = vmatpush1.msra.mxu0 %v315
      %1292 = vmatprep.subr.mxu0 0.0
      %1293 = vmatpush1.msra.mxu0 %v316
      %1294 = vmatprep.subr.mxu0 0.0
      %1295 = vmatpush1.msra.mxu0 %v317
      %1296 = vmatprep.subr.mxu0 0.0
      %1297 = vmatpush1.msra.mxu0 %v318
      %1298 = vmatprep.subr.mxu0 0.0
      %1299 = vmatpush1.msra.mxu0 %v319
      %1300 = vmatprep.subr.mxu0 0.0
      %1301 = vmatpush1.msra.mxu0 %v320
      %1302 = vmatprep.subr.mxu0 0.0
      %1303 = vmatpush1.msra.mxu0 %v321
      %1304 = vmatprep.subr.mxu0 0.0
      %1305 = vmatpush1.msra.mxu0 %v322
      %1306 = vmatprep.subr.mxu0 0.0
      %1307 = vmatpush1.msra.mxu0 %v323
      %1308 = vmatprep.subr.mxu0 0.0
      %1309 = vmatpush1.msra.mxu0 %v324
      %1310 = vmatprep.subr.mxu0 0.0
      %1311 = vmatpush1.msra.mxu0 %v325
      %1312 = vmatprep.subr.mxu0 0.0
      %1313 = vmatpush1.msra.mxu0 %v326
      %1314 = vmatprep.subr.mxu0 0.0
      %1315 = vmatpush1.msra.mxu0 %v327
      %1316 = vmatprep.subr.mxu0 0.0
      %1317 = vmatpush1.msra.mxu0 %v328
      %1318 = vmatprep.subr.mxu0 0.0
      %1319 = vmatpush1.msra.mxu0 %v329
      %1320 = vmatprep.subr.mxu0 0.0
      %1321 = vmatpush1.msra.mxu0 %v330
      %1322 = vmatprep.subr.mxu0 0.0
      %1323 = vmatpush1.msra.mxu0 %v331
      %1324 = vmatprep.subr.mxu0 0.0
      %1325 = vmatpush1.msra.mxu0 %v332
      %1326 = vmatprep.subr.mxu0 0.0
      %1327 = vmatpush1.msra.mxu0 %v333
      %1328 = vmatprep.subr.mxu0 0.0
      %1329 = vmatpush1.msra.mxu0 %v334
      %1330 = vmatprep.subr.mxu0 0.0
      %1331 = vmatpush1.msra.mxu0 %v335
      %1332 = vmatprep.subr.mxu0 0.0
      %1333 = vmatpush1.msra.mxu0 %v336
      %1334 = vmatprep.subr.mxu0 0.0
      %1335 = vmatpush1.msra.mxu0 %v337
      %1336 = vmatprep.subr.mxu0 0.0
      %1337 = vmatpush1.msra.mxu0 %v338
      %1338 = vmatprep.subr.mxu0 0.0
      %1339 = vmatpush1.msra.mxu0 %v339
      %1340 = vmatprep.subr.mxu0 0.0
      %1341 = vmatpush1.msra.mxu0 %v340
      %1342 = vmatprep.subr.mxu0 0.0
      %1343 = vmatpush1.msra.mxu0 %v341
      %1344 = vmatprep.subr.mxu0 0.0
      %1345 = vmatpush1.msra.mxu0 %v342
      %1346 = vmatprep.mubr.f32.mxu0 %v406
      %1347 = vmatmul.mubr.f32.gmra.mrb[0].mxu0 %v405
      %v1348 = vpop.f32.mrb[0].mxu0
      %v1349 = vadd.f32 %v914, %v1348
      %v1350 = vpop.f32.mrb[0].mxu0
      %1351 = vmatprep.mubr.f32.mxu0 %v412
      %1352 = vmatmul.mubr.f32.gmra.mrb[0].mxu0 %v411
      %v1353 = vpop.f32.mrb[0].mxu0
      %v1354 = vadd.f32 %v919, %v1353
      %v1355 = vpop.f32.mrb[0].mxu0
      %1356 = vmatprep.mubr.f32.mxu0 %v418
      %1357 = vmatmul.mubr.f32.gmra.mrb[0].mxu0 %v417
      %v1358 = vpop.f32.mrb[0].mxu0
      %v1359 = vadd.f32 %v924, %v1358
      %v1360 = vpop.f32.mrb[0].mxu0
      %1361 = vmatprep.mubr.f32.mxu0 %v424
      %1362 = vmatmul.mubr.f32.gmra.mrb[0].mxu0 %v423
      %v1363 = vpop.f32.mrb[0].mxu0
      %v1364 = vadd.f32 %v929, %v1363
      %v1365 = vpop.f32.mrb[0].mxu0
      %1366 = vmatprep.mubr.f32.mxu0 %v430
      %1367 = vmatmul.mubr.f32.gmra.mrb[0].mxu0 %v429
      %v1368 = vpop.f32.mrb[0].mxu0
      %v1369 = vadd.f32 %v934, %v1368
      %v1370 = vpop.f32.mrb[0].mxu0
      %1371 = vmatprep.mubr.f32.mxu0 %v436
      %1372 = vmatmul.mubr.f32.gmra.mrb[0].mxu0 %v435
      %v1373 = vpop.f32.mrb[0].mxu0
      %v1374 = vadd.f32 %v939, %v1373
      %v1375 = vpop.f32.mrb[0].mxu0
      %1376 = vmatprep.mubr.f32.mxu0 %v442
      %1377 = vmatmul.mubr.f32.gmra.mrb[0].mxu0 %v441
      %v1378 = vpop.f32.mrb[0].mxu0
      %v1379 = vadd.f32 %v944, %v1378
      %v1380 = vpop.f32.mrb[0].mxu0
      %1381 = vmatprep.mubr.f32.mxu0 %v448
      %1382 = vmatmul.mubr.f32.gmra.mrb[0].mxu0 %v447
      %v1383 = vpop.f32.mrb[0].mxu0
      %v1384 = vadd.f32 %v949, %v1383
      %v1385 = vpop.f32.mrb[0].mxu0
      %1386 = vmatprep.mubr.f32.mxu0 %v454
      %1387 = vmatmul.mubr.f32.gmra.mrb[0].mxu0 %v453
      %v1388 = vpop.f32.mrb[0].mxu0
      %v1389 = vadd.f32 %v954, %v1388
      %v1390 = vpop.f32.mrb[0].mxu0
      %1391 = vmatprep.mubr.f32.mxu0 %v460
      %1392 = vmatmul.mubr.f32.gmra.mrb[0].mxu0 %v459
      %v1393 = vpop.f32.mrb[0].mxu0
      %v1394 = vadd.f32 %v959, %v1393
      %v1395 = vpop.f32.mrb[0].mxu0
      %1396 = vmatprep.mubr.f32.mxu0 %v466
      %1397 = vmatmul.mubr.f32.gmra.mrb[0].mxu0 %v465
      %v1398 = vpop.f32.mrb[0].mxu0
      %v1399 = vadd.f32 %v964, %v1398
      %v1400 = vpop.f32.mrb[0].mxu0
      %1401 = vmatprep.mubr.f32.mxu0 %v472
      %1402 = vmatmul.mubr.f32.gmra.mrb[0].mxu0 %v471
      %v1403 = vpop.f32.mrb[0].mxu0
      %v1404 = vadd.f32 %v969, %v1403
      %v1405 = vpop.f32.mrb[0].mxu0
      %1406 = vmatprep.mubr.f32.mxu0 %v478
      %1407 = vmatmul.mubr.f32.gmra.mrb[0].mxu0 %v477
      %v1408 = vpop.f32.mrb[0].mxu0
      %v1409 = vadd.f32 %v974, %v1408
      %v1410 = vpop.f32.mrb[0].mxu0
      %1411 = vmatprep.mubr.f32.mxu0 %v484
      %1412 = vmatmul.mubr.f32.gmra.mrb[0].mxu0 %v483
      %v1413 = vpop.f32.mrb[0].mxu0
      %v1414 = vadd.f32 %v979, %v1413
      %v1415 = vpop.f32.mrb[0].mxu0
      %1416 = vmatprep.mubr.f32.mxu0 %v490
      %1417 = vmatmul.mubr.f32.gmra.mrb[0].mxu0 %v489
      %v1418 = vpop.f32.mrb[0].mxu0
      %v1419 = vadd.f32 %v984, %v1418
      %v1420 = vpop.f32.mrb[0].mxu0
      %1421 = vmatprep.mubr.f32.mxu0 %v496
      %1422 = vmatmul.mubr.f32.gmra.mrb[0].mxu0 %v495
      %v1423 = vpop.f32.mrb[0].mxu0
      %v1424 = vadd.f32 %v989, %v1423
      %v1425 = vpop.f32.mrb[0].mxu0
      %1426 = vmatprep.mubr.f32.mxu0 %v502
      %1427 = vmatmul.mubr.f32.gmra.mrb[0].mxu0 %v501
      %v1428 = vpop.f32.mrb[0].mxu0
      %v1429 = vadd.f32 %v994, %v1428
      %v1430 = vpop.f32.mrb[0].mxu0
      %1431 = vmatprep.mubr.f32.mxu0 %v508
      %1432 = vmatmul.mubr.f32.gmra.mrb[0].mxu0 %v507
      %v1433 = vpop.f32.mrb[0].mxu0
      %v1434 = vadd.f32 %v999, %v1433
      %v1435 = vpop.f32.mrb[0].mxu0
      %1436 = vmatprep.mubr.f32.mxu0 %v514
      %1437 = vmatmul.mubr.f32.gmra.mrb[0].mxu0 %v513
      %v1438 = vpop.f32.mrb[0].mxu0
      %v1439 = vadd.f32 %v1004, %v1438
      %v1440 = vpop.f32.mrb[0].mxu0
      %1441 = vmatprep.mubr.f32.mxu0 %v520
      %1442 = vmatmul.mubr.f32.gmra.mrb[0].mxu0 %v519
      %v1443 = vpop.f32.mrb[0].mxu0
      %v1444 = vadd.f32 %v1009, %v1443
      %v1445 = vpop.f32.mrb[0].mxu0
      %1446 = vmatprep.mubr.f32.mxu0 %v526
      %1447 = vmatmul.mubr.f32.gmra.mrb[0].mxu0 %v525
      %v1448 = vpop.f32.mrb[0].mxu0
      %v1449 = vadd.f32 %v1014, %v1448
      %v1450 = vpop.f32.mrb[0].mxu0
      %1451 = vmatprep.mubr.f32.mxu0 %v532
      %1452 = vmatmul.mubr.f32.gmra.mrb[0].mxu0 %v531
      %v1453 = vpop.f32.mrb[0].mxu0
      %v1454 = vadd.f32 %v1019, %v1453
      %v1455 = vpop.f32.mrb[0].mxu0
      %1456 = vmatprep.mubr.f32.mxu0 %v538
      %1457 = vmatmul.mubr.f32.gmra.mrb[0].mxu0 %v537
      %v1458 = vpop.f32.mrb[0].mxu0
      %v1459 = vadd.f32 %v1024, %v1458
      %v1460 = vpop.f32.mrb[0].mxu0
      %1461 = vmatprep.mubr.f32.mxu0 %v544
      %1462 = vmatmul.mubr.f32.gmra.mrb[0].mxu0 %v543
      %v1463 = vpop.f32.mrb[0].mxu0
      %v1464 = vadd.f32 %v1029, %v1463
      %v1465 = vpop.f32.mrb[0].mxu0
      %1466 = vmatprep.mubr.f32.mxu0 %v550
      %1467 = vmatmul.mubr.f32.gmra.mrb[0].mxu0 %v549
      %v1468 = vpop.f32.mrb[0].mxu0
      %v1469 = vadd.f32 %v1034, %v1468
      %v1470 = vpop.f32.mrb[0].mxu0
      %1471 = vmatprep.mubr.f32.mxu0 %v556
      %1472 = vmatmul.mubr.f32.gmra.mrb[0].mxu0 %v555
      %v1473 = vpop.f32.mrb[0].mxu0
      %v1474 = vadd.f32 %v1039, %v1473
      %v1475 = vpop.f32.mrb[0].mxu0
      %1476 = vmatprep.mubr.f32.mxu0 %v562
      %1477 = vmatmul.mubr.f32.gmra.mrb[0].mxu0 %v561
      %v1478 = vpop.f32.mrb[0].mxu0
      %v1479 = vadd.f32 %v1044, %v1478
      %v1480 = vpop.f32.mrb[0].mxu0
      %1481 = vmatprep.mubr.f32.mxu0 %v568
      %1482 = vmatmul.mubr.f32.gmra.mrb[0].mxu0 %v567
      %v1483 = vpop.f32.mrb[0].mxu0
      %v1484 = vadd.f32 %v1049, %v1483
      %v1485 = vpop.f32.mrb[0].mxu0
      %1486 = vmatprep.mubr.f32.mxu0 %v574
      %1487 = vmatmul.mubr.f32.gmra.mrb[0].mxu0 %v573
      %v1488 = vpop.f32.mrb[0].mxu0
      %v1489 = vadd.f32 %v1054, %v1488
      %v1490 = vpop.f32.mrb[0].mxu0
      %1491 = vmatprep.mubr.f32.mxu0 %v580
      %1492 = vmatmul.mubr.f32.gmra.mrb[0].mxu0 %v579
      %v1493 = vpop.f32.mrb[0].mxu0
      %v1494 = vadd.f32 %v1059, %v1493
      %v1495 = vpop.f32.mrb[0].mxu0
      %1496 = vmatprep.mubr.f32.mxu0 %v586
      %1497 = vmatmul.mubr.f32.gmra.mrb[0].mxu0 %v585
      %v1498 = vpop.f32.mrb[0].mxu0
      %v1499 = vadd.f32 %v1064, %v1498
      %v1500 = vpop.f32.mrb[0].mxu0
      %1501 = vmatprep.mubr.f32.mxu0 %v592
      %1502 = vmatmul.mubr.f32.gmra.mrb[0].mxu0 %v591
      %v1503 = vpop.f32.mrb[0].mxu0
      %v1504 = vadd.f32 %v1069, %v1503
      %v1505 = vpop.f32.mrb[0].mxu0
      %1506 = vmatprep.mubr.f32.mxu0 %v598
      %1507 = vmatmul.mubr.f32.gmra.mrb[0].mxu0 %v597
      %v1508 = vpop.f32.mrb[0].mxu0
      %v1509 = vadd.f32 %v1074, %v1508
      %v1510 = vpop.f32.mrb[0].mxu0
      %1511 = vmatprep.mubr.f32.mxu0 %v604
      %1512 = vmatmul.mubr.f32.gmra.mrb[0].mxu0 %v603
      %v1513 = vpop.f32.mrb[0].mxu0
      %v1514 = vadd.f32 %v1079, %v1513
      %v1515 = vpop.f32.mrb[0].mxu0
      %1516 = vmatprep.mubr.f32.mxu0 %v610
      %1517 = vmatmul.mubr.f32.gmra.mrb[0].mxu0 %v609
      %v1518 = vpop.f32.mrb[0].mxu0
      %v1519 = vadd.f32 %v1084, %v1518
      %v1520 = vpop.f32.mrb[0].mxu0
      %1521 = vmatprep.mubr.f32.mxu0 %v616
      %1522 = vmatmul.mubr.f32.gmra.mrb[0].mxu0 %v615
      %v1523 = vpop.f32.mrb[0].mxu0
      %v1524 = vadd.f32 %v1089, %v1523
      %v1525 = vpop.f32.mrb[0].mxu0
      %1526 = vmatprep.mubr.f32.mxu0 %v622
      %1527 = vmatmul.mubr.f32.gmra.mrb[0].mxu0 %v621
      %v1528 = vpop.f32.mrb[0].mxu0
      %v1529 = vadd.f32 %v1094, %v1528
      %v1530 = vpop.f32.mrb[0].mxu0
      %1531 = vmatprep.mubr.f32.mxu0 %v628
      %1532 = vmatmul.mubr.f32.gmra.mrb[0].mxu0 %v627
      %v1533 = vpop.f32.mrb[0].mxu0
      %v1534 = vadd.f32 %v1099, %v1533
      %v1535 = vpop.f32.mrb[0].mxu0
      %1536 = vmatprep.mubr.f32.mxu0 %v634
      %1537 = vmatmul.mubr.f32.gmra.mrb[0].mxu0 %v633
      %v1538 = vpop.f32.mrb[0].mxu0
      %v1539 = vadd.f32 %v1104, %v1538
      %v1540 = vpop.f32.mrb[0].mxu0
      %1541 = vmatprep.mubr.f32.mxu0 %v640
      %1542 = vmatmul.mubr.f32.gmra.mrb[0].mxu0 %v639
      %v1543 = vpop.f32.mrb[0].mxu0
      %v1544 = vadd.f32 %v1109, %v1543
      %v1545 = vpop.f32.mrb[0].mxu0
      %1546 = vmatprep.mubr.f32.mxu0 %v646
      %1547 = vmatmul.mubr.f32.gmra.mrb[0].mxu0 %v645
      %v1548 = vpop.f32.mrb[0].mxu0
      %v1549 = vadd.f32 %v1114, %v1548
      %v1550 = vpop.f32.mrb[0].mxu0
      %1551 = vmatprep.mubr.f32.mxu0 %v652
      %1552 = vmatmul.mubr.f32.gmra.mrb[0].mxu0 %v651
      %v1553 = vpop.f32.mrb[0].mxu0
      %v1554 = vadd.f32 %v1119, %v1553
      %v1555 = vpop.f32.mrb[0].mxu0
      %1556 = vmatprep.mubr.f32.mxu0 %v658
      %1557 = vmatmul.mubr.f32.gmra.mrb[0].mxu0 %v657
      %v1558 = vpop.f32.mrb[0].mxu0
      %v1559 = vadd.f32 %v1124, %v1558
      %v1560 = vpop.f32.mrb[0].mxu0
      %1561 = vmatprep.mubr.f32.mxu0 %v664
      %1562 = vmatmul.mubr.f32.gmra.mrb[0].mxu0 %v663
      %v1563 = vpop.f32.mrb[0].mxu0
      %v1564 = vadd.f32 %v1129, %v1563
      %v1565 = vpop.f32.mrb[0].mxu0
      %1566 = vmatprep.mubr.f32.mxu0 %v670
      %1567 = vmatmul.mubr.f32.gmra.mrb[0].mxu0 %v669
      %v1568 = vpop.f32.mrb[0].mxu0
      %v1569 = vadd.f32 %v1134, %v1568
      %v1570 = vpop.f32.mrb[0].mxu0
      %1571 = vmatprep.mubr.f32.mxu0 %v676
      %1572 = vmatmul.mubr.f32.gmra.mrb[0].mxu0 %v675
      %v1573 = vpop.f32.mrb[0].mxu0
      %v1574 = vadd.f32 %v1139, %v1573
      %v1575 = vpop.f32.mrb[0].mxu0
      %1576 = vmatprep.mubr.f32.mxu0 %v682
      %1577 = vmatmul.mubr.f32.gmra.mrb[0].mxu0 %v681
      %v1578 = vpop.f32.mrb[0].mxu0
      %v1579 = vadd.f32 %v1144, %v1578
      %v1580 = vpop.f32.mrb[0].mxu0
      %1581 = vmatprep.mubr.f32.mxu0 %v688
      %1582 = vmatmul.mubr.f32.gmra.mrb[0].mxu0 %v687
      %v1583 = vpop.f32.mrb[0].mxu0
      %v1584 = vadd.f32 %v1149, %v1583
      %v1585 = vpop.f32.mrb[0].mxu0
      %1586 = vmatprep.mubr.f32.mxu0 %v694
      %1587 = vmatmul.mubr.f32.gmra.mrb[0].mxu0 %v693
      %v1588 = vpop.f32.mrb[0].mxu0
      %v1589 = vadd.f32 %v1154, %v1588
      %v1590 = vpop.f32.mrb[0].mxu0
      %1591 = vmatprep.mubr.f32.mxu0 %v700
      %1592 = vmatmul.mubr.f32.gmra.mrb[0].mxu0 %v699
      %v1593 = vpop.f32.mrb[0].mxu0
      %v1594 = vadd.f32 %v1159, %v1593
      %v1595 = vpop.f32.mrb[0].mxu0
      %1596 = vmatprep.mubr.f32.mxu0 %v706
      %1597 = vmatmul.mubr.f32.gmra.mrb[0].mxu0 %v705
      %v1598 = vpop.f32.mrb[0].mxu0
      %v1599 = vadd.f32 %v1164, %v1598
      %v1600 = vpop.f32.mrb[0].mxu0
      %1601 = vmatprep.mubr.f32.mxu0 %v712
      %1602 = vmatmul.mubr.f32.gmra.mrb[0].mxu0 %v711
      %v1603 = vpop.f32.mrb[0].mxu0
      %v1604 = vadd.f32 %v1169, %v1603
      %v1605 = vpop.f32.mrb[0].mxu0
      %1606 = vmatprep.mubr.f32.mxu0 %v718
      %1607 = vmatmul.mubr.f32.gmra.mrb[0].mxu0 %v717
      %v1608 = vpop.f32.mrb[0].mxu0
      %v1609 = vadd.f32 %v1174, %v1608
      %v1610 = vpop.f32.mrb[0].mxu0
      %1611 = vmatprep.mubr.f32.mxu0 %v724
      %1612 = vmatmul.mubr.f32.gmra.mrb[0].mxu0 %v723
      %v1613 = vpop.f32.mrb[0].mxu0
      %v1614 = vadd.f32 %v1179, %v1613
      %v1615 = vpop.f32.mrb[0].mxu0
      %1616 = vmatprep.mubr.f32.mxu0 %v730
      %1617 = vmatmul.mubr.f32.gmra.mrb[0].mxu0 %v729
      %v1618 = vpop.f32.mrb[0].mxu0
      %v1619 = vadd.f32 %v1184, %v1618
      %v1620 = vpop.f32.mrb[0].mxu0
      %1621 = vmatprep.mubr.f32.mxu0 %v736
      %1622 = vmatmul.mubr.f32.gmra.mrb[0].mxu0 %v735
      %v1623 = vpop.f32.mrb[0].mxu0
      %v1624 = vadd.f32 %v1189, %v1623
      %v1625 = vpop.f32.mrb[0].mxu0
      %1626 = vmatprep.mubr.f32.mxu0 %v742
      %1627 = vmatmul.mubr.f32.gmra.mrb[0].mxu0 %v741
      %v1628 = vpop.f32.mrb[0].mxu0
      %v1629 = vadd.f32 %v1194, %v1628
      %v1630 = vpop.f32.mrb[0].mxu0
      %1631 = vmatprep.mubr.f32.mxu0 %v748
      %1632 = vmatmul.mubr.f32.gmra.mrb[0].mxu0 %v747
      %v1633 = vpop.f32.mrb[0].mxu0
      %v1634 = vadd.f32 %v1199, %v1633
      %v1635 = vpop.f32.mrb[0].mxu0
      %1636 = vmatprep.mubr.f32.mxu0 %v754
      %1637 = vmatmul.mubr.f32.gmra.mrb[0].mxu0 %v753
      %v1638 = vpop.f32.mrb[0].mxu0
      %v1639 = vadd.f32 %v1204, %v1638
      %v1640 = vpop.f32.mrb[0].mxu0
      %1641 = vmatprep.mubr.f32.mxu0 %v760
      %1642 = vmatmul.mubr.f32.gmra.mrb[0].mxu0 %v759
      %v1643 = vpop.f32.mrb[0].mxu0
      %v1644 = vadd.f32 %v1209, %v1643
      %v1645 = vpop.f32.mrb[0].mxu0
      %1646 = vmatprep.mubr.f32.mxu0 %v766
      %1647 = vmatmul.mubr.f32.gmra.mrb[0].mxu0 %v765
      %v1648 = vpop.f32.mrb[0].mxu0
      %v1649 = vadd.f32 %v1214, %v1648
      %v1650 = vpop.f32.mrb[0].mxu0
      %1651 = vmatprep.mubr.f32.mxu0 %v772
      %1652 = vmatmul.mubr.f32.gmra.mrb[0].mxu0 %v771
      %v1653 = vpop.f32.mrb[0].mxu0
      %v1654 = vadd.f32 %v1219, %v1653
      %v1655 = vpop.f32.mrb[0].mxu0
      %1656 = vmatprep.mubr.f32.mxu0 %v778
      %1657 = vmatmul.mubr.f32.gmra.mrb[0].mxu0 %v777
      %v1658 = vpop.f32.mrb[0].mxu0
      %v1659 = vadd.f32 %v1224, %v1658
      %v1660 = vpop.f32.mrb[0].mxu0
      %1661 = vmatprep.mubr.f32.mxu0 %v784
      %1662 = vmatmul.mubr.f32.gmra.mrb[0].mxu0 %v783
      %v1663 = vpop.f32.mrb[0].mxu0
      %v1664 = vadd.f32 %v1229, %v1663
      %v1665 = vpop.f32.mrb[0].mxu0
      %1666 = vmatprep.mubr.f32.mxu0 %v790
      %1667 = vmatmul.mubr.f32.gmra.mrb[0].mxu0 %v789
      %v1668 = vpop.f32.mrb[0].mxu0
      %v1669 = vadd.f32 %v1234, %v1668
      %v1670 = vpop.f32.mrb[0].mxu0
      %1671 = vmatprep.mubr.f32.mxu0 %v796
      %1672 = vmatmul.mubr.f32.gmra.mrb[0].mxu0 %v795
      %v1673 = vpop.f32.mrb[0].mxu0
      %v1674 = vadd.f32 %v1239, %v1673
      %v1675 = vpop.f32.mrb[0].mxu0
      %1676 = vmatprep.mubr.f32.mxu0 %v802
      %1677 = vmatmul.mubr.f32.gmra.mrb[0].mxu0 %v801
      %v1678 = vpop.f32.mrb[0].mxu0
      %v1679 = vadd.f32 %v1244, %v1678
      %v1680 = vpop.f32.mrb[0].mxu0
      %1681 = vmatprep.mubr.f32.mxu0 %v808
      %1682 = vmatmul.mubr.f32.gmra.mrb[0].mxu0 %v807
      %v1683 = vpop.f32.mrb[0].mxu0
      %v1684 = vadd.f32 %v1249, %v1683
      %v1685 = vpop.f32.mrb[0].mxu0
      %1686 = vmatprep.mubr.f32.mxu0 %v814
      %1687 = vmatmul.mubr.f32.gmra.mrb[0].mxu0 %v813
      %v1688 = vpop.f32.mrb[0].mxu0
      %v1689 = vadd.f32 %v1254, %v1688
      %v1690 = vpop.f32.mrb[0].mxu0
      %1691 = vmatprep.mubr.f32.mxu0 %v820
      %1692 = vmatmul.mubr.f32.gmra.mrb[0].mxu0 %v819
      %v1693 = vpop.f32.mrb[0].mxu0
      %v1694 = vadd.f32 %v1259, %v1693
      %v1695 = vpop.f32.mrb[0].mxu0
      %1696 = vmatprep.mubr.f32.mxu0 %v826
      %1697 = vmatmul.mubr.f32.gmra.mrb[0].mxu0 %v825
      %v1698 = vpop.f32.mrb[0].mxu0
      %v1699 = vadd.f32 %v1264, %v1698
      %v1700 = vpop.f32.mrb[0].mxu0
      %1701 = vmatprep.mubr.f32.mxu0 %v832
      %1702 = vmatmul.mubr.f32.gmra.mrb[0].mxu0 %v831
      %v1703 = vpop.f32.mrb[0].mxu0
      %v1704 = vadd.f32 %v1269, %v1703
      %v1705 = vpop.f32.mrb[0].mxu0
      %1706 = vmatprep.mubr.f32.mxu0 %v838
      %1707 = vmatmul.mubr.f32.gmra.mrb[0].mxu0 %v837
      %v1708 = vpop.f32.mrb[0].mxu0
      %v1709 = vadd.f32 %v1274, %v1708
      %v1710 = vpop.f32.mrb[0].mxu0
      %1711 = vmatprep.mubr.f32.mxu0 %v844
      %1712 = vmatmul.mubr.f32.gmra.mrb[0].mxu0 %v843
      %v1713 = vpop.f32.mrb[0].mxu0
      %v1714 = vadd.f32 %v1279, %v1713
      %v1715 = vpop.f32.mrb[0].mxu0
      %1716 = vdwg.mxu0
      %1717 = vmatprep.subr.mxu0 0.0
      %1718 = vmatpush1.msra.mxu0 %v343
      %1719 = vmatprep.subr.mxu0 0.0
      %1720 = vmatpush1.msra.mxu0 %v344
      %1721 = vmatprep.subr.mxu0 0.0
      %1722 = vmatpush1.msra.mxu0 %v345
      %1723 = vmatprep.subr.mxu0 0.0
      %1724 = vmatpush1.msra.mxu0 %v346
      %1725 = vmatprep.subr.mxu0 0.0
      %1726 = vmatpush1.msra.mxu0 %v347
      %1727 = vmatprep.subr.mxu0 0.0
      %1728 = vmatpush1.msra.mxu0 %v348
      %1729 = vmatprep.subr.mxu0 0.0
      %1730 = vmatpush1.msra.mxu0 %v349
      %1731 = vmatprep.subr.mxu0 0.0
      %1732 = vmatpush1.msra.mxu0 %v350
      %1733 = vmatprep.subr.mxu0 0.0
      %1734 = vmatpush1.msra.mxu0 %v351
      %1735 = vmatprep.subr.mxu0 0.0
      %1736 = vmatpush1.msra.mxu0 %v352
      %1737 = vmatprep.subr.mxu0 0.0
      %1738 = vmatpush1.msra.mxu0 %v353
      %1739 = vmatprep.subr.mxu0 0.0
      %1740 = vmatpush1.msra.mxu0 %v354
      %1741 = vmatprep.subr.mxu0 0.0
      %1742 = vmatpush1.msra.mxu0 %v355
      %1743 = vmatprep.subr.mxu0 0.0
      %1744 = vmatpush1.msra.mxu0 %v356
      %1745 = vmatprep.subr.mxu0 0.0
      %1746 = vmatpush1.msra.mxu0 %v357
      %1747 = vmatprep.subr.mxu0 0.0
      %1748 = vmatpush1.msra.mxu0 %v358
      %1749 = vmatprep.subr.mxu0 0.0
      %1750 = vmatpush1.msra.mxu0 %v359
      %1751 = vmatprep.subr.mxu0 0.0
      %1752 = vmatpush1.msra.mxu0 %v360
      %1753 = vmatprep.subr.mxu0 0.0
      %1754 = vmatpush1.msra.mxu0 %v361
      %1755 = vmatprep.subr.mxu0 0.0
      %1756 = vmatpush1.msra.mxu0 %v362
      %1757 = vmatprep.subr.mxu0 0.0
      %1758 = vmatpush1.msra.mxu0 %v363
      %1759 = vmatprep.subr.mxu0 0.0
      %1760 = vmatpush1.msra.mxu0 %v364
      %1761 = vmatprep.subr.mxu0 0.0
      %1762 = vmatpush1.msra.mxu0 %v365
      %1763 = vmatprep.subr.mxu0 0.0
      %1764 = vmatpush1.msra.mxu0 %v366
      %1765 = vmatprep.subr.mxu0 0.0
      %1766 = vmatpush1.msra.mxu0 %v367
      %1767 = vmatprep.subr.mxu0 0.0
      %1768 = vmatpush1.msra.mxu0 %v368
      %1769 = vmatprep.subr.mxu0 0.0
      %1770 = vmatpush1.msra.mxu0 %v369
      %1771 = vmatprep.subr.mxu0 0.0
      %1772 = vmatpush1.msra.mxu0 %v370
      %1773 = vmatprep.subr.mxu0 0.0
      %1774 = vmatpush1.msra.mxu0 %v371
      %1775 = vmatprep.subr.mxu0 0.0
      %1776 = vmatpush1.msra.mxu0 %v372
      %1777 = vmatprep.subr.mxu0 0.0
      %1778 = vmatpush1.msra.mxu0 %v373
      %1779 = vmatprep.subr.mxu0 0.0
      %1780 = vmatpush1.msra.mxu0 %v374
      %1781 = vmatprep.mubr.f32.mxu0 %v408
      %1782 = vmatmul.mubr.f32.gmra.mrb[0].mxu0 %v407
      %v1783 = vpop.f32.mrb[0].mxu0
      %v1784 = vadd.f32 %v1349, %v1783
      %v1785 = vpop.f32.mrb[0].mxu0
      %1786 = vmatprep.mubr.f32.mxu0 %v414
      %1787 = vmatmul.mubr.f32.gmra.mrb[0].mxu0 %v413
      %v1788 = vpop.f32.mrb[0].mxu0
      %v1789 = vadd.f32 %v1354, %v1788
      %v1790 = vpop.f32.mrb[0].mxu0
      %1791 = vmatprep.mubr.f32.mxu0 %v420
      %1792 = vmatmul.mubr.f32.gmra.mrb[0].mxu0 %v419
      %v1793 = vpop.f32.mrb[0].mxu0
      %v1794 = vadd.f32 %v1359, %v1793
      %v1795 = vpop.f32.mrb[0].mxu0
      %1796 = vmatprep.mubr.f32.mxu0 %v426
      %1797 = vmatmul.mubr.f32.gmra.mrb[0].mxu0 %v425
      %v1798 = vpop.f32.mrb[0].mxu0
      %v1799 = vadd.f32 %v1364, %v1798
      %v1800 = vpop.f32.mrb[0].mxu0
      %1801 = vmatprep.mubr.f32.mxu0 %v432
      %1802 = vmatmul.mubr.f32.gmra.mrb[0].mxu0 %v431
      %v1803 = vpop.f32.mrb[0].mxu0
      %v1804 = vadd.f32 %v1369, %v1803
      %v1805 = vpop.f32.mrb[0].mxu0
      %1806 = vmatprep.mubr.f32.mxu0 %v438
      %1807 = vmatmul.mubr.f32.gmra.mrb[0].mxu0 %v437
      %v1808 = vpop.f32.mrb[0].mxu0
      %v1809 = vadd.f32 %v1374, %v1808
      %v1810 = vpop.f32.mrb[0].mxu0
      %1811 = vmatprep.mubr.f32.mxu0 %v444
      %1812 = vmatmul.mubr.f32.gmra.mrb[0].mxu0 %v443
      %v1813 = vpop.f32.mrb[0].mxu0
      %v1814 = vadd.f32 %v1379, %v1813
      %v1815 = vpop.f32.mrb[0].mxu0
      %1816 = vmatprep.mubr.f32.mxu0 %v450
      %1817 = vmatmul.mubr.f32.gmra.mrb[0].mxu0 %v449
      %v1818 = vpop.f32.mrb[0].mxu0
      %v1819 = vadd.f32 %v1384, %v1818
      %v1820 = vpop.f32.mrb[0].mxu0
      %1821 = vmatprep.mubr.f32.mxu0 %v456
      %1822 = vmatmul.mubr.f32.gmra.mrb[0].mxu0 %v455
      %v1823 = vpop.f32.mrb[0].mxu0
      %v1824 = vadd.f32 %v1389, %v1823
      %v1825 = vpop.f32.mrb[0].mxu0
      %1826 = vmatprep.mubr.f32.mxu0 %v462
      %1827 = vmatmul.mubr.f32.gmra.mrb[0].mxu0 %v461
      %v1828 = vpop.f32.mrb[0].mxu0
      %v1829 = vadd.f32 %v1394, %v1828
      %v1830 = vpop.f32.mrb[0].mxu0
      %1831 = vmatprep.mubr.f32.mxu0 %v468
      %1832 = vmatmul.mubr.f32.gmra.mrb[0].mxu0 %v467
      %v1833 = vpop.f32.mrb[0].mxu0
      %v1834 = vadd.f32 %v1399, %v1833
      %v1835 = vpop.f32.mrb[0].mxu0
      %1836 = vmatprep.mubr.f32.mxu0 %v474
      %1837 = vmatmul.mubr.f32.gmra.mrb[0].mxu0 %v473
      %v1838 = vpop.f32.mrb[0].mxu0
      %v1839 = vadd.f32 %v1404, %v1838
      %v1840 = vpop.f32.mrb[0].mxu0
      %1841 = vmatprep.mubr.f32.mxu0 %v480
      %1842 = vmatmul.mubr.f32.gmra.mrb[0].mxu0 %v479
      %v1843 = vpop.f32.mrb[0].mxu0
      %v1844 = vadd.f32 %v1409, %v1843
      %v1845 = vpop.f32.mrb[0].mxu0
      %1846 = vmatprep.mubr.f32.mxu0 %v486
      %1847 = vmatmul.mubr.f32.gmra.mrb[0].mxu0 %v485
      %v1848 = vpop.f32.mrb[0].mxu0
      %v1849 = vadd.f32 %v1414, %v1848
      %v1850 = vpop.f32.mrb[0].mxu0
      %1851 = vmatprep.mubr.f32.mxu0 %v492
      %1852 = vmatmul.mubr.f32.gmra.mrb[0].mxu0 %v491
      %v1853 = vpop.f32.mrb[0].mxu0
      %v1854 = vadd.f32 %v1419, %v1853
      %v1855 = vpop.f32.mrb[0].mxu0
      %1856 = vmatprep.mubr.f32.mxu0 %v498
      %1857 = vmatmul.mubr.f32.gmra.mrb[0].mxu0 %v497
      %v1858 = vpop.f32.mrb[0].mxu0
      %v1859 = vadd.f32 %v1424, %v1858
      %v1860 = vpop.f32.mrb[0].mxu0
      %1861 = vmatprep.mubr.f32.mxu0 %v504
      %1862 = vmatmul.mubr.f32.gmra.mrb[0].mxu0 %v503
      %v1863 = vpop.f32.mrb[0].mxu0
      %v1864 = vadd.f32 %v1429, %v1863
      %v1865 = vpop.f32.mrb[0].mxu0
      %1866 = vmatprep.mubr.f32.mxu0 %v510
      %1867 = vmatmul.mubr.f32.gmra.mrb[0].mxu0 %v509
      %v1868 = vpop.f32.mrb[0].mxu0
      %v1869 = vadd.f32 %v1434, %v1868
      %v1870 = vpop.f32.mrb[0].mxu0
      %1871 = vmatprep.mubr.f32.mxu0 %v516
      %1872 = vmatmul.mubr.f32.gmra.mrb[0].mxu0 %v515
      %v1873 = vpop.f32.mrb[0].mxu0
      %v1874 = vadd.f32 %v1439, %v1873
      %v1875 = vpop.f32.mrb[0].mxu0
      %1876 = vmatprep.mubr.f32.mxu0 %v522
      %1877 = vmatmul.mubr.f32.gmra.mrb[0].mxu0 %v521
      %v1878 = vpop.f32.mrb[0].mxu0
      %v1879 = vadd.f32 %v1444, %v1878
      %v1880 = vpop.f32.mrb[0].mxu0
      %1881 = vmatprep.mubr.f32.mxu0 %v528
      %1882 = vmatmul.mubr.f32.gmra.mrb[0].mxu0 %v527
      %v1883 = vpop.f32.mrb[0].mxu0
      %v1884 = vadd.f32 %v1449, %v1883
      %v1885 = vpop.f32.mrb[0].mxu0
      %1886 = vmatprep.mubr.f32.mxu0 %v534
      %1887 = vmatmul.mubr.f32.gmra.mrb[0].mxu0 %v533
      %v1888 = vpop.f32.mrb[0].mxu0
      %v1889 = vadd.f32 %v1454, %v1888
      %v1890 = vpop.f32.mrb[0].mxu0
      %1891 = vmatprep.mubr.f32.mxu0 %v540
      %1892 = vmatmul.mubr.f32.gmra.mrb[0].mxu0 %v539
      %v1893 = vpop.f32.mrb[0].mxu0
      %v1894 = vadd.f32 %v1459, %v1893
      %v1895 = vpop.f32.mrb[0].mxu0
      %1896 = vmatprep.mubr.f32.mxu0 %v546
      %1897 = vmatmul.mubr.f32.gmra.mrb[0].mxu0 %v545
      %v1898 = vpop.f32.mrb[0].mxu0
      %v1899 = vadd.f32 %v1464, %v1898
      %v1900 = vpop.f32.mrb[0].mxu0
      %1901 = vmatprep.mubr.f32.mxu0 %v552
      %1902 = vmatmul.mubr.f32.gmra.mrb[0].mxu0 %v551
      %v1903 = vpop.f32.mrb[0].mxu0
      %v1904 = vadd.f32 %v1469, %v1903
      %v1905 = vpop.f32.mrb[0].mxu0
      %1906 = vmatprep.mubr.f32.mxu0 %v558
      %1907 = vmatmul.mubr.f32.gmra.mrb[0].mxu0 %v557
      %v1908 = vpop.f32.mrb[0].mxu0
      %v1909 = vadd.f32 %v1474, %v1908
      %v1910 = vpop.f32.mrb[0].mxu0
      %1911 = vmatprep.mubr.f32.mxu0 %v564
      %1912 = vmatmul.mubr.f32.gmra.mrb[0].mxu0 %v563
      %v1913 = vpop.f32.mrb[0].mxu0
      %v1914 = vadd.f32 %v1479, %v1913
      %v1915 = vpop.f32.mrb[0].mxu0
      %1916 = vmatprep.mubr.f32.mxu0 %v570
      %1917 = vmatmul.mubr.f32.gmra.mrb[0].mxu0 %v569
      %v1918 = vpop.f32.mrb[0].mxu0
      %v1919 = vadd.f32 %v1484, %v1918
      %v1920 = vpop.f32.mrb[0].mxu0
      %1921 = vmatprep.mubr.f32.mxu0 %v576
      %1922 = vmatmul.mubr.f32.gmra.mrb[0].mxu0 %v575
      %v1923 = vpop.f32.mrb[0].mxu0
      %v1924 = vadd.f32 %v1489, %v1923
      %v1925 = vpop.f32.mrb[0].mxu0
      %1926 = vmatprep.mubr.f32.mxu0 %v582
      %1927 = vmatmul.mubr.f32.gmra.mrb[0].mxu0 %v581
      %v1928 = vpop.f32.mrb[0].mxu0
      %v1929 = vadd.f32 %v1494, %v1928
      %v1930 = vpop.f32.mrb[0].mxu0
      %1931 = vmatprep.mubr.f32.mxu0 %v588
      %1932 = vmatmul.mubr.f32.gmra.mrb[0].mxu0 %v587
      %v1933 = vpop.f32.mrb[0].mxu0
      %v1934 = vadd.f32 %v1499, %v1933
      %v1935 = vpop.f32.mrb[0].mxu0
      %1936 = vmatprep.mubr.f32.mxu0 %v594
      %1937 = vmatmul.mubr.f32.gmra.mrb[0].mxu0 %v593
      %v1938 = vpop.f32.mrb[0].mxu0
      %v1939 = vadd.f32 %v1504, %v1938
      %v1940 = vpop.f32.mrb[0].mxu0
      %1941 = vmatprep.mubr.f32.mxu0 %v600
      %1942 = vmatmul.mubr.f32.gmra.mrb[0].mxu0 %v599
      %v1943 = vpop.f32.mrb[0].mxu0
      %v1944 = vadd.f32 %v1509, %v1943
      %v1945 = vpop.f32.mrb[0].mxu0
      %1946 = vmatprep.mubr.f32.mxu0 %v606
      %1947 = vmatmul.mubr.f32.gmra.mrb[0].mxu0 %v605
      %v1948 = vpop.f32.mrb[0].mxu0
      %v1949 = vadd.f32 %v1514, %v1948
      %v1950 = vpop.f32.mrb[0].mxu0
      %1951 = vmatprep.mubr.f32.mxu0 %v612
      %1952 = vmatmul.mubr.f32.gmra.mrb[0].mxu0 %v611
      %v1953 = vpop.f32.mrb[0].mxu0
      %v1954 = vadd.f32 %v1519, %v1953
      %v1955 = vpop.f32.mrb[0].mxu0
      %1956 = vmatprep.mubr.f32.mxu0 %v618
      %1957 = vmatmul.mubr.f32.gmra.mrb[0].mxu0 %v617
      %v1958 = vpop.f32.mrb[0].mxu0
      %v1959 = vadd.f32 %v1524, %v1958
      %v1960 = vpop.f32.mrb[0].mxu0
      %1961 = vmatprep.mubr.f32.mxu0 %v624
      %1962 = vmatmul.mubr.f32.gmra.mrb[0].mxu0 %v623
      %v1963 = vpop.f32.mrb[0].mxu0
      %v1964 = vadd.f32 %v1529, %v1963
      %v1965 = vpop.f32.mrb[0].mxu0
      %1966 = vmatprep.mubr.f32.mxu0 %v630
      %1967 = vmatmul.mubr.f32.gmra.mrb[0].mxu0 %v629
      %v1968 = vpop.f32.mrb[0].mxu0
      %v1969 = vadd.f32 %v1534, %v1968
      %v1970 = vpop.f32.mrb[0].mxu0
      %1971 = vmatprep.mubr.f32.mxu0 %v636
      %1972 = vmatmul.mubr.f32.gmra.mrb[0].mxu0 %v635
      %v1973 = vpop.f32.mrb[0].mxu0
      %v1974 = vadd.f32 %v1539, %v1973
      %v1975 = vpop.f32.mrb[0].mxu0
      %1976 = vmatprep.mubr.f32.mxu0 %v642
      %1977 = vmatmul.mubr.f32.gmra.mrb[0].mxu0 %v641
      %v1978 = vpop.f32.mrb[0].mxu0
      %v1979 = vadd.f32 %v1544, %v1978
      %v1980 = vpop.f32.mrb[0].mxu0
      %1981 = vmatprep.mubr.f32.mxu0 %v648
      %1982 = vmatmul.mubr.f32.gmra.mrb[0].mxu0 %v647
      %v1983 = vpop.f32.mrb[0].mxu0
      %v1984 = vadd.f32 %v1549, %v1983
      %v1985 = vpop.f32.mrb[0].mxu0
      %1986 = vmatprep.mubr.f32.mxu0 %v654
      %1987 = vmatmul.mubr.f32.gmra.mrb[0].mxu0 %v653
      %v1988 = vpop.f32.mrb[0].mxu0
      %v1989 = vadd.f32 %v1554, %v1988
      %v1990 = vpop.f32.mrb[0].mxu0
      %1991 = vmatprep.mubr.f32.mxu0 %v660
      %1992 = vmatmul.mubr.f32.gmra.mrb[0].mxu0 %v659
      %v1993 = vpop.f32.mrb[0].mxu0
      %v1994 = vadd.f32 %v1559, %v1993
      %v1995 = vpop.f32.mrb[0].mxu0
      %1996 = vmatprep.mubr.f32.mxu0 %v666
      %1997 = vmatmul.mubr.f32.gmra.mrb[0].mxu0 %v665
      %v1998 = vpop.f32.mrb[0].mxu0
      %v1999 = vadd.f32 %v1564, %v1998
      %v2000 = vpop.f32.mrb[0].mxu0
      %2001 = vmatprep.mubr.f32.mxu0 %v672
      %2002 = vmatmul.mubr.f32.gmra.mrb[0].mxu0 %v671
      %v2003 = vpop.f32.mrb[0].mxu0
      %v2004 = vadd.f32 %v1569, %v2003
      %v2005 = vpop.f32.mrb[0].mxu0
      %2006 = vmatprep.mubr.f32.mxu0 %v678
      %2007 = vmatmul.mubr.f32.gmra.mrb[0].mxu0 %v677
      %v2008 = vpop.f32.mrb[0].mxu0
      %v2009 = vadd.f32 %v1574, %v2008
      %v2010 = vpop.f32.mrb[0].mxu0
      %2011 = vmatprep.mubr.f32.mxu0 %v684
      %2012 = vmatmul.mubr.f32.gmra.mrb[0].mxu0 %v683
      %v2013 = vpop.f32.mrb[0].mxu0
      %v2014 = vadd.f32 %v1579, %v2013
      %v2015 = vpop.f32.mrb[0].mxu0
      %2016 = vmatprep.mubr.f32.mxu0 %v690
      %2017 = vmatmul.mubr.f32.gmra.mrb[0].mxu0 %v689
      %v2018 = vpop.f32.mrb[0].mxu0
      %v2019 = vadd.f32 %v1584, %v2018
      %v2020 = vpop.f32.mrb[0].mxu0
      %2021 = vmatprep.mubr.f32.mxu0 %v696
      %2022 = vmatmul.mubr.f32.gmra.mrb[0].mxu0 %v695
      %v2023 = vpop.f32.mrb[0].mxu0
      %v2024 = vadd.f32 %v1589, %v2023
      %v2025 = vpop.f32.mrb[0].mxu0
      %2026 = vmatprep.mubr.f32.mxu0 %v702
      %2027 = vmatmul.mubr.f32.gmra.mrb[0].mxu0 %v701
      %v2028 = vpop.f32.mrb[0].mxu0
      %v2029 = vadd.f32 %v1594, %v2028
      %v2030 = vpop.f32.mrb[0].mxu0
      %2031 = vmatprep.mubr.f32.mxu0 %v708
      %2032 = vmatmul.mubr.f32.gmra.mrb[0].mxu0 %v707
      %v2033 = vpop.f32.mrb[0].mxu0
      %v2034 = vadd.f32 %v1599, %v2033
      %v2035 = vpop.f32.mrb[0].mxu0
      %2036 = vmatprep.mubr.f32.mxu0 %v714
      %2037 = vmatmul.mubr.f32.gmra.mrb[0].mxu0 %v713
      %v2038 = vpop.f32.mrb[0].mxu0
      %v2039 = vadd.f32 %v1604, %v2038
      %v2040 = vpop.f32.mrb[0].mxu0
      %2041 = vmatprep.mubr.f32.mxu0 %v720
      %2042 = vmatmul.mubr.f32.gmra.mrb[0].mxu0 %v719
      %v2043 = vpop.f32.mrb[0].mxu0
      %v2044 = vadd.f32 %v1609, %v2043
      %v2045 = vpop.f32.mrb[0].mxu0
      %2046 = vmatprep.mubr.f32.mxu0 %v726
      %2047 = vmatmul.mubr.f32.gmra.mrb[0].mxu0 %v725
      %v2048 = vpop.f32.mrb[0].mxu0
      %v2049 = vadd.f32 %v1614, %v2048
      %v2050 = vpop.f32.mrb[0].mxu0
      %2051 = vmatprep.mubr.f32.mxu0 %v732
      %2052 = vmatmul.mubr.f32.gmra.mrb[0].mxu0 %v731
      %v2053 = vpop.f32.mrb[0].mxu0
      %v2054 = vadd.f32 %v1619, %v2053
      %v2055 = vpop.f32.mrb[0].mxu0
      %2056 = vmatprep.mubr.f32.mxu0 %v738
      %2057 = vmatmul.mubr.f32.gmra.mrb[0].mxu0 %v737
      %v2058 = vpop.f32.mrb[0].mxu0
      %v2059 = vadd.f32 %v1624, %v2058
      %v2060 = vpop.f32.mrb[0].mxu0
      %2061 = vmatprep.mubr.f32.mxu0 %v744
      %2062 = vmatmul.mubr.f32.gmra.mrb[0].mxu0 %v743
      %v2063 = vpop.f32.mrb[0].mxu0
      %v2064 = vadd.f32 %v1629, %v2063
      %v2065 = vpop.f32.mrb[0].mxu0
      %2066 = vmatprep.mubr.f32.mxu0 %v750
      %2067 = vmatmul.mubr.f32.gmra.mrb[0].mxu0 %v749
      %v2068 = vpop.f32.mrb[0].mxu0
      %v2069 = vadd.f32 %v1634, %v2068
      %v2070 = vpop.f32.mrb[0].mxu0
      %2071 = vmatprep.mubr.f32.mxu0 %v756
      %2072 = vmatmul.mubr.f32.gmra.mrb[0].mxu0 %v755
      %v2073 = vpop.f32.mrb[0].mxu0
      %v2074 = vadd.f32 %v1639, %v2073
      %v2075 = vpop.f32.mrb[0].mxu0
      %2076 = vmatprep.mubr.f32.mxu0 %v762
      %2077 = vmatmul.mubr.f32.gmra.mrb[0].mxu0 %v761
      %v2078 = vpop.f32.mrb[0].mxu0
      %v2079 = vadd.f32 %v1644, %v2078
      %v2080 = vpop.f32.mrb[0].mxu0
      %2081 = vmatprep.mubr.f32.mxu0 %v768
      %2082 = vmatmul.mubr.f32.gmra.mrb[0].mxu0 %v767
      %v2083 = vpop.f32.mrb[0].mxu0
      %v2084 = vadd.f32 %v1649, %v2083
      %v2085 = vpop.f32.mrb[0].mxu0
      %2086 = vmatprep.mubr.f32.mxu0 %v774
      %2087 = vmatmul.mubr.f32.gmra.mrb[0].mxu0 %v773
      %v2088 = vpop.f32.mrb[0].mxu0
      %v2089 = vadd.f32 %v1654, %v2088
      %v2090 = vpop.f32.mrb[0].mxu0
      %2091 = vmatprep.mubr.f32.mxu0 %v780
      %2092 = vmatmul.mubr.f32.gmra.mrb[0].mxu0 %v779
      %v2093 = vpop.f32.mrb[0].mxu0
      %v2094 = vadd.f32 %v1659, %v2093
      %v2095 = vpop.f32.mrb[0].mxu0
      %2096 = vmatprep.mubr.f32.mxu0 %v786
      %2097 = vmatmul.mubr.f32.gmra.mrb[0].mxu0 %v785
      %v2098 = vpop.f32.mrb[0].mxu0
      %v2099 = vadd.f32 %v1664, %v2098
      %v2100 = vpop.f32.mrb[0].mxu0
      %2101 = vmatprep.mubr.f32.mxu0 %v792
      %2102 = vmatmul.mubr.f32.gmra.mrb[0].mxu0 %v791
      %v2103 = vpop.f32.mrb[0].mxu0
      %v2104 = vadd.f32 %v1669, %v2103
      %v2105 = vpop.f32.mrb[0].mxu0
      %2106 = vmatprep.mubr.f32.mxu0 %v798
      %2107 = vmatmul.mubr.f32.gmra.mrb[0].mxu0 %v797
      %v2108 = vpop.f32.mrb[0].mxu0
      %v2109 = vadd.f32 %v1674, %v2108
      %v2110 = vpop.f32.mrb[0].mxu0
      %2111 = vmatprep.mubr.f32.mxu0 %v804
      %2112 = vmatmul.mubr.f32.gmra.mrb[0].mxu0 %v803
      %v2113 = vpop.f32.mrb[0].mxu0
      %v2114 = vadd.f32 %v1679, %v2113
      %v2115 = vpop.f32.mrb[0].mxu0
      %2116 = vmatprep.mubr.f32.mxu0 %v810
      %2117 = vmatmul.mubr.f32.gmra.mrb[0].mxu0 %v809
      %v2118 = vpop.f32.mrb[0].mxu0
      %v2119 = vadd.f32 %v1684, %v2118
      %v2120 = vpop.f32.mrb[0].mxu0
      %2121 = vmatprep.mubr.f32.mxu0 %v816
      %2122 = vmatmul.mubr.f32.gmra.mrb[0].mxu0 %v815
      %v2123 = vpop.f32.mrb[0].mxu0
      %v2124 = vadd.f32 %v1689, %v2123
      %v2125 = vpop.f32.mrb[0].mxu0
      %2126 = vmatprep.mubr.f32.mxu0 %v822
      %2127 = vmatmul.mubr.f32.gmra.mrb[0].mxu0 %v821
      %v2128 = vpop.f32.mrb[0].mxu0
      %v2129 = vadd.f32 %v1694, %v2128
      %v2130 = vpop.f32.mrb[0].mxu0
      %2131 = vmatprep.mubr.f32.mxu0 %v828
      %2132 = vmatmul.mubr.f32.gmra.mrb[0].mxu0 %v827
      %v2133 = vpop.f32.mrb[0].mxu0
      %v2134 = vadd.f32 %v1699, %v2133
      %v2135 = vpop.f32.mrb[0].mxu0
      %2136 = vmatprep.mubr.f32.mxu0 %v834
      %2137 = vmatmul.mubr.f32.gmra.mrb[0].mxu0 %v833
      %v2138 = vpop.f32.mrb[0].mxu0
      %v2139 = vadd.f32 %v1704, %v2138
      %v2140 = vpop.f32.mrb[0].mxu0
      %2141 = vmatprep.mubr.f32.mxu0 %v840
      %2142 = vmatmul.mubr.f32.gmra.mrb[0].mxu0 %v839
      %v2143 = vpop.f32.mrb[0].mxu0
      %v2144 = vadd.f32 %v1709, %v2143
      %v2145 = vpop.f32.mrb[0].mxu0
      %2146 = vmatprep.mubr.f32.mxu0 %v846
      %2147 = vmatmul.mubr.f32.gmra.mrb[0].mxu0 %v845
      %v2148 = vpop.f32.mrb[0].mxu0
      %v2149 = vadd.f32 %v1714, %v2148
      %v2150 = vpop.f32.mrb[0].mxu0
      %2151 = vdwg.mxu0
      %2152 = vst.msk [vmem:[#allocation2] sm:$0xff] %vm394, %v1784
      %2153 = vst.msk [vmem:[#allocation2 + $0x8] sm:$0xff] %vm394, %v1789
      %2154 = vst.msk [vmem:[#allocation2 + $0x10] sm:$0xff] %vm394, %v1794
      %2155 = vst.msk [vmem:[#allocation2 + $0x18] sm:$0xff] %vm394, %v1799
      %2156 = vst.msk [vmem:[#allocation2 + $0x20] sm:$0xff] %vm394, %v1804
      %2157 = vst.msk [vmem:[#allocation2 + $0x28] sm:$0xff] %vm394, %v1809
      %2158 = vst.msk [vmem:[#allocation2 + $0x30] sm:$0xff] %vm394, %v1814
      %2159 = vst.msk [vmem:[#allocation2 + $0x38] sm:$0xff] %vm394, %v1819
      %2160 = vst.msk [vmem:[#allocation2 + $0x40] sm:$0xff] %vm394, %v1824
      %2161 = vst.msk [vmem:[#allocation2 + $0x48] sm:$0xff] %vm394, %v1829
      %2162 = vst.msk [vmem:[#allocation2 + $0x50] sm:$0xff] %vm394, %v1834
      %2163 = vst.msk [vmem:[#allocation2 + $0x58] sm:$0xff] %vm394, %v1839
      %2164 = vst.msk [vmem:[#allocation2 + $0x60] sm:$0xff] %vm394, %v1844
      %2165 = vst.msk [vmem:[#allocation2 + $0x68] sm:$0xff] %vm394, %v1849
      %2166 = vst.msk [vmem:[#allocation2 + $0x70] sm:$0xff] %vm394, %v1854
      %2167 = vst.msk [vmem:[#allocation2 + $0x78] sm:$0xff] %vm394, %v1859
      %2168 = vst.msk [vmem:[#allocation2 + $0x80] sm:$0xff] %vm394, %v1864
      %2169 = vst.msk [vmem:[#allocation2 + $0x88] sm:$0xff] %vm394, %v1869
      %2170 = vst.msk [vmem:[#allocation2 + $0x90] sm:$0xff] %vm394, %v1874
      %2171 = vst.msk [vmem:[#allocation2 + $0x98] sm:$0xff] %vm394, %v1879
      %2172 = vst.msk [vmem:[#allocation2 + $0xa0] sm:$0xff] %vm394, %v1884
      %2173 = vst.msk [vmem:[#allocation2 + $0xa8] sm:$0xff] %vm394, %v1889
      %2174 = vst.msk [vmem:[#allocation2 + $0xb0] sm:$0xff] %vm394, %v1894
      %2175 = vst.msk [vmem:[#allocation2 + $0xb8] sm:$0xff] %vm394, %v1899
      %2176 = vst.msk [vmem:[#allocation2 + $0xc0] sm:$0xff] %vm394, %v1904
      %2177 = vst.msk [vmem:[#allocation2 + $0xc8] sm:$0xff] %vm394, %v1909
      %2178 = vst.msk [vmem:[#allocation2 + $0xd0] sm:$0xff] %vm394, %v1914
      %2179 = vst.msk [vmem:[#allocation2 + $0xd8] sm:$0xff] %vm394, %v1919
      %2180 = vst.msk [vmem:[#allocation2 + $0xe0] sm:$0xff] %vm394, %v1924
      %2181 = vst.msk [vmem:[#allocation2 + $0xe8] sm:$0xff] %vm394, %v1929
      %2182 = vst.msk [vmem:[#allocation2 + $0xf0] sm:$0xff] %vm394, %v1934
      %2183 = vst.msk [vmem:[#allocation2 + $0xf8] sm:$0xff] %vm394, %v1939
      %2184 = vst.msk [vmem:[#allocation2 + $0x100] sm:$0xff] %vm394, %v1944
      %2185 = vst.msk [vmem:[#allocation2 + $0x108] sm:$0xff] %vm394, %v1949
      %2186 = vst.msk [vmem:[#allocation2 + $0x110] sm:$0xff] %vm394, %v1954
      %2187 = vst.msk [vmem:[#allocation2 + $0x118] sm:$0xff] %vm394, %v1959
      %2188 = vst.msk [vmem:[#allocation2 + $0x120] sm:$0xff] %vm394, %v1964
      %2189 = vst.msk [vmem:[#allocation2 + $0x128] sm:$0xff] %vm394, %v1969
      %2190 = vst.msk [vmem:[#allocation2 + $0x130] sm:$0xff] %vm394, %v1974
      %2191 = vst.msk [vmem:[#allocation2 + $0x138] sm:$0xff] %vm394, %v1979
      %2192 = vst.msk [vmem:[#allocation2 + $0x140] sm:$0xff] %vm394, %v1984
      %2193 = vst.msk [vmem:[#allocation2 + $0x148] sm:$0xff] %vm394, %v1989
      %2194 = vst.msk [vmem:[#allocation2 + $0x150] sm:$0xff] %vm394, %v1994
      %2195 = vst.msk [vmem:[#allocation2 + $0x158] sm:$0xff] %vm394, %v1999
      %2196 = vst.msk [vmem:[#allocation2 + $0x160] sm:$0xff] %vm394, %v2004
      %2197 = vst.msk [vmem:[#allocation2 + $0x168] sm:$0xff] %vm394, %v2009
      %2198 = vst.msk [vmem:[#allocation2 + $0x170] sm:$0xff] %vm394, %v2014
      %2199 = vst.msk [vmem:[#allocation2 + $0x178] sm:$0xff] %vm394, %v2019
      %2200 = vst.msk [vmem:[#allocation2 + $0x180] sm:$0xff] %vm394, %v2024
      %2201 = vst.msk [vmem:[#allocation2 + $0x188] sm:$0xff] %vm394, %v2029
      %2202 = vst.msk [vmem:[#allocation2 + $0x190] sm:$0xff] %vm394, %v2034
      %2203 = vst.msk [vmem:[#allocation2 + $0x198] sm:$0xff] %vm394, %v2039
      %2204 = vst.msk [vmem:[#allocation2 + $0x1a0] sm:$0xff] %vm394, %v2044
      %2205 = vst.msk [vmem:[#allocation2 + $0x1a8] sm:$0xff] %vm394, %v2049
      %2206 = vst.msk [vmem:[#allocation2 + $0x1b0] sm:$0xff] %vm394, %v2054
      %2207 = vst.msk [vmem:[#allocation2 + $0x1b8] sm:$0xff] %vm394, %v2059
      %2208 = vst.msk [vmem:[#allocation2 + $0x1c0] sm:$0xff] %vm394, %v2064
      %2209 = vst.msk [vmem:[#allocation2 + $0x1c8] sm:$0xff] %vm394, %v2069
      %2210 = vst.msk [vmem:[#allocation2 + $0x1d0] sm:$0xff] %vm394, %v2074
      %2211 = vst.msk [vmem:[#allocation2 + $0x1d8] sm:$0xff] %vm394, %v2079
      %2212 = vst.msk [vmem:[#allocation2 + $0x1e0] sm:$0xff] %vm394, %v2084
      %2213 = vst.msk [vmem:[#allocation2 + $0x1e8] sm:$0xff] %vm394, %v2089
      %2214 = vst.msk [vmem:[#allocation2 + $0x1f0] sm:$0xff] %vm394, %v2094
      %2215 = vst.msk [vmem:[#allocation2 + $0x1f8] sm:$0xff] %vm394, %v2099
      %2216 = vst.msk [vmem:[#allocation2 + $0x200] sm:$0xff] %vm394, %v2104
      %2217 = vst.msk [vmem:[#allocation2 + $0x208] sm:$0xff] %vm394, %v2109
      %2218 = vst.msk [vmem:[#allocation2 + $0x210] sm:$0xff] %vm394, %v2114
      %2219 = vst.msk [vmem:[#allocation2 + $0x218] sm:$0xff] %vm394, %v2119
      %2220 = vst.msk [vmem:[#allocation2 + $0x220] sm:$0xff] %vm394, %v2124
      %2221 = vst.msk [vmem:[#allocation2 + $0x228] sm:$0xff] %vm394, %v2129
      %2222 = vst.msk [vmem:[#allocation2 + $0x230] sm:$0xff] %vm394, %v2134
      %2223 = vst.msk [vmem:[#allocation2 + $0x238] sm:$0xff] %vm394, %v2139
      %2224 = vst.msk [vmem:[#allocation2 + $0x240] sm:$0xff] %vm394, %v2144
      %vm2225 = vcmask 61440
      %2226 = vst.msk [vmem:[#allocation2 + $0x248] sm:$0x1f] %vm2225, %v2149
      %v2227 = vld [vmem:[#allocation2] sm:$0xff]
      %v2228 = vld [vmem:[#allocation2 + $0x8] sm:$0xff]
      %v2229 = vld [vmem:[#allocation2 + $0x10] sm:$0xff]
      %v2230 = vld [vmem:[#allocation2 + $0x18] sm:$0xff]
      %v2231 = vld [vmem:[#allocation2 + $0x20] sm:$0xff]
      %v2232 = vld [vmem:[#allocation2 + $0x28] sm:$0xff]
      %v2233 = vld [vmem:[#allocation2 + $0x30] sm:$0xff]
      %v2234 = vld [vmem:[#allocation2 + $0x38] sm:$0xff]
      %v2235 = vld [vmem:[#allocation2 + $0x40] sm:$0xff]
      %v2236 = vld [vmem:[#allocation2 + $0x48] sm:$0xff]
      %v2237 = vld [vmem:[#allocation2 + $0x50] sm:$0xff]
      %v2238 = vld [vmem:[#allocation2 + $0x58] sm:$0xff]
      %v2239 = vld [vmem:[#allocation2 + $0x60] sm:$0xff]
      %v2240 = vld [vmem:[#allocation2 + $0x68] sm:$0xff]
      %v2241 = vld [vmem:[#allocation2 + $0x70] sm:$0xff]
      %v2242 = vld [vmem:[#allocation2 + $0x78] sm:$0xff]
      %v2243 = vld [vmem:[#allocation2 + $0x80] sm:$0xff]
      %v2244 = vld [vmem:[#allocation2 + $0x88] sm:$0xff]
      %v2245 = vld [vmem:[#allocation2 + $0x90] sm:$0xff]
      %v2246 = vld [vmem:[#allocation2 + $0x98] sm:$0xff]
      %v2247 = vld [vmem:[#allocation2 + $0xa0] sm:$0xff]
      %v2248 = vld [vmem:[#allocation2 + $0xa8] sm:$0xff]
      %v2249 = vld [vmem:[#allocation2 + $0xb0] sm:$0xff]
      %v2250 = vld [vmem:[#allocation2 + $0xb8] sm:$0xff]
      %v2251 = vld [vmem:[#allocation2 + $0xc0] sm:$0xff]
      %v2252 = vld [vmem:[#allocation2 + $0xc8] sm:$0xff]
      %v2253 = vld [vmem:[#allocation2 + $0xd0] sm:$0xff]
      %v2254 = vld [vmem:[#allocation2 + $0xd8] sm:$0xff]
      %v2255 = vld [vmem:[#allocation2 + $0xe0] sm:$0xff]
      %v2256 = vld [vmem:[#allocation2 + $0xe8] sm:$0xff]
      %v2257 = vld [vmem:[#allocation2 + $0xf0] sm:$0xff]
      %v2258 = vld [vmem:[#allocation2 + $0xf8] sm:$0xff]
      %v2259 = vld [vmem:[#allocation2 + $0x100] sm:$0xff]
      %v2260 = vld [vmem:[#allocation2 + $0x108] sm:$0xff]
      %v2261 = vld [vmem:[#allocation2 + $0x110] sm:$0xff]
      %v2262 = vld [vmem:[#allocation2 + $0x118] sm:$0xff]
      %v2263 = vld [vmem:[#allocation2 + $0x120] sm:$0xff]
      %v2264 = vld [vmem:[#allocation2 + $0x128] sm:$0xff]
      %v2265 = vld [vmem:[#allocation2 + $0x130] sm:$0xff]
      %v2266 = vld [vmem:[#allocation2 + $0x138] sm:$0xff]
      %v2267 = vld [vmem:[#allocation2 + $0x140] sm:$0xff]
      %v2268 = vld [vmem:[#allocation2 + $0x148] sm:$0xff]
      %v2269 = vld [vmem:[#allocation2 + $0x150] sm:$0xff]
      %v2270 = vld [vmem:[#allocation2 + $0x158] sm:$0xff]
      %v2271 = vld [vmem:[#allocation2 + $0x160] sm:$0xff]
      %v2272 = vld [vmem:[#allocation2 + $0x168] sm:$0xff]
      %v2273 = vld [vmem:[#allocation2 + $0x170] sm:$0xff]
      %v2274 = vld [vmem:[#allocation2 + $0x178] sm:$0xff]
      %v2275 = vld [vmem:[#allocation2 + $0x180] sm:$0xff]
      %v2276 = vld [vmem:[#allocation2 + $0x188] sm:$0xff]
      %v2277 = vld [vmem:[#allocation2 + $0x190] sm:$0xff]
      %v2278 = vld [vmem:[#allocation2 + $0x198] sm:$0xff]
      %v2279 = vld [vmem:[#allocation2 + $0x1a0] sm:$0xff]
      %v2280 = vld [vmem:[#allocation2 + $0x1a8] sm:$0xff]
      %v2281 = vld [vmem:[#allocation2 + $0x1b0] sm:$0xff]
      %v2282 = vld [vmem:[#allocation2 + $0x1b8] sm:$0xff]
      %v2283 = vld [vmem:[#allocation2 + $0x1c0] sm:$0xff]
      %v2284 = vld [vmem:[#allocation2 + $0x1c8] sm:$0xff]
      %v2285 = vld [vmem:[#allocation2 + $0x1d0] sm:$0xff]
      %v2286 = vld [vmem:[#allocation2 + $0x1d8] sm:$0xff]
      %v2287 = vld [vmem:[#allocation2 + $0x1e0] sm:$0xff]
      %v2288 = vld [vmem:[#allocation2 + $0x1e8] sm:$0xff]
      %v2289 = vld [vmem:[#allocation2 + $0x1f0] sm:$0xff]
      %v2290 = vld [vmem:[#allocation2 + $0x1f8] sm:$0xff]
      %v2291 = vld [vmem:[#allocation2 + $0x200] sm:$0xff]
      %v2292 = vld [vmem:[#allocation2 + $0x208] sm:$0xff]
      %v2293 = vld [vmem:[#allocation2 + $0x210] sm:$0xff]
      %v2294 = vld [vmem:[#allocation2 + $0x218] sm:$0xff]
      %v2295 = vld [vmem:[#allocation2 + $0x220] sm:$0xff]
      %v2296 = vld [vmem:[#allocation2 + $0x228] sm:$0xff]
      %v2297 = vld [vmem:[#allocation2 + $0x230] sm:$0xff]
      %v2298 = vld [vmem:[#allocation2 + $0x238] sm:$0xff]
      %v2299 = vld [vmem:[#allocation2 + $0x240] sm:$0xff]
      %v2300 = vld [vmem:[#allocation2 + $0x248] sm:$0xff]
      %v2301 = vld [vmem:[#allocation2 + $0x250] sm:$0xff]
      %v2302 = vld [vmem:[#allocation2 + $0x258] sm:$0xff]
      %v2303 = vld [vmem:[#allocation2 + $0x260] sm:$0xff]
      %v2304 = vld [vmem:[#allocation2 + $0x268] sm:$0xff]
      %v2305 = vld [vmem:[#allocation2 + $0x270] sm:$0xff]
      %v2306 = vld [vmem:[#allocation2 + $0x278] sm:$0xff]
      %2307 = vxpose.xlu0.b32.start [1/16] %v2227, 128
      %2308 = vxpose.xlu0.b32.cont [2/16] %v2228, 128
      %2309 = vxpose.xlu0.b32.cont [3/16] %v2229, 128
      %2310 = vxpose.xlu0.b32.cont [4/16] %v2230, 128
      %2311 = vxpose.xlu0.b32.cont [5/16] %v2231, 128
      %2312 = vxpose.xlu0.b32.cont [6/16] %v2232, 128
      %2313 = vxpose.xlu0.b32.cont [7/16] %v2233, 128
      %2314 = vxpose.xlu0.b32.cont [8/16] %v2234, 128
      %2315 = vxpose.xlu0.b32.cont [9/16] %v2235, 128
      %2316 = vxpose.xlu0.b32.cont [10/16] %v2236, 128
      %2317 = vxpose.xlu0.b32.cont [11/16] %v2237, 128
      %2318 = vxpose.xlu0.b32.cont [12/16] %v2238, 128
      %2319 = vxpose.xlu0.b32.cont [13/16] %v2239, 128
      %2320 = vxpose.xlu0.b32.cont [14/16] %v2240, 128
      %2321 = vxpose.xlu0.b32.cont [15/16] %v2241, 128
      %2322 = vxpose.xlu0.b32.end [16/16] %v2242, 128
      %v2323 = vpop.trf.xlu0
      %v2324 = vpop.trf.xlu0
      %v2325 = vpop.trf.xlu0
      %v2326 = vpop.trf.xlu0
      %v2327 = vpop.trf.xlu0
      %v2328 = vpop.trf.xlu0
      %v2329 = vpop.trf.xlu0
      %v2330 = vpop.trf.xlu0
      %v2331 = vpop.trf.xlu0
      %v2332 = vpop.trf.xlu0
      %v2333 = vpop.trf.xlu0
      %v2334 = vpop.trf.xlu0
      %v2335 = vpop.trf.xlu0
      %v2336 = vpop.trf.xlu0
      %v2337 = vpop.trf.xlu0
      %v2338 = vpop.trf.xlu0
      %2339 = vxpose.xlu0.b32.start [1/16] %v2243, 128
      %2340 = vxpose.xlu0.b32.cont [2/16] %v2244, 128
      %2341 = vxpose.xlu0.b32.cont [3/16] %v2245, 128
      %2342 = vxpose.xlu0.b32.cont [4/16] %v2246, 128
      %2343 = vxpose.xlu0.b32.cont [5/16] %v2247, 128
      %2344 = vxpose.xlu0.b32.cont [6/16] %v2248, 128
      %2345 = vxpose.xlu0.b32.cont [7/16] %v2249, 128
      %2346 = vxpose.xlu0.b32.cont [8/16] %v2250, 128
      %2347 = vxpose.xlu0.b32.cont [9/16] %v2251, 128
      %2348 = vxpose.xlu0.b32.cont [10/16] %v2252, 128
      %2349 = vxpose.xlu0.b32.cont [11/16] %v2253, 128
      %2350 = vxpose.xlu0.b32.cont [12/16] %v2254, 128
      %2351 = vxpose.xlu0.b32.cont [13/16] %v2255, 128
      %2352 = vxpose.xlu0.b32.cont [14/16] %v2256, 128
      %2353 = vxpose.xlu0.b32.cont [15/16] %v2257, 128
      %2354 = vxpose.xlu0.b32.end [16/16] %v2258, 128
      %v2355 = vpop.trf.xlu0
      %v2356 = vpop.trf.xlu0
      %v2357 = vpop.trf.xlu0
      %v2358 = vpop.trf.xlu0
      %v2359 = vpop.trf.xlu0
      %v2360 = vpop.trf.xlu0
      %v2361 = vpop.trf.xlu0
      %v2362 = vpop.trf.xlu0
      %v2363 = vpop.trf.xlu0
      %v2364 = vpop.trf.xlu0
      %v2365 = vpop.trf.xlu0
      %v2366 = vpop.trf.xlu0
      %v2367 = vpop.trf.xlu0
      %v2368 = vpop.trf.xlu0
      %v2369 = vpop.trf.xlu0
      %v2370 = vpop.trf.xlu0
      %2371 = vxpose.xlu0.b32.start [1/16] %v2259, 128
      %2372 = vxpose.xlu0.b32.cont [2/16] %v2260, 128
      %2373 = vxpose.xlu0.b32.cont [3/16] %v2261, 128
      %2374 = vxpose.xlu0.b32.cont [4/16] %v2262, 128
      %2375 = vxpose.xlu0.b32.cont [5/16] %v2263, 128
      %2376 = vxpose.xlu0.b32.cont [6/16] %v2264, 128
      %2377 = vxpose.xlu0.b32.cont [7/16] %v2265, 128
      %2378 = vxpose.xlu0.b32.cont [8/16] %v2266, 128
      %2379 = vxpose.xlu0.b32.cont [9/16] %v2267, 128
      %2380 = vxpose.xlu0.b32.cont [10/16] %v2268, 128
      %2381 = vxpose.xlu0.b32.cont [11/16] %v2269, 128
      %2382 = vxpose.xlu0.b32.cont [12/16] %v2270, 128
      %2383 = vxpose.xlu0.b32.cont [13/16] %v2271, 128
      %2384 = vxpose.xlu0.b32.cont [14/16] %v2272, 128
      %2385 = vxpose.xlu0.b32.cont [15/16] %v2273, 128
      %2386 = vxpose.xlu0.b32.end [16/16] %v2274, 128
      %v2387 = vpop.trf.xlu0
      %v2388 = vpop.trf.xlu0
      %v2389 = vpop.trf.xlu0
      %v2390 = vpop.trf.xlu0
      %v2391 = vpop.trf.xlu0
      %v2392 = vpop.trf.xlu0
      %v2393 = vpop.trf.xlu0
      %v2394 = vpop.trf.xlu0
      %v2395 = vpop.trf.xlu0
      %v2396 = vpop.trf.xlu0
      %v2397 = vpop.trf.xlu0
      %v2398 = vpop.trf.xlu0
      %v2399 = vpop.trf.xlu0
      %v2400 = vpop.trf.xlu0
      %v2401 = vpop.trf.xlu0
      %v2402 = vpop.trf.xlu0
      %2403 = vxpose.xlu0.b32.start [1/16] %v2275, 128
      %2404 = vxpose.xlu0.b32.cont [2/16] %v2276, 128
      %2405 = vxpose.xlu0.b32.cont [3/16] %v2277, 128
      %2406 = vxpose.xlu0.b32.cont [4/16] %v2278, 128
      %2407 = vxpose.xlu0.b32.cont [5/16] %v2279, 128
      %2408 = vxpose.xlu0.b32.cont [6/16] %v2280, 128
      %2409 = vxpose.xlu0.b32.cont [7/16] %v2281, 128
      %2410 = vxpose.xlu0.b32.cont [8/16] %v2282, 128
      %2411 = vxpose.xlu0.b32.cont [9/16] %v2283, 128
      %2412 = vxpose.xlu0.b32.cont [10/16] %v2284, 128
      %2413 = vxpose.xlu0.b32.cont [11/16] %v2285, 128
      %2414 = vxpose.xlu0.b32.cont [12/16] %v2286, 128
      %2415 = vxpose.xlu0.b32.cont [13/16] %v2287, 128
      %2416 = vxpose.xlu0.b32.cont [14/16] %v2288, 128
      %2417 = vxpose.xlu0.b32.cont [15/16] %v2289, 128
      %2418 = vxpose.xlu0.b32.end [16/16] %v2290, 128
      %v2419 = vpop.trf.xlu0
      %v2420 = vpop.trf.xlu0
      %v2421 = vpop.trf.xlu0
      %v2422 = vpop.trf.xlu0
      %v2423 = vpop.trf.xlu0
      %v2424 = vpop.trf.xlu0
      %v2425 = vpop.trf.xlu0
      %v2426 = vpop.trf.xlu0
      %v2427 = vpop.trf.xlu0
      %v2428 = vpop.trf.xlu0
      %v2429 = vpop.trf.xlu0
      %v2430 = vpop.trf.xlu0
      %v2431 = vpop.trf.xlu0
      %v2432 = vpop.trf.xlu0
      %v2433 = vpop.trf.xlu0
      %v2434 = vpop.trf.xlu0
      %2435 = vxpose.xlu0.b32.start [1/16] %v2291, 128
      %2436 = vxpose.xlu0.b32.cont [2/16] %v2292, 128
      %2437 = vxpose.xlu0.b32.cont [3/16] %v2293, 128
      %2438 = vxpose.xlu0.b32.cont [4/16] %v2294, 128
      %2439 = vxpose.xlu0.b32.cont [5/16] %v2295, 128
      %2440 = vxpose.xlu0.b32.cont [6/16] %v2296, 128
      %2441 = vxpose.xlu0.b32.cont [7/16] %v2297, 128
      %2442 = vxpose.xlu0.b32.cont [8/16] %v2298, 128
      %2443 = vxpose.xlu0.b32.cont [9/16] %v2299, 128
      %2444 = vxpose.xlu0.b32.cont [10/16] %v2300, 128
      %2445 = vxpose.xlu0.b32.cont [11/16] %v2301, 128
      %2446 = vxpose.xlu0.b32.cont [12/16] %v2302, 128
      %2447 = vxpose.xlu0.b32.cont [13/16] %v2303, 128
      %2448 = vxpose.xlu0.b32.cont [14/16] %v2304, 128
      %2449 = vxpose.xlu0.b32.cont [15/16] %v2305, 128
      %2450 = vxpose.xlu0.b32.end [16/16] %v2306, 128
      %v2451 = vpop.trf.xlu0
      %v2452 = vpop.trf.xlu0
      %v2453 = vpop.trf.xlu0
      %v2454 = vpop.trf.xlu0
      %v2455 = vpop.trf.xlu0
      %v2456 = vpop.trf.xlu0
      %v2457 = vpop.trf.xlu0
      %v2458 = vpop.trf.xlu0
      %v2459 = vpop.trf.xlu0
      %v2460 = vpop.trf.xlu0
      %v2461 = vpop.trf.xlu0
      %v2462 = vpop.trf.xlu0
      %v2463 = vpop.trf.xlu0
      %v2464 = vpop.trf.xlu0
      %v2465 = vpop.trf.xlu0
      %v2466 = vpop.trf.xlu0
      %2468 = vset.pattern.permute.xlu0 0
      %2469 = vperm.xlu0 %2468, %v375
      %v2470 = vpop.permute.xlu0 %2469
      %v2472 = vadd.f32 %v2323, %v2470
      %v2473 = vadd.f32 %v2355, %v2470
      %v2474 = vadd.f32 %v2387, %v2470
      %v2475 = vadd.f32 %v2419, %v2470
      %v2476 = vadd.f32 %v2451, %v2470
      %v2477 = vmul.f32 %v2472, 1.702
      %v2478 = vmul.f32 %v2473, 1.702
      %v2479 = vmul.f32 %v2474, 1.702
      %v2480 = vmul.f32 %v2475, 1.702
      %v2481 = vmul.f32 %v2476, 1.702
      %v2482 = vxor.u32 %v2477, 2147483648
      %v2483 = vxor.u32 %v2478, 2147483648
      %v2484 = vxor.u32 %v2479, 2147483648
      %v2485 = vxor.u32 %v2480, 2147483648
      %v2486 = vxor.u32 %v2481, 2147483648
      %v2487 = vmul.f32 %v2482, 1.442695
      %v2488 = vpow.pop %v2487
      %v2489 = vmul.f32 %v2483, 1.442695
      %v2490 = vpow.pop %v2489
      %v2491 = vmul.f32 %v2484, 1.442695
      %v2492 = vpow.pop %v2491
      %v2493 = vmul.f32 %v2485, 1.442695
      %v2494 = vpow.pop %v2493
      %v2495 = vmul.f32 %v2486, 1.442695
      %v2496 = vpow.pop %v2495
      %v2497 = vadd.f32 %v2488, 1.0
      %v2498 = vadd.f32 %v2490, 1.0
      %v2499 = vadd.f32 %v2492, 1.0
      %v2500 = vadd.f32 %v2494, 1.0
      %v2501 = vadd.f32 %v2496, 1.0
      %v2502 = vrcp.pop %v2497
      %v2503 = vmul.f32 1.0, %v2502
      %v2504 = vrcp.pop %v2498
      %v2505 = vmul.f32 1.0, %v2504
      %v2506 = vrcp.pop %v2499
      %v2507 = vmul.f32 1.0, %v2506
      %v2508 = vrcp.pop %v2500
      %v2509 = vmul.f32 1.0, %v2508
      %v2510 = vrcp.pop %v2501
      %v2511 = vmul.f32 1.0, %v2510
      %v2512 = vmul.f32 %v2472, %v2503
      %v2513 = vmul.f32 %v2473, %v2505
      %v2514 = vmul.f32 %v2474, %v2507
      %v2515 = vmul.f32 %v2475, %v2509
      %v2516 = vmul.f32 %v2476, %v2511
      %2517 = vrot.lane.b32.xlu0 %v2512, 15
      %v2518 = vpop.permute.xlu0 %2517
      %2519 = vrot.lane.b32.xlu0 %v2513, 15
      %v2520 = vpop.permute.xlu0 %2519
      %2521 = vrot.lane.b32.xlu0 %v2514, 15
      %v2522 = vpop.permute.xlu0 %2521
      %2523 = vrot.lane.b32.xlu0 %v2515, 15
      %v2524 = vpop.permute.xlu0 %2523
      %2525 = vrot.lane.b32.xlu0 %v2516, 15
      %v2526 = vpop.permute.xlu0 %2525
      %v2527 = vlaneseq
      %v2528 = vand.u32 %v2527, 127
      %vm2529 = vcmp.lt.s32.totalorder %v2528, 15
      %v2530 = vsel %vm2529, %v2524, %v2526
      %v2531 = vsel %vm2529, %v2522, %v2524
      %v2532 = vsel %vm2529, %v2520, %v2522
      %v2533 = vsel %vm2529, %v2518, %v2520
      %v2534 = vsel %vm2529, %v2526, %v2518
      %v2535 = vlaneseq
      %v2536 = vshrl.u32 %v2535, 7
      %v2537 = vsub.s32 0, %v2536
      %v2538 = vrot.slane %v384, %v2537
      %v2539 = vlaneseq
      %v2540 = vshrl.u32 %v2539, 7
      %v2541 = vsub.s32 0, %v2540
      %v2542 = vrot.slane %v385, %v2541
      %v2543 = vlaneseq
      %v2544 = vshrl.u32 %v2543, 7
      %v2545 = vsub.s32 0, %v2544
      %v2546 = vrot.slane %v386, %v2545
      %v2547 = vlaneseq
      %v2548 = vshrl.u32 %v2547, 7
      %v2549 = vsub.s32 0, %v2548
      %v2550 = vrot.slane %v387, %v2549
      %v2551 = vlaneseq
      %v2552 = vshrl.u32 %v2551, 7
      %v2553 = vsub.s32 0, %v2552
      %v2554 = vrot.slane %v388, %v2553
      %v2555 = vmul.f32 %v2534, %v2538
      %v2556 = vmul.f32 %v2533, %v2542
      %v2557 = vmul.f32 %v2532, %v2546
      %v2558 = vmul.f32 %v2531, %v2550
      %v2559 = vmul.f32 %v2530, %v2554
      %2560 = vrot.lane.b32.xlu0 %v2512, 14
      %v2561 = vpop.permute.xlu0 %2560
      %2562 = vrot.lane.b32.xlu0 %v2513, 14
      %v2563 = vpop.permute.xlu0 %2562
      %2564 = vrot.lane.b32.xlu0 %v2514, 14
      %v2565 = vpop.permute.xlu0 %2564
      %2566 = vrot.lane.b32.xlu0 %v2515, 14
      %v2567 = vpop.permute.xlu0 %2566
      %2568 = vrot.lane.b32.xlu0 %v2516, 14
      %v2569 = vpop.permute.xlu0 %2568
      %vm2570 = vcmp.lt.s32.totalorder %v2528, 14
      %v2571 = vsel %vm2570, %v2567, %v2569
      %v2572 = vsel %vm2570, %v2565, %v2567
      %v2573 = vsel %vm2570, %v2563, %v2565
      %v2574 = vsel %vm2570, %v2561, %v2563
      %v2575 = vsel %vm2570, %v2569, %v2561
      %v2576 = vlaneseq
      %v2577 = vshrl.u32 %v2576, 7
      %v2578 = vsub.s32 1, %v2577
      %v2579 = vrot.slane %v384, %v2578
      %v2580 = vlaneseq
      %v2581 = vshrl.u32 %v2580, 7
      %v2582 = vsub.s32 1, %v2581
      %v2583 = vrot.slane %v385, %v2582
      %v2584 = vlaneseq
      %v2585 = vshrl.u32 %v2584, 7
      %v2586 = vsub.s32 1, %v2585
      %v2587 = vrot.slane %v386, %v2586
      %v2588 = vlaneseq
      %v2589 = vshrl.u32 %v2588, 7
      %v2590 = vsub.s32 1, %v2589
      %v2591 = vrot.slane %v387, %v2590
      %v2592 = vlaneseq
      %v2593 = vshrl.u32 %v2592, 7
      %v2594 = vsub.s32 1, %v2593
      %v2595 = vrot.slane %v388, %v2594
      %v2596 = vmul.f32 %v2575, %v2579
      %v2597 = vmul.f32 %v2574, %v2583
      %v2598 = vmul.f32 %v2573, %v2587
      %v2599 = vmul.f32 %v2572, %v2591
      %v2600 = vmul.f32 %v2571, %v2595
      %2601 = vrot.lane.b32.xlu0 %v2512, 13
      %v2602 = vpop.permute.xlu0 %2601
      %2603 = vrot.lane.b32.xlu0 %v2513, 13
      %v2604 = vpop.permute.xlu0 %2603
      %2605 = vrot.lane.b32.xlu0 %v2514, 13
      %v2606 = vpop.permute.xlu0 %2605
      %2607 = vrot.lane.b32.xlu0 %v2515, 13
      %v2608 = vpop.permute.xlu0 %2607
      %2609 = vrot.lane.b32.xlu0 %v2516, 13
      %v2610 = vpop.permute.xlu0 %2609
      %vm2611 = vcmp.lt.s32.totalorder %v2528, 13
      %v2612 = vsel %vm2611, %v2608, %v2610
      %v2613 = vsel %vm2611, %v2606, %v2608
      %v2614 = vsel %vm2611, %v2604, %v2606
      %v2615 = vsel %vm2611, %v2602, %v2604
      %v2616 = vsel %vm2611, %v2610, %v2602
      %v2617 = vlaneseq
      %v2618 = vshrl.u32 %v2617, 7
      %v2619 = vsub.s32 2, %v2618
      %v2620 = vrot.slane %v384, %v2619
      %v2621 = vlaneseq
      %v2622 = vshrl.u32 %v2621, 7
      %v2623 = vsub.s32 2, %v2622
      %v2624 = vrot.slane %v385, %v2623
      %v2625 = vlaneseq
      %v2626 = vshrl.u32 %v2625, 7
      %v2627 = vsub.s32 2, %v2626
      %v2628 = vrot.slane %v386, %v2627
      %v2629 = vlaneseq
      %v2630 = vshrl.u32 %v2629, 7
      %v2631 = vsub.s32 2, %v2630
      %v2632 = vrot.slane %v387, %v2631
      %v2633 = vlaneseq
      %v2634 = vshrl.u32 %v2633, 7
      %v2635 = vsub.s32 2, %v2634
      %v2636 = vrot.slane %v388, %v2635
      %v2637 = vmul.f32 %v2616, %v2620
      %v2638 = vmul.f32 %v2615, %v2624
      %v2639 = vmul.f32 %v2614, %v2628
      %v2640 = vmul.f32 %v2613, %v2632
      %v2641 = vmul.f32 %v2612, %v2636
      %2642 = vrot.lane.b32.xlu0 %v2512, 1
      %v2643 = vpop.permute.xlu0 %2642
      %2644 = vrot.lane.b32.xlu0 %v2513, 1
      %v2645 = vpop.permute.xlu0 %2644
      %2646 = vrot.lane.b32.xlu0 %v2514, 1
      %v2647 = vpop.permute.xlu0 %2646
      %2648 = vrot.lane.b32.xlu0 %v2515, 1
      %v2649 = vpop.permute.xlu0 %2648
      %2650 = vrot.lane.b32.xlu0 %v2516, 1
      %v2651 = vpop.permute.xlu0 %2650
      %vm2652 = vcmp.lt.s32.totalorder %v2528, 1
      %v2653 = vsel %vm2652, %v2649, %v2651
      %v2654 = vsel %vm2652, %v2647, %v2649
      %v2655 = vsel %vm2652, %v2645, %v2647
      %v2656 = vsel %vm2652, %v2643, %v2645
      %v2657 = vsel %vm2652, %v2651, %v2643
      %v2658 = vlaneseq
      %v2659 = vshrl.u32 %v2658, 7
      %v2660 = vsub.s32 3, %v2659
      %v2661 = vrot.slane %v384, %v2660
      %v2662 = vlaneseq
      %v2663 = vshrl.u32 %v2662, 7
      %v2664 = vsub.s32 3, %v2663
      %v2665 = vrot.slane %v385, %v2664
      %v2666 = vlaneseq
      %v2667 = vshrl.u32 %v2666, 7
      %v2668 = vsub.s32 3, %v2667
      %v2669 = vrot.slane %v386, %v2668
      %v2670 = vlaneseq
      %v2671 = vshrl.u32 %v2670, 7
      %v2672 = vsub.s32 3, %v2671
      %v2673 = vrot.slane %v387, %v2672
      %v2674 = vlaneseq
      %v2675 = vshrl.u32 %v2674, 7
      %v2676 = vsub.s32 3, %v2675
      %v2677 = vrot.slane %v388, %v2676
      %v2678 = vmul.f32 %v2657, %v2661
      %v2679 = vmul.f32 %v2656, %v2665
      %v2680 = vmul.f32 %v2655, %v2669
      %v2681 = vmul.f32 %v2654, %v2673
      %v2682 = vmul.f32 %v2653, %v2677
      %2683 = vrot.lane.b32.xlu0 %v2512, 127
      %v2684 = vpop.permute.xlu0 %2683
      %2685 = vrot.lane.b32.xlu0 %v2513, 127
      %v2686 = vpop.permute.xlu0 %2685
      %2687 = vrot.lane.b32.xlu0 %v2514, 127
      %v2688 = vpop.permute.xlu0 %2687
      %2689 = vrot.lane.b32.xlu0 %v2515, 127
      %v2690 = vpop.permute.xlu0 %2689
      %2691 = vrot.lane.b32.xlu0 %v2516, 127
      %v2692 = vpop.permute.xlu0 %2691
      %vm2693 = vcmp.lt.s32.totalorder %v2528, 127
      %v2694 = vsel %vm2693, %v2690, %v2692
      %v2695 = vsel %vm2693, %v2688, %v2690
      %v2696 = vsel %vm2693, %v2686, %v2688
      %v2697 = vsel %vm2693, %v2684, %v2686
      %v2698 = vsel %vm2693, %v2692, %v2684
      %v2699 = vlaneseq
      %v2700 = vshrl.u32 %v2699, 7
      %v2701 = vsub.s32 5, %v2700
      %v2702 = vrot.slane %v384, %v2701
      %v2703 = vlaneseq
      %v2704 = vshrl.u32 %v2703, 7
      %v2705 = vsub.s32 5, %v2704
      %v2706 = vrot.slane %v385, %v2705
      %v2707 = vlaneseq
      %v2708 = vshrl.u32 %v2707, 7
      %v2709 = vsub.s32 5, %v2708
      %v2710 = vrot.slane %v386, %v2709
      %v2711 = vlaneseq
      %v2712 = vshrl.u32 %v2711, 7
      %v2713 = vsub.s32 5, %v2712
      %v2714 = vrot.slane %v387, %v2713
      %v2715 = vlaneseq
      %v2716 = vshrl.u32 %v2715, 7
      %v2717 = vsub.s32 5, %v2716
      %v2718 = vrot.slane %v388, %v2717
      %v2719 = vmul.f32 %v2697, %v2702
      %v2720 = vmul.f32 %v2696, %v2706
      %v2721 = vmul.f32 %v2695, %v2710
      %v2722 = vmul.f32 %v2694, %v2714
      %v2723 = vmul.f32 %v2698, %v2718
      %2724 = vrot.lane.b32.xlu0 %v2512, 115
      %v2725 = vpop.permute.xlu0 %2724
      %2726 = vrot.lane.b32.xlu0 %v2513, 115
      %v2727 = vpop.permute.xlu0 %2726
      %2728 = vrot.lane.b32.xlu0 %v2514, 115
      %v2729 = vpop.permute.xlu0 %2728
      %2730 = vrot.lane.b32.xlu0 %v2515, 115
      %v2731 = vpop.permute.xlu0 %2730
      %2732 = vrot.lane.b32.xlu0 %v2516, 115
      %v2733 = vpop.permute.xlu0 %2732
      %vm2734 = vcmp.lt.s32.totalorder %v2528, 115
      %v2735 = vsel %vm2734, %v2731, %v2733
      %v2736 = vsel %vm2734, %v2729, %v2731
      %v2737 = vsel %vm2734, %v2727, %v2729
      %v2738 = vsel %vm2734, %v2725, %v2727
      %v2739 = vsel %vm2734, %v2733, %v2725
      %v2740 = vlaneseq
      %v2741 = vshrl.u32 %v2740, 7
      %v2742 = vsub.s32 6, %v2741
      %v2743 = vrot.slane %v384, %v2742
      %v2744 = vlaneseq
      %v2745 = vshrl.u32 %v2744, 7
      %v2746 = vsub.s32 6, %v2745
      %v2747 = vrot.slane %v385, %v2746
      %v2748 = vlaneseq
      %v2749 = vshrl.u32 %v2748, 7
      %v2750 = vsub.s32 6, %v2749
      %v2751 = vrot.slane %v386, %v2750
      %v2752 = vlaneseq
      %v2753 = vshrl.u32 %v2752, 7
      %v2754 = vsub.s32 6, %v2753
      %v2755 = vrot.slane %v387, %v2754
      %v2756 = vlaneseq
      %v2757 = vshrl.u32 %v2756, 7
      %v2758 = vsub.s32 6, %v2757
      %v2759 = vrot.slane %v388, %v2758
      %v2760 = vmul.f32 %v2738, %v2743
      %v2761 = vmul.f32 %v2737, %v2747
      %v2762 = vmul.f32 %v2736, %v2751
      %v2763 = vmul.f32 %v2735, %v2755
      %v2764 = vmul.f32 %v2739, %v2759
      %2765 = vrot.lane.b32.xlu0 %v2512, 114
      %v2766 = vpop.permute.xlu0 %2765
      %2767 = vrot.lane.b32.xlu0 %v2513, 114
      %v2768 = vpop.permute.xlu0 %2767
      %2769 = vrot.lane.b32.xlu0 %v2514, 114
      %v2770 = vpop.permute.xlu0 %2769
      %2771 = vrot.lane.b32.xlu0 %v2515, 114
      %v2772 = vpop.permute.xlu0 %2771
      %2773 = vrot.lane.b32.xlu0 %v2516, 114
      %v2774 = vpop.permute.xlu0 %2773
      %vm2775 = vcmp.lt.s32.totalorder %v2528, 114
      %v2776 = vsel %vm2775, %v2772, %v2774
      %v2777 = vsel %vm2775, %v2770, %v2772
      %v2778 = vsel %vm2775, %v2768, %v2770
      %v2779 = vsel %vm2775, %v2766, %v2768
      %v2780 = vsel %vm2775, %v2774, %v2766
      %v2781 = vlaneseq
      %v2782 = vshrl.u32 %v2781, 7
      %v2783 = vsub.s32 7, %v2782
      %v2784 = vrot.slane %v384, %v2783
      %v2785 = vlaneseq
      %v2786 = vshrl.u32 %v2785, 7
      %v2787 = vsub.s32 7, %v2786
      %v2788 = vrot.slane %v385, %v2787
      %v2789 = vlaneseq
      %v2790 = vshrl.u32 %v2789, 7
      %v2791 = vsub.s32 7, %v2790
      %v2792 = vrot.slane %v386, %v2791
      %v2793 = vlaneseq
      %v2794 = vshrl.u32 %v2793, 7
      %v2795 = vsub.s32 7, %v2794
      %v2796 = vrot.slane %v387, %v2795
      %v2797 = vlaneseq
      %v2798 = vshrl.u32 %v2797, 7
      %v2799 = vsub.s32 7, %v2798
      %v2800 = vrot.slane %v388, %v2799
      %v2801 = vmul.f32 %v2779, %v2784
      %v2802 = vmul.f32 %v2778, %v2788
      %v2803 = vmul.f32 %v2777, %v2792
      %v2804 = vmul.f32 %v2776, %v2796
      %v2805 = vmul.f32 %v2780, %v2800
      %2806 = vrot.lane.b32.xlu0 %v2512, 113
      %v2807 = vpop.permute.xlu0 %2806
      %2808 = vrot.lane.b32.xlu0 %v2513, 113
      %v2809 = vpop.permute.xlu0 %2808
      %2810 = vrot.lane.b32.xlu0 %v2514, 113
      %v2811 = vpop.permute.xlu0 %2810
      %2812 = vrot.lane.b32.xlu0 %v2515, 113
      %v2813 = vpop.permute.xlu0 %2812
      %2814 = vrot.lane.b32.xlu0 %v2516, 113
      %v2815 = vpop.permute.xlu0 %2814
      %vm2816 = vcmp.lt.s32.totalorder %v2528, 113
      %v2817 = vsel %vm2816, %v2813, %v2815
      %v2818 = vsel %vm2816, %v2811, %v2813
      %v2819 = vsel %vm2816, %v2809, %v2811
      %v2820 = vsel %vm2816, %v2807, %v2809
      %v2821 = vsel %vm2816, %v2815, %v2807
      %v2822 = vlaneseq
      %v2823 = vshrl.u32 %v2822, 7
      %v2824 = vsub.s32 0, %v2823
      %v2825 = vrot.slane %v389, %v2824
      %v2826 = vlaneseq
      %v2827 = vshrl.u32 %v2826, 7
      %v2828 = vsub.s32 0, %v2827
      %v2829 = vrot.slane %v390, %v2828
      %v2830 = vlaneseq
      %v2831 = vshrl.u32 %v2830, 7
      %v2832 = vsub.s32 0, %v2831
      %v2833 = vrot.slane %v391, %v2832
      %v2834 = vlaneseq
      %v2835 = vshrl.u32 %v2834, 7
      %v2836 = vsub.s32 0, %v2835
      %v2837 = vrot.slane %v392, %v2836
      %v2838 = vlaneseq
      %v2839 = vshrl.u32 %v2838, 7
      %v2840 = vsub.s32 0, %v2839
      %v2841 = vrot.slane %v393, %v2840
      %v2842 = vmul.f32 %v2820, %v2825
      %v2843 = vmul.f32 %v2819, %v2829
      %v2844 = vmul.f32 %v2818, %v2833
      %v2845 = vmul.f32 %v2817, %v2837
      %v2846 = vmul.f32 %v2821, %v2841
      %vm2847 = vcmask 588800
      %v2849 = vsel %vm2847, %v376, 0
      %2851 = vmatprep.subr.mxu0 %v2556
      %2852 = vmatpush1.msra.mxu0 %v2555
      %2853 = vmatprep.subr.mxu0 %v2597
      %2854 = vmatpush1.msra.mxu0 %v2596
      %2855 = vmatprep.subr.mxu0 %v2638
      %2856 = vmatpush1.msra.mxu0 %v2637
      %2857 = vmatprep.subr.mxu0 %v2679
      %2858 = vmatpush1.msra.mxu0 %v2678
      %2859 = vmatprep.subr.mxu0 %v2513
      %2860 = vmatpush1.msra.mxu0 %v2512
      %2861 = vmatprep.subr.mxu0 %v2720
      %2862 = vmatpush1.msra.mxu0 %v2719
      %2863 = vmatprep.subr.mxu0 %v2761
      %2864 = vmatpush1.msra.mxu0 %v2760
      %2865 = vmatprep.subr.mxu0 %v2802
      %2866 = vmatpush1.msra.mxu0 %v2801
      %2867 = vmatprep.subr.mxu0 %v2843
      %2868 = vmatpush1.msra.mxu0 %v2842
      %2869 = vmatprep.subr.mxu0 0.0
      %2870 = vmatpush1.msra.mxu0 0.0
      %2871 = vmatprep.subr.mxu0 0.0
      %2872 = vmatpush1.msra.mxu0 0.0
      %2873 = vmatprep.subr.mxu0 0.0
      %2874 = vmatpush1.msra.mxu0 0.0
      %2875 = vmatprep.subr.mxu0 0.0
      %2876 = vmatpush1.msra.mxu0 0.0
      %2877 = vmatprep.subr.mxu0 0.0
      %2878 = vmatpush1.msra.mxu0 0.0
      %2879 = vmatprep.subr.mxu0 0.0
      %2880 = vmatpush1.msra.mxu0 0.0
      %2881 = vmatprep.subr.mxu0 0.0
      %2882 = vmatpush1.msra.mxu0 0.0
      %2883 = vmatprep.subr.mxu0 0.0
      %2884 = vmatpush1.msra.mxu0 0.0
      %2885 = vmatprep.subr.mxu0 0.0
      %2886 = vmatpush1.msra.mxu0 0.0
      %2887 = vmatprep.subr.mxu0 0.0
      %2888 = vmatpush1.msra.mxu0 0.0
      %2889 = vmatprep.subr.mxu0 0.0
      %2890 = vmatpush1.msra.mxu0 0.0
      %2891 = vmatprep.subr.mxu0 0.0
      %2892 = vmatpush1.msra.mxu0 0.0
      %2893 = vmatprep.subr.mxu0 0.0
      %2894 = vmatpush1.msra.mxu0 0.0
      %2895 = vmatprep.subr.mxu0 0.0
      %2896 = vmatpush1.msra.mxu0 0.0
      %2897 = vmatprep.subr.mxu0 0.0
      %2898 = vmatpush1.msra.mxu0 0.0
      %2899 = vmatprep.subr.mxu0 0.0
      %2900 = vmatpush1.msra.mxu0 0.0
      %2901 = vmatprep.subr.mxu0 0.0
      %2902 = vmatpush1.msra.mxu0 0.0
      %2903 = vmatprep.subr.mxu0 0.0
      %2904 = vmatpush1.msra.mxu0 0.0
      %2905 = vmatprep.subr.mxu0 0.0
      %2906 = vmatpush1.msra.mxu0 0.0
      %2907 = vmatprep.subr.mxu0 0.0
      %2908 = vmatpush1.msra.mxu0 0.0
      %2909 = vmatprep.subr.mxu0 0.0
      %2910 = vmatpush1.msra.mxu0 0.0
      %2911 = vmatprep.subr.mxu0 0.0
      %2912 = vmatpush1.msra.mxu0 0.0
      %2913 = vmatprep.subr.mxu0 0.0
      %2914 = vmatpush1.msra.mxu0 0.0
      %2915 = vmatprep.mubr.f32.mxu0 0.0
      %2916 = vmatmul.mubr.f32.gmra.mrb[0].mxu0 %v2849
      %v2917 = vpop.f32.mrb[0].mxu0
      %v2918 = vadd.f32 0.0, %v2917
      %v2919 = vpop.f32.mrb[0].mxu0
      %v2920 = vadd.f32 0.0, %v2919
      %2921 = vdwg.mxu0
      %2922 = vmatprep.subr.mxu0 %v2558
      %2923 = vmatpush1.msra.mxu0 %v2557
      %2924 = vmatprep.subr.mxu0 %v2599
      %2925 = vmatpush1.msra.mxu0 %v2598
      %2926 = vmatprep.subr.mxu0 %v2640
      %2927 = vmatpush1.msra.mxu0 %v2639
      %2928 = vmatprep.subr.mxu0 %v2681
      %2929 = vmatpush1.msra.mxu0 %v2680
      %2930 = vmatprep.subr.mxu0 %v2515
      %2931 = vmatpush1.msra.mxu0 %v2514
      %2932 = vmatprep.subr.mxu0 %v2722
      %2933 = vmatpush1.msra.mxu0 %v2721
      %2934 = vmatprep.subr.mxu0 %v2763
      %2935 = vmatpush1.msra.mxu0 %v2762
      %2936 = vmatprep.subr.mxu0 %v2804
      %2937 = vmatpush1.msra.mxu0 %v2803
      %2938 = vmatprep.subr.mxu0 %v2845
      %2939 = vmatpush1.msra.mxu0 %v2844
      %2940 = vmatprep.subr.mxu0 0.0
      %2941 = vmatpush1.msra.mxu0 0.0
      %2942 = vmatprep.subr.mxu0 0.0
      %2943 = vmatpush1.msra.mxu0 0.0
      %2944 = vmatprep.subr.mxu0 0.0
      %2945 = vmatpush1.msra.mxu0 0.0
      %2946 = vmatprep.subr.mxu0 0.0
      %2947 = vmatpush1.msra.mxu0 0.0
      %2948 = vmatprep.subr.mxu0 0.0
      %2949 = vmatpush1.msra.mxu0 0.0
      %2950 = vmatprep.subr.mxu0 0.0
      %2951 = vmatpush1.msra.mxu0 0.0
      %2952 = vmatprep.subr.mxu0 0.0
      %2953 = vmatpush1.msra.mxu0 0.0
      %2954 = vmatprep.subr.mxu0 0.0
      %2955 = vmatpush1.msra.mxu0 0.0
      %2956 = vmatprep.subr.mxu0 0.0
      %2957 = vmatpush1.msra.mxu0 0.0
      %2958 = vmatprep.subr.mxu0 0.0
      %2959 = vmatpush1.msra.mxu0 0.0
      %2960 = vmatprep.subr.mxu0 0.0
      %2961 = vmatpush1.msra.mxu0 0.0
      %2962 = vmatprep.subr.mxu0 0.0
      %2963 = vmatpush1.msra.mxu0 0.0
      %2964 = vmatprep.subr.mxu0 0.0
      %2965 = vmatpush1.msra.mxu0 0.0
      %2966 = vmatprep.subr.mxu0 0.0
      %2967 = vmatpush1.msra.mxu0 0.0
      %2968 = vmatprep.subr.mxu0 0.0
      %2969 = vmatpush1.msra.mxu0 0.0
      %2970 = vmatprep.subr.mxu0 0.0
      %2971 = vmatpush1.msra.mxu0 0.0
      %2972 = vmatprep.subr.mxu0 0.0
      %2973 = vmatpush1.msra.mxu0 0.0
      %2974 = vmatprep.subr.mxu0 0.0
      %2975 = vmatpush1.msra.mxu0 0.0
      %2976 = vmatprep.subr.mxu0 0.0
      %2977 = vmatpush1.msra.mxu0 0.0
      %2978 = vmatprep.subr.mxu0 0.0
      %2979 = vmatpush1.msra.mxu0 0.0
      %2980 = vmatprep.subr.mxu0 0.0
      %2981 = vmatpush1.msra.mxu0 0.0
      %2982 = vmatprep.subr.mxu0 0.0
      %2983 = vmatpush1.msra.mxu0 0.0
      %2984 = vmatprep.subr.mxu0 0.0
      %2985 = vmatpush1.msra.mxu0 0.0
      %2986 = vmatprep.mubr.f32.mxu0 0.0
      %2987 = vmatmul.mubr.f32.gmra.mrb[0].mxu0 %v2849
      %v2988 = vpop.f32.mrb[0].mxu0
      %v2989 = vadd.f32 0.0, %v2988
      %v2990 = vpop.f32.mrb[0].mxu0
      %v2991 = vadd.f32 0.0, %v2990
      %2992 = vdwg.mxu0
      %2993 = vmatprep.subr.mxu0 0.0
      %2994 = vmatpush1.msra.mxu0 %v2559
      %2995 = vmatprep.subr.mxu0 0.0
      %2996 = vmatpush1.msra.mxu0 %v2600
      %2997 = vmatprep.subr.mxu0 0.0
      %2998 = vmatpush1.msra.mxu0 %v2641
      %2999 = vmatprep.subr.mxu0 0.0
      %3000 = vmatpush1.msra.mxu0 %v2682
      %3001 = vmatprep.subr.mxu0 0.0
      %3002 = vmatpush1.msra.mxu0 %v2516
      %3003 = vmatprep.subr.mxu0 0.0
      %3004 = vmatpush1.msra.mxu0 %v2723
      %3005 = vmatprep.subr.mxu0 0.0
      %3006 = vmatpush1.msra.mxu0 %v2764
      %3007 = vmatprep.subr.mxu0 0.0
      %3008 = vmatpush1.msra.mxu0 %v2805
      %3009 = vmatprep.subr.mxu0 0.0
      %3010 = vmatpush1.msra.mxu0 %v2846
      %3011 = vmatprep.subr.mxu0 0.0
      %3012 = vmatpush1.msra.mxu0 0.0
      %3013 = vmatprep.subr.mxu0 0.0
      %3014 = vmatpush1.msra.mxu0 0.0
      %3015 = vmatprep.subr.mxu0 0.0
      %3016 = vmatpush1.msra.mxu0 0.0
      %3017 = vmatprep.subr.mxu0 0.0
      %3018 = vmatpush1.msra.mxu0 0.0
      %3019 = vmatprep.subr.mxu0 0.0
      %3020 = vmatpush1.msra.mxu0 0.0
      %3021 = vmatprep.subr.mxu0 0.0
      %3022 = vmatpush1.msra.mxu0 0.0
      %3023 = vmatprep.subr.mxu0 0.0
      %3024 = vmatpush1.msra.mxu0 0.0
      %3025 = vmatprep.subr.mxu0 0.0
      %3026 = vmatpush1.msra.mxu0 0.0
      %3027 = vmatprep.subr.mxu0 0.0
      %3028 = vmatpush1.msra.mxu0 0.0
      %3029 = vmatprep.subr.mxu0 0.0
      %3030 = vmatpush1.msra.mxu0 0.0
      %3031 = vmatprep.subr.mxu0 0.0
      %3032 = vmatpush1.msra.mxu0 0.0
      %3033 = vmatprep.subr.mxu0 0.0
      %3034 = vmatpush1.msra.mxu0 0.0
      %3035 = vmatprep.subr.mxu0 0.0
      %3036 = vmatpush1.msra.mxu0 0.0
      %3037 = vmatprep.subr.mxu0 0.0
      %3038 = vmatpush1.msra.mxu0 0.0
      %3039 = vmatprep.subr.mxu0 0.0
      %3040 = vmatpush1.msra.mxu0 0.0
      %3041 = vmatprep.subr.mxu0 0.0
      %3042 = vmatpush1.msra.mxu0 0.0
      %3043 = vmatprep.subr.mxu0 0.0
      %3044 = vmatpush1.msra.mxu0 0.0
      %3045 = vmatprep.subr.mxu0 0.0
      %3046 = vmatpush1.msra.mxu0 0.0
      %3047 = vmatprep.subr.mxu0 0.0
      %3048 = vmatpush1.msra.mxu0 0.0
      %3049 = vmatprep.subr.mxu0 0.0
      %3050 = vmatpush1.msra.mxu0 0.0
      %3051 = vmatprep.subr.mxu0 0.0
      %3052 = vmatpush1.msra.mxu0 0.0
      %3053 = vmatprep.subr.mxu0 0.0
      %3054 = vmatpush1.msra.mxu0 0.0
      %3055 = vmatprep.subr.mxu0 0.0
      %3056 = vmatpush1.msra.mxu0 0.0
      %3057 = vmatprep.mubr.f32.mxu0 0.0
      %3058 = vmatmul.mubr.f32.gmra.mrb[0].mxu0 %v2849
      %v3059 = vpop.f32.mrb[0].mxu0
      %v3060 = vadd.f32 0.0, %v3059
      %v3061 = vpop.f32.mrb[0].mxu0
      %3062 = vdwg.mxu0
      %v3063 = vmul.f32 %v2918, 1.702
      %v3064 = vmul.f32 %v2920, 1.702
      %v3065 = vmul.f32 %v2989, 1.702
      %v3066 = vmul.f32 %v2991, 1.702
      %v3067 = vmul.f32 %v3060, 1.702
      %v3068 = vxor.u32 %v3063, 2147483648
      %v3069 = vxor.u32 %v3064, 2147483648
      %v3070 = vxor.u32 %v3065, 2147483648
      %v3071 = vxor.u32 %v3066, 2147483648
      %v3072 = vxor.u32 %v3067, 2147483648
      %v3073 = vmul.f32 %v3068, 1.442695
      %v3074 = vpow.pop %v3073
      %v3075 = vmul.f32 %v3069, 1.442695
      %v3076 = vpow.pop %v3075
      %v3077 = vmul.f32 %v3070, 1.442695
      %v3078 = vpow.pop %v3077
      %v3079 = vmul.f32 %v3071, 1.442695
      %v3080 = vpow.pop %v3079
      %v3081 = vmul.f32 %v3072, 1.442695
      %v3082 = vpow.pop %v3081
      %v3083 = vadd.f32 %v3074, 1.0
      %v3084 = vadd.f32 %v3076, 1.0
      %v3085 = vadd.f32 %v3078, 1.0
      %v3086 = vadd.f32 %v3080, 1.0
      %v3087 = vadd.f32 %v3082, 1.0
      %v3088 = vrcp.pop %v3083
      %v3089 = vmul.f32 1.0, %v3088
      %v3090 = vrcp.pop %v3084
      %v3091 = vmul.f32 1.0, %v3090
      %v3092 = vrcp.pop %v3085
      %v3093 = vmul.f32 1.0, %v3092
      %v3094 = vrcp.pop %v3086
      %v3095 = vmul.f32 1.0, %v3094
      %v3096 = vrcp.pop %v3087
      %v3097 = vmul.f32 1.0, %v3096
      %v3098 = vmul.f32 %v2918, %v3089
      %v3099 = vmul.f32 %v2920, %v3091
      %v3100 = vmul.f32 %v2989, %v3093
      %v3101 = vmul.f32 %v2991, %v3095
      %v3102 = vmul.f32 %v3060, %v3097
      %3106 = vrot.lane.b32.xlu0 %v3099, 60
      %v3107 = vpop.permute.xlu0 %3106
      %3108 = vrot.lane.b32.xlu0 %v3100, 60
      %v3109 = vpop.permute.xlu0 %3108
      %3110 = vrot.lane.b32.xlu0 %v3101, 60
      %v3111 = vpop.permute.xlu0 %3110
      %vm3112 = vcmask 490496
      %v3113 = vsel %vm3112, %v3107, %v3109
      %v3114 = vsel %vm3112, %v3109, %v3111
      %v3117 = vadd.f32 %v3098, %v3113
      %v3118 = vadd.f32 %v3099, %v3114
      %3120 = vrot.lane.b32.xlu0 %v3101, 120
      %v3121 = vpop.permute.xlu0 %3120
      %3122 = vrot.lane.b32.xlu0 %v3102, 120
      %v3123 = vpop.permute.xlu0 %3122
      %vm3124 = vcmask 982016
      %v3125 = vsel %vm3124, %v3121, %v3123
      %v3128 = vadd.f32 %v3117, %v3125
      %v3129 = vadd.f32 %v3118, %v3123
      %vm3130 = vcmask 7168
      %3131 = vst.msk [vmem:[#allocation3] sm:$0xff] %vm3130, %v3098
      %vm3132 = vcmask 1047560
      %3133 = vst.msk [vmem:[#allocation3] sm:$0xff] %vm3132, %v3128
      %vm3134 = vcmask 564224
      %3135 = vst.msk [vmem:[#allocation3 + $0x8] sm:$0xff] %vm3134, %v3129
      %v3136 = vld [vmem:[#allocation3] sm:$0xff]
      %v3137 = vld [vmem:[#allocation3 + $0x8] sm:$0xff]
      %3138 = vxpose.xlu0.b32.start [1/16] %v3136, 128
      %3139 = vxpose.xlu0.b32.cont [2/16] 0.0, 128
      %3140 = vxpose.xlu0.b32.cont [3/16] 0.0, 128
      %3141 = vxpose.xlu0.b32.cont [4/16] 0.0, 128
      %3142 = vxpose.xlu0.b32.cont [5/16] 0.0, 128
      %3143 = vxpose.xlu0.b32.cont [6/16] 0.0, 128
      %3144 = vxpose.xlu0.b32.cont [7/16] 0.0, 128
      %3145 = vxpose.xlu0.b32.cont [8/16] 0.0, 128
      %3146 = vxpose.xlu0.b32.cont [9/16] 0.0, 128
      %3147 = vxpose.xlu0.b32.cont [10/16] 0.0, 128
      %3148 = vxpose.xlu0.b32.cont [11/16] 0.0, 128
      %3149 = vxpose.xlu0.b32.cont [12/16] 0.0, 128
      %3150 = vxpose.xlu0.b32.cont [13/16] 0.0, 128
      %3151 = vxpose.xlu0.b32.cont [14/16] 0.0, 128
      %3152 = vxpose.xlu0.b32.cont [15/16] 0.0, 128
      %3153 = vxpose.xlu0.b32.end [16/16] 0.0, 128
      %v3154 = vpop.trf.xlu0
      %v3155 = vpop.trf.xlu0
      %v3156 = vpop.trf.xlu0
      %v3157 = vpop.trf.xlu0
      %v3158 = vpop.trf.xlu0
      %v3159 = vpop.trf.xlu0
      %v3160 = vpop.trf.xlu0
      %v3161 = vpop.trf.xlu0
      %v3162 = vpop.trf.xlu0
      %v3163 = vpop.trf.xlu0
      %v3164 = vpop.trf.xlu0
      %v3165 = vpop.trf.xlu0
      %v3166 = vpop.trf.xlu0
      %v3167 = vpop.trf.xlu0
      %v3168 = vpop.trf.xlu0
      %v3169 = vpop.trf.xlu0
      %3170 = vxpose.xlu0.b32.start [1/16] %v3137, 128
      %3171 = vxpose.xlu0.b32.cont [2/16] 0.0, 128
      %3172 = vxpose.xlu0.b32.cont [3/16] 0.0, 128
      %3173 = vxpose.xlu0.b32.cont [4/16] 0.0, 128
      %3174 = vxpose.xlu0.b32.cont [5/16] 0.0, 128
      %3175 = vxpose.xlu0.b32.cont [6/16] 0.0, 128
      %3176 = vxpose.xlu0.b32.cont [7/16] 0.0, 128
      %3177 = vxpose.xlu0.b32.cont [8/16] 0.0, 128
      %3178 = vxpose.xlu0.b32.cont [9/16] 0.0, 128
      %3179 = vxpose.xlu0.b32.cont [10/16] 0.0, 128
      %3180 = vxpose.xlu0.b32.cont [11/16] 0.0, 128
      %3181 = vxpose.xlu0.b32.cont [12/16] 0.0, 128
      %3182 = vxpose.xlu0.b32.cont [13/16] 0.0, 128
      %3183 = vxpose.xlu0.b32.cont [14/16] 0.0, 128
      %3184 = vxpose.xlu0.b32.cont [15/16] 0.0, 128
      %3185 = vxpose.xlu0.b32.end [16/16] 0.0, 128
      %v3186 = vpop.trf.xlu0
      %v3187 = vpop.trf.xlu0
      %v3188 = vpop.trf.xlu0
      %v3189 = vpop.trf.xlu0
      %v3190 = vpop.trf.xlu0
      %v3191 = vpop.trf.xlu0
      %v3192 = vpop.trf.xlu0
      %v3193 = vpop.trf.xlu0
      %v3194 = vpop.trf.xlu0
      %v3195 = vpop.trf.xlu0
      %v3196 = vpop.trf.xlu0
      %v3197 = vpop.trf.xlu0
      %v3198 = vpop.trf.xlu0
      %v3199 = vpop.trf.xlu0
      %v3200 = vpop.trf.xlu0
      %v3201 = vpop.trf.xlu0
      %v3203 = vsel %vm394, %v3154, 0
      %v3206 = vsel %vm394, %v3155, 0
      %v3209 = vsel %vm394, %v3156, 0
      %v3212 = vsel %vm394, %v3157, 0
      %v3215 = vsel %vm394, %v3158, 0
      %v3218 = vsel %vm394, %v3159, 0
      %v3221 = vsel %vm394, %v3160, 0
      %v3224 = vsel %vm394, %v3161, 0
      %v3227 = vsel %vm394, %v3162, 0
      %v3230 = vsel %vm394, %v3163, 0
      %v3233 = vsel %vm394, %v3164, 0
      %v3236 = vsel %vm394, %v3165, 0
      %v3239 = vsel %vm394, %v3166, 0
      %v3242 = vsel %vm394, %v3167, 0
      %v3245 = vsel %vm394, %v3168, 0
      %v3248 = vsel %vm394, %v3169, 0
      %v3251 = vsel %vm394, %v3186, 0
      %v3254 = vsel %vm394, %v3187, 0
      %v3257 = vsel %vm394, %v3188, 0
      %v3260 = vsel %vm394, %v3189, 0
      %v3263 = vsel %vm394, %v3190, 0
      %v3266 = vsel %vm394, %v3191, 0
      %v3269 = vsel %vm394, %v3192, 0
      %v3272 = vsel %vm394, %v3193, 0
      %v3275 = vsel %vm394, %v3194, 0
      %3277 = vmatprep.subr.mxu0 %v378
      %3278 = vmatpush1.msra.mxu0 %v377
      %3279 = vmatprep.subr.mxu0 0.0
      %3280 = vmatpush1.msra.mxu0 0.0
      %3281 = vmatprep.subr.mxu0 0.0
      %3282 = vmatpush1.msra.mxu0 0.0
      %3283 = vmatprep.subr.mxu0 0.0
      %3284 = vmatpush1.msra.mxu0 0.0
      %3285 = vmatprep.subr.mxu0 0.0
      %3286 = vmatpush1.msra.mxu0 0.0
      %3287 = vmatprep.subr.mxu0 0.0
      %3288 = vmatpush1.msra.mxu0 0.0
      %3289 = vmatprep.subr.mxu0 0.0
      %3290 = vmatpush1.msra.mxu0 0.0
      %3291 = vmatprep.subr.mxu0 0.0
      %3292 = vmatpush1.msra.mxu0 0.0
      %3293 = vmatprep.subr.mxu0 0.0
      %3294 = vmatpush1.msra.mxu0 0.0
      %3295 = vmatprep.subr.mxu0 0.0
      %3296 = vmatpush1.msra.mxu0 0.0
      %3297 = vmatprep.subr.mxu0 0.0
      %3298 = vmatpush1.msra.mxu0 0.0
      %3299 = vmatprep.subr.mxu0 0.0
      %3300 = vmatpush1.msra.mxu0 0.0
      %3301 = vmatprep.subr.mxu0 0.0
      %3302 = vmatpush1.msra.mxu0 0.0
      %3303 = vmatprep.subr.mxu0 0.0
      %3304 = vmatpush1.msra.mxu0 0.0
      %3305 = vmatprep.subr.mxu0 0.0
      %3306 = vmatpush1.msra.mxu0 0.0
      %3307 = vmatprep.subr.mxu0 0.0
      %3308 = vmatpush1.msra.mxu0 0.0
      %3309 = vmatprep.subr.mxu0 0.0
      %3310 = vmatpush1.msra.mxu0 0.0
      %3311 = vmatprep.subr.mxu0 0.0
      %3312 = vmatpush1.msra.mxu0 0.0
      %3313 = vmatprep.subr.mxu0 0.0
      %3314 = vmatpush1.msra.mxu0 0.0
      %3315 = vmatprep.subr.mxu0 0.0
      %3316 = vmatpush1.msra.mxu0 0.0
      %3317 = vmatprep.subr.mxu0 0.0
      %3318 = vmatpush1.msra.mxu0 0.0
      %3319 = vmatprep.subr.mxu0 0.0
      %3320 = vmatpush1.msra.mxu0 0.0
      %3321 = vmatprep.subr.mxu0 0.0
      %3322 = vmatpush1.msra.mxu0 0.0
      %3323 = vmatprep.subr.mxu0 0.0
      %3324 = vmatpush1.msra.mxu0 0.0
      %3325 = vmatprep.subr.mxu0 0.0
      %3326 = vmatpush1.msra.mxu0 0.0
      %3327 = vmatprep.subr.mxu0 0.0
      %3328 = vmatpush1.msra.mxu0 0.0
      %3329 = vmatprep.subr.mxu0 0.0
      %3330 = vmatpush1.msra.mxu0 0.0
      %3331 = vmatprep.subr.mxu0 0.0
      %3332 = vmatpush1.msra.mxu0 0.0
      %3333 = vmatprep.subr.mxu0 0.0
      %3334 = vmatpush1.msra.mxu0 0.0
      %3335 = vmatprep.subr.mxu0 0.0
      %3336 = vmatpush1.msra.mxu0 0.0
      %3337 = vmatprep.subr.mxu0 0.0
      %3338 = vmatpush1.msra.mxu0 0.0
      %3339 = vmatprep.subr.mxu0 0.0
      %3340 = vmatpush1.msra.mxu0 0.0
      %3341 = vmatprep.mubr.f32.mxu0 0.0
      %3342 = vmatmul.mubr.f32.gmra.mrb[0].mxu0 %v3203
      %v3343 = vpop.f32.mrb[0].mxu0
      %v3344 = vadd.f32 0.0, %v3343
      %v3345 = vpop.f32.mrb[0].mxu0
      %v3346 = vadd.f32 0.0, %v3345
      %3347 = vmatprep.mubr.f32.mxu0 0.0
      %3348 = vmatmul.mubr.f32.gmra.mrb[0].mxu0 %v3206
      %v3349 = vpop.f32.mrb[0].mxu0
      %v3350 = vadd.f32 0.0, %v3349
      %v3351 = vpop.f32.mrb[0].mxu0
      %v3352 = vadd.f32 0.0, %v3351
      %3353 = vmatprep.mubr.f32.mxu0 0.0
      %3354 = vmatmul.mubr.f32.gmra.mrb[0].mxu0 %v3209
      %v3355 = vpop.f32.mrb[0].mxu0
      %v3356 = vadd.f32 0.0, %v3355
      %v3357 = vpop.f32.mrb[0].mxu0
      %v3358 = vadd.f32 0.0, %v3357
      %3359 = vmatprep.mubr.f32.mxu0 0.0
      %3360 = vmatmul.mubr.f32.gmra.mrb[0].mxu0 %v3212
      %v3361 = vpop.f32.mrb[0].mxu0
      %v3362 = vadd.f32 0.0, %v3361
      %v3363 = vpop.f32.mrb[0].mxu0
      %v3364 = vadd.f32 0.0, %v3363
      %3365 = vmatprep.mubr.f32.mxu0 0.0
      %3366 = vmatmul.mubr.f32.gmra.mrb[0].mxu0 %v3215
      %v3367 = vpop.f32.mrb[0].mxu0
      %v3368 = vadd.f32 0.0, %v3367
      %v3369 = vpop.f32.mrb[0].mxu0
      %v3370 = vadd.f32 0.0, %v3369
      %3371 = vmatprep.mubr.f32.mxu0 0.0
      %3372 = vmatmul.mubr.f32.gmra.mrb[0].mxu0 %v3218
      %v3373 = vpop.f32.mrb[0].mxu0
      %v3374 = vadd.f32 0.0, %v3373
      %v3375 = vpop.f32.mrb[0].mxu0
      %v3376 = vadd.f32 0.0, %v3375
      %3377 = vmatprep.mubr.f32.mxu0 0.0
      %3378 = vmatmul.mubr.f32.gmra.mrb[0].mxu0 %v3221
      %v3379 = vpop.f32.mrb[0].mxu0
      %v3380 = vadd.f32 0.0, %v3379
      %v3381 = vpop.f32.mrb[0].mxu0
      %v3382 = vadd.f32 0.0, %v3381
      %3383 = vmatprep.mubr.f32.mxu0 0.0
      %3384 = vmatmul.mubr.f32.gmra.mrb[0].mxu0 %v3224
      %v3385 = vpop.f32.mrb[0].mxu0
      %v3386 = vadd.f32 0.0, %v3385
      %v3387 = vpop.f32.mrb[0].mxu0
      %v3388 = vadd.f32 0.0, %v3387
      %3389 = vmatprep.mubr.f32.mxu0 0.0
      %3390 = vmatmul.mubr.f32.gmra.mrb[0].mxu0 %v3227
      %v3391 = vpop.f32.mrb[0].mxu0
      %v3392 = vadd.f32 0.0, %v3391
      %v3393 = vpop.f32.mrb[0].mxu0
      %v3394 = vadd.f32 0.0, %v3393
      %3395 = vmatprep.mubr.f32.mxu0 0.0
      %3396 = vmatmul.mubr.f32.gmra.mrb[0].mxu0 %v3230
      %v3397 = vpop.f32.mrb[0].mxu0
      %v3398 = vadd.f32 0.0, %v3397
      %v3399 = vpop.f32.mrb[0].mxu0
      %v3400 = vadd.f32 0.0, %v3399
      %3401 = vmatprep.mubr.f32.mxu0 0.0
      %3402 = vmatmul.mubr.f32.gmra.mrb[0].mxu0 %v3233
      %v3403 = vpop.f32.mrb[0].mxu0
      %v3404 = vadd.f32 0.0, %v3403
      %v3405 = vpop.f32.mrb[0].mxu0
      %v3406 = vadd.f32 0.0, %v3405
      %3407 = vmatprep.mubr.f32.mxu0 0.0
      %3408 = vmatmul.mubr.f32.gmra.mrb[0].mxu0 %v3236
      %v3409 = vpop.f32.mrb[0].mxu0
      %v3410 = vadd.f32 0.0, %v3409
      %v3411 = vpop.f32.mrb[0].mxu0
      %v3412 = vadd.f32 0.0, %v3411
      %3413 = vmatprep.mubr.f32.mxu0 0.0
      %3414 = vmatmul.mubr.f32.gmra.mrb[0].mxu0 %v3239
      %v3415 = vpop.f32.mrb[0].mxu0
      %v3416 = vadd.f32 0.0, %v3415
      %v3417 = vpop.f32.mrb[0].mxu0
      %v3418 = vadd.f32 0.0, %v3417
      %3419 = vmatprep.mubr.f32.mxu0 0.0
      %3420 = vmatmul.mubr.f32.gmra.mrb[0].mxu0 %v3242
      %v3421 = vpop.f32.mrb[0].mxu0
      %v3422 = vadd.f32 0.0, %v3421
      %v3423 = vpop.f32.mrb[0].mxu0
      %v3424 = vadd.f32 0.0, %v3423
      %3425 = vmatprep.mubr.f32.mxu0 0.0
      %3426 = vmatmul.mubr.f32.gmra.mrb[0].mxu0 %v3245
      %v3427 = vpop.f32.mrb[0].mxu0
      %v3428 = vadd.f32 0.0, %v3427
      %v3429 = vpop.f32.mrb[0].mxu0
      %v3430 = vadd.f32 0.0, %v3429
      %3431 = vmatprep.mubr.f32.mxu0 0.0
      %3432 = vmatmul.mubr.f32.gmra.mrb[0].mxu0 %v3248
      %v3433 = vpop.f32.mrb[0].mxu0
      %v3434 = vadd.f32 0.0, %v3433
      %v3435 = vpop.f32.mrb[0].mxu0
      %v3436 = vadd.f32 0.0, %v3435
      %3437 = vmatprep.mubr.f32.mxu0 0.0
      %3438 = vmatmul.mubr.f32.gmra.mrb[0].mxu0 %v3251
      %v3439 = vpop.f32.mrb[0].mxu0
      %v3440 = vadd.f32 0.0, %v3439
      %v3441 = vpop.f32.mrb[0].mxu0
      %v3442 = vadd.f32 0.0, %v3441
      %3443 = vmatprep.mubr.f32.mxu0 0.0
      %3444 = vmatmul.mubr.f32.gmra.mrb[0].mxu0 %v3254
      %v3445 = vpop.f32.mrb[0].mxu0
      %v3446 = vadd.f32 0.0, %v3445
      %v3447 = vpop.f32.mrb[0].mxu0
      %v3448 = vadd.f32 0.0, %v3447
      %3449 = vmatprep.mubr.f32.mxu0 0.0
      %3450 = vmatmul.mubr.f32.gmra.mrb[0].mxu0 %v3257
      %v3451 = vpop.f32.mrb[0].mxu0
      %v3452 = vadd.f32 0.0, %v3451
      %v3453 = vpop.f32.mrb[0].mxu0
      %v3454 = vadd.f32 0.0, %v3453
      %3455 = vmatprep.mubr.f32.mxu0 0.0
      %3456 = vmatmul.mubr.f32.gmra.mrb[0].mxu0 %v3260
      %v3457 = vpop.f32.mrb[0].mxu0
      %v3458 = vadd.f32 0.0, %v3457
      %v3459 = vpop.f32.mrb[0].mxu0
      %v3460 = vadd.f32 0.0, %v3459
      %3461 = vmatprep.mubr.f32.mxu0 0.0
      %3462 = vmatmul.mubr.f32.gmra.mrb[0].mxu0 %v3263
      %v3463 = vpop.f32.mrb[0].mxu0
      %v3464 = vadd.f32 0.0, %v3463
      %v3465 = vpop.f32.mrb[0].mxu0
      %v3466 = vadd.f32 0.0, %v3465
      %3467 = vmatprep.mubr.f32.mxu0 0.0
      %3468 = vmatmul.mubr.f32.gmra.mrb[0].mxu0 %v3266
      %v3469 = vpop.f32.mrb[0].mxu0
      %v3470 = vadd.f32 0.0, %v3469
      %v3471 = vpop.f32.mrb[0].mxu0
      %v3472 = vadd.f32 0.0, %v3471
      %3473 = vmatprep.mubr.f32.mxu0 0.0
      %3474 = vmatmul.mubr.f32.gmra.mrb[0].mxu0 %v3269
      %v3475 = vpop.f32.mrb[0].mxu0
      %v3476 = vadd.f32 0.0, %v3475
      %v3477 = vpop.f32.mrb[0].mxu0
      %v3478 = vadd.f32 0.0, %v3477
      %3479 = vmatprep.mubr.f32.mxu0 0.0
      %3480 = vmatmul.mubr.f32.gmra.mrb[0].mxu0 %v3272
      %v3481 = vpop.f32.mrb[0].mxu0
      %v3482 = vadd.f32 0.0, %v3481
      %v3483 = vpop.f32.mrb[0].mxu0
      %v3484 = vadd.f32 0.0, %v3483
      %3485 = vmatprep.mubr.f32.mxu0 0.0
      %3486 = vmatmul.mubr.f32.gmra.mrb[0].mxu0 %v3275
      %v3487 = vpop.f32.mrb[0].mxu0
      %v3488 = vadd.f32 0.0, %v3487
      %v3489 = vpop.f32.mrb[0].mxu0
      %v3490 = vadd.f32 0.0, %v3489
      %3491 = vdwg.mxu0
      %3492 = vmatprep.subr.mxu0 %v380
      %3493 = vmatpush1.msra.mxu0 %v379
      %3494 = vmatprep.subr.mxu0 0.0
      %3495 = vmatpush1.msra.mxu0 0.0
      %3496 = vmatprep.subr.mxu0 0.0
      %3497 = vmatpush1.msra.mxu0 0.0
      %3498 = vmatprep.subr.mxu0 0.0
      %3499 = vmatpush1.msra.mxu0 0.0
      %3500 = vmatprep.subr.mxu0 0.0
      %3501 = vmatpush1.msra.mxu0 0.0
      %3502 = vmatprep.subr.mxu0 0.0
      %3503 = vmatpush1.msra.mxu0 0.0
      %3504 = vmatprep.subr.mxu0 0.0
      %3505 = vmatpush1.msra.mxu0 0.0
      %3506 = vmatprep.subr.mxu0 0.0
      %3507 = vmatpush1.msra.mxu0 0.0
      %3508 = vmatprep.subr.mxu0 0.0
      %3509 = vmatpush1.msra.mxu0 0.0
      %3510 = vmatprep.subr.mxu0 0.0
      %3511 = vmatpush1.msra.mxu0 0.0
      %3512 = vmatprep.subr.mxu0 0.0
      %3513 = vmatpush1.msra.mxu0 0.0
      %3514 = vmatprep.subr.mxu0 0.0
      %3515 = vmatpush1.msra.mxu0 0.0
      %3516 = vmatprep.subr.mxu0 0.0
      %3517 = vmatpush1.msra.mxu0 0.0
      %3518 = vmatprep.subr.mxu0 0.0
      %3519 = vmatpush1.msra.mxu0 0.0
      %3520 = vmatprep.subr.mxu0 0.0
      %3521 = vmatpush1.msra.mxu0 0.0
      %3522 = vmatprep.subr.mxu0 0.0
      %3523 = vmatpush1.msra.mxu0 0.0
      %3524 = vmatprep.subr.mxu0 0.0
      %3525 = vmatpush1.msra.mxu0 0.0
      %3526 = vmatprep.subr.mxu0 0.0
      %3527 = vmatpush1.msra.mxu0 0.0
      %3528 = vmatprep.subr.mxu0 0.0
      %3529 = vmatpush1.msra.mxu0 0.0
      %3530 = vmatprep.subr.mxu0 0.0
      %3531 = vmatpush1.msra.mxu0 0.0
      %3532 = vmatprep.subr.mxu0 0.0
      %3533 = vmatpush1.msra.mxu0 0.0
      %3534 = vmatprep.subr.mxu0 0.0
      %3535 = vmatpush1.msra.mxu0 0.0
      %3536 = vmatprep.subr.mxu0 0.0
      %3537 = vmatpush1.msra.mxu0 0.0
      %3538 = vmatprep.subr.mxu0 0.0
      %3539 = vmatpush1.msra.mxu0 0.0
      %3540 = vmatprep.subr.mxu0 0.0
      %3541 = vmatpush1.msra.mxu0 0.0
      %3542 = vmatprep.subr.mxu0 0.0
      %3543 = vmatpush1.msra.mxu0 0.0
      %3544 = vmatprep.subr.mxu0 0.0
      %3545 = vmatpush1.msra.mxu0 0.0
      %3546 = vmatprep.subr.mxu0 0.0
      %3547 = vmatpush1.msra.mxu0 0.0
      %3548 = vmatprep.subr.mxu0 0.0
      %3549 = vmatpush1.msra.mxu0 0.0
      %3550 = vmatprep.subr.mxu0 0.0
      %3551 = vmatpush1.msra.mxu0 0.0
      %3552 = vmatprep.subr.mxu0 0.0
      %3553 = vmatpush1.msra.mxu0 0.0
      %3554 = vmatprep.subr.mxu0 0.0
      %3555 = vmatpush1.msra.mxu0 0.0
      %3556 = vmatprep.mubr.f32.mxu0 0.0
      %3557 = vmatmul.mubr.f32.gmra.mrb[0].mxu0 %v3203
      %v3558 = vpop.f32.mrb[0].mxu0
      %v3559 = vadd.f32 0.0, %v3558
      %v3560 = vpop.f32.mrb[0].mxu0
      %v3561 = vadd.f32 0.0, %v3560
      %3562 = vmatprep.mubr.f32.mxu0 0.0
      %3563 = vmatmul.mubr.f32.gmra.mrb[0].mxu0 %v3206
      %v3564 = vpop.f32.mrb[0].mxu0
      %v3565 = vadd.f32 0.0, %v3564
      %v3566 = vpop.f32.mrb[0].mxu0
      %v3567 = vadd.f32 0.0, %v3566
      %3568 = vmatprep.mubr.f32.mxu0 0.0
      %3569 = vmatmul.mubr.f32.gmra.mrb[0].mxu0 %v3209
      %v3570 = vpop.f32.mrb[0].mxu0
      %v3571 = vadd.f32 0.0, %v3570
      %v3572 = vpop.f32.mrb[0].mxu0
      %v3573 = vadd.f32 0.0, %v3572
      %3574 = vmatprep.mubr.f32.mxu0 0.0
      %3575 = vmatmul.mubr.f32.gmra.mrb[0].mxu0 %v3212
      %v3576 = vpop.f32.mrb[0].mxu0
      %v3577 = vadd.f32 0.0, %v3576
      %v3578 = vpop.f32.mrb[0].mxu0
      %v3579 = vadd.f32 0.0, %v3578
      %3580 = vmatprep.mubr.f32.mxu0 0.0
      %3581 = vmatmul.mubr.f32.gmra.mrb[0].mxu0 %v3215
      %v3582 = vpop.f32.mrb[0].mxu0
      %v3583 = vadd.f32 0.0, %v3582
      %v3584 = vpop.f32.mrb[0].mxu0
      %v3585 = vadd.f32 0.0, %v3584
      %3586 = vmatprep.mubr.f32.mxu0 0.0
      %3587 = vmatmul.mubr.f32.gmra.mrb[0].mxu0 %v3218
      %v3588 = vpop.f32.mrb[0].mxu0
      %v3589 = vadd.f32 0.0, %v3588
      %v3590 = vpop.f32.mrb[0].mxu0
      %v3591 = vadd.f32 0.0, %v3590
      %3592 = vmatprep.mubr.f32.mxu0 0.0
      %3593 = vmatmul.mubr.f32.gmra.mrb[0].mxu0 %v3221
      %v3594 = vpop.f32.mrb[0].mxu0
      %v3595 = vadd.f32 0.0, %v3594
      %v3596 = vpop.f32.mrb[0].mxu0
      %v3597 = vadd.f32 0.0, %v3596
      %3598 = vmatprep.mubr.f32.mxu0 0.0
      %3599 = vmatmul.mubr.f32.gmra.mrb[0].mxu0 %v3224
      %v3600 = vpop.f32.mrb[0].mxu0
      %v3601 = vadd.f32 0.0, %v3600
      %v3602 = vpop.f32.mrb[0].mxu0
      %v3603 = vadd.f32 0.0, %v3602
      %3604 = vmatprep.mubr.f32.mxu0 0.0
      %3605 = vmatmul.mubr.f32.gmra.mrb[0].mxu0 %v3227
      %v3606 = vpop.f32.mrb[0].mxu0
      %v3607 = vadd.f32 0.0, %v3606
      %v3608 = vpop.f32.mrb[0].mxu0
      %v3609 = vadd.f32 0.0, %v3608
      %3610 = vmatprep.mubr.f32.mxu0 0.0
      %3611 = vmatmul.mubr.f32.gmra.mrb[0].mxu0 %v3230
      %v3612 = vpop.f32.mrb[0].mxu0
      %v3613 = vadd.f32 0.0, %v3612
      %v3614 = vpop.f32.mrb[0].mxu0
      %v3615 = vadd.f32 0.0, %v3614
      %3616 = vmatprep.mubr.f32.mxu0 0.0
      %3617 = vmatmul.mubr.f32.gmra.mrb[0].mxu0 %v3233
      %v3618 = vpop.f32.mrb[0].mxu0
      %v3619 = vadd.f32 0.0, %v3618
      %v3620 = vpop.f32.mrb[0].mxu0
      %v3621 = vadd.f32 0.0, %v3620
      %3622 = vmatprep.mubr.f32.mxu0 0.0
      %3623 = vmatmul.mubr.f32.gmra.mrb[0].mxu0 %v3236
      %v3624 = vpop.f32.mrb[0].mxu0
      %v3625 = vadd.f32 0.0, %v3624
      %v3626 = vpop.f32.mrb[0].mxu0
      %v3627 = vadd.f32 0.0, %v3626
      %3628 = vmatprep.mubr.f32.mxu0 0.0
      %3629 = vmatmul.mubr.f32.gmra.mrb[0].mxu0 %v3239
      %v3630 = vpop.f32.mrb[0].mxu0
      %v3631 = vadd.f32 0.0, %v3630
      %v3632 = vpop.f32.mrb[0].mxu0
      %v3633 = vadd.f32 0.0, %v3632
      %3634 = vmatprep.mubr.f32.mxu0 0.0
      %3635 = vmatmul.mubr.f32.gmra.mrb[0].mxu0 %v3242
      %v3636 = vpop.f32.mrb[0].mxu0
      %v3637 = vadd.f32 0.0, %v3636
      %v3638 = vpop.f32.mrb[0].mxu0
      %v3639 = vadd.f32 0.0, %v3638
      %3640 = vmatprep.mubr.f32.mxu0 0.0
      %3641 = vmatmul.mubr.f32.gmra.mrb[0].mxu0 %v3245
      %v3642 = vpop.f32.mrb[0].mxu0
      %v3643 = vadd.f32 0.0, %v3642
      %v3644 = vpop.f32.mrb[0].mxu0
      %v3645 = vadd.f32 0.0, %v3644
      %3646 = vmatprep.mubr.f32.mxu0 0.0
      %3647 = vmatmul.mubr.f32.gmra.mrb[0].mxu0 %v3248
      %v3648 = vpop.f32.mrb[0].mxu0
      %v3649 = vadd.f32 0.0, %v3648
      %v3650 = vpop.f32.mrb[0].mxu0
      %v3651 = vadd.f32 0.0, %v3650
      %3652 = vmatprep.mubr.f32.mxu0 0.0
      %3653 = vmatmul.mubr.f32.gmra.mrb[0].mxu0 %v3251
      %v3654 = vpop.f32.mrb[0].mxu0
      %v3655 = vadd.f32 0.0, %v3654
      %v3656 = vpop.f32.mrb[0].mxu0
      %v3657 = vadd.f32 0.0, %v3656
      %3658 = vmatprep.mubr.f32.mxu0 0.0
      %3659 = vmatmul.mubr.f32.gmra.mrb[0].mxu0 %v3254
      %v3660 = vpop.f32.mrb[0].mxu0
      %v3661 = vadd.f32 0.0, %v3660
      %v3662 = vpop.f32.mrb[0].mxu0
      %v3663 = vadd.f32 0.0, %v3662
      %3664 = vmatprep.mubr.f32.mxu0 0.0
      %3665 = vmatmul.mubr.f32.gmra.mrb[0].mxu0 %v3257
      %v3666 = vpop.f32.mrb[0].mxu0
      %v3667 = vadd.f32 0.0, %v3666
      %v3668 = vpop.f32.mrb[0].mxu0
      %v3669 = vadd.f32 0.0, %v3668
      %3670 = vmatprep.mubr.f32.mxu0 0.0
      %3671 = vmatmul.mubr.f32.gmra.mrb[0].mxu0 %v3260
      %v3672 = vpop.f32.mrb[0].mxu0
      %v3673 = vadd.f32 0.0, %v3672
      %v3674 = vpop.f32.mrb[0].mxu0
      %v3675 = vadd.f32 0.0, %v3674
      %3676 = vmatprep.mubr.f32.mxu0 0.0
      %3677 = vmatmul.mubr.f32.gmra.mrb[0].mxu0 %v3263
      %v3678 = vpop.f32.mrb[0].mxu0
      %v3679 = vadd.f32 0.0, %v3678
      %v3680 = vpop.f32.mrb[0].mxu0
      %v3681 = vadd.f32 0.0, %v3680
      %3682 = vmatprep.mubr.f32.mxu0 0.0
      %3683 = vmatmul.mubr.f32.gmra.mrb[0].mxu0 %v3266
      %v3684 = vpop.f32.mrb[0].mxu0
      %v3685 = vadd.f32 0.0, %v3684
      %v3686 = vpop.f32.mrb[0].mxu0
      %v3687 = vadd.f32 0.0, %v3686
      %3688 = vmatprep.mubr.f32.mxu0 0.0
      %3689 = vmatmul.mubr.f32.gmra.mrb[0].mxu0 %v3269
      %v3690 = vpop.f32.mrb[0].mxu0
      %v3691 = vadd.f32 0.0, %v3690
      %v3692 = vpop.f32.mrb[0].mxu0
      %v3693 = vadd.f32 0.0, %v3692
      %3694 = vmatprep.mubr.f32.mxu0 0.0
      %3695 = vmatmul.mubr.f32.gmra.mrb[0].mxu0 %v3272
      %v3696 = vpop.f32.mrb[0].mxu0
      %v3697 = vadd.f32 0.0, %v3696
      %v3698 = vpop.f32.mrb[0].mxu0
      %v3699 = vadd.f32 0.0, %v3698
      %3700 = vmatprep.mubr.f32.mxu0 0.0
      %3701 = vmatmul.mubr.f32.gmra.mrb[0].mxu0 %v3275
      %v3702 = vpop.f32.mrb[0].mxu0
      %v3703 = vadd.f32 0.0, %v3702
      %v3704 = vpop.f32.mrb[0].mxu0
      %v3705 = vadd.f32 0.0, %v3704
      %3706 = vdwg.mxu0
      %3707 = vmatprep.subr.mxu0 %v382
      %3708 = vmatpush1.msra.mxu0 %v381
      %3709 = vmatprep.subr.mxu0 0.0
      %3710 = vmatpush1.msra.mxu0 0.0
      %3711 = vmatprep.subr.mxu0 0.0
      %3712 = vmatpush1.msra.mxu0 0.0
      %3713 = vmatprep.subr.mxu0 0.0
      %3714 = vmatpush1.msra.mxu0 0.0
      %3715 = vmatprep.subr.mxu0 0.0
      %3716 = vmatpush1.msra.mxu0 0.0
      %3717 = vmatprep.subr.mxu0 0.0
      %3718 = vmatpush1.msra.mxu0 0.0
      %3719 = vmatprep.subr.mxu0 0.0
      %3720 = vmatpush1.msra.mxu0 0.0
      %3721 = vmatprep.subr.mxu0 0.0
      %3722 = vmatpush1.msra.mxu0 0.0
      %3723 = vmatprep.subr.mxu0 0.0
      %3724 = vmatpush1.msra.mxu0 0.0
      %3725 = vmatprep.subr.mxu0 0.0
      %3726 = vmatpush1.msra.mxu0 0.0
      %3727 = vmatprep.subr.mxu0 0.0
      %3728 = vmatpush1.msra.mxu0 0.0
      %3729 = vmatprep.subr.mxu0 0.0
      %3730 = vmatpush1.msra.mxu0 0.0
      %3731 = vmatprep.subr.mxu0 0.0
      %3732 = vmatpush1.msra.mxu0 0.0
      %3733 = vmatprep.subr.mxu0 0.0
      %3734 = vmatpush1.msra.mxu0 0.0
      %3735 = vmatprep.subr.mxu0 0.0
      %3736 = vmatpush1.msra.mxu0 0.0
      %3737 = vmatprep.subr.mxu0 0.0
      %3738 = vmatpush1.msra.mxu0 0.0
      %3739 = vmatprep.subr.mxu0 0.0
      %3740 = vmatpush1.msra.mxu0 0.0
      %3741 = vmatprep.subr.mxu0 0.0
      %3742 = vmatpush1.msra.mxu0 0.0
      %3743 = vmatprep.subr.mxu0 0.0
      %3744 = vmatpush1.msra.mxu0 0.0
      %3745 = vmatprep.subr.mxu0 0.0
      %3746 = vmatpush1.msra.mxu0 0.0
      %3747 = vmatprep.subr.mxu0 0.0
      %3748 = vmatpush1.msra.mxu0 0.0
      %3749 = vmatprep.subr.mxu0 0.0
      %3750 = vmatpush1.msra.mxu0 0.0
      %3751 = vmatprep.subr.mxu0 0.0
      %3752 = vmatpush1.msra.mxu0 0.0
      %3753 = vmatprep.subr.mxu0 0.0
      %3754 = vmatpush1.msra.mxu0 0.0
      %3755 = vmatprep.subr.mxu0 0.0
      %3756 = vmatpush1.msra.mxu0 0.0
      %3757 = vmatprep.subr.mxu0 0.0
      %3758 = vmatpush1.msra.mxu0 0.0
      %3759 = vmatprep.subr.mxu0 0.0
      %3760 = vmatpush1.msra.mxu0 0.0
      %3761 = vmatprep.subr.mxu0 0.0
      %3762 = vmatpush1.msra.mxu0 0.0
      %3763 = vmatprep.subr.mxu0 0.0
      %3764 = vmatpush1.msra.mxu0 0.0
      %3765 = vmatprep.subr.mxu0 0.0
      %3766 = vmatpush1.msra.mxu0 0.0
      %3767 = vmatprep.subr.mxu0 0.0
      %3768 = vmatpush1.msra.mxu0 0.0
      %3769 = vmatprep.subr.mxu0 0.0
      %3770 = vmatpush1.msra.mxu0 0.0
      %3771 = vmatprep.mubr.f32.mxu0 0.0
      %3772 = vmatmul.mubr.f32.gmra.mrb[0].mxu0 %v3203
      %v3773 = vpop.f32.mrb[0].mxu0
      %v3774 = vadd.f32 0.0, %v3773
      %v3775 = vpop.f32.mrb[0].mxu0
      %v3776 = vadd.f32 0.0, %v3775
      %3777 = vmatprep.mubr.f32.mxu0 0.0
      %3778 = vmatmul.mubr.f32.gmra.mrb[0].mxu0 %v3206
      %v3779 = vpop.f32.mrb[0].mxu0
      %v3780 = vadd.f32 0.0, %v3779
      %v3781 = vpop.f32.mrb[0].mxu0
      %v3782 = vadd.f32 0.0, %v3781
      %3783 = vmatprep.mubr.f32.mxu0 0.0
      %3784 = vmatmul.mubr.f32.gmra.mrb[0].mxu0 %v3209
      %v3785 = vpop.f32.mrb[0].mxu0
      %v3786 = vadd.f32 0.0, %v3785
      %v3787 = vpop.f32.mrb[0].mxu0
      %v3788 = vadd.f32 0.0, %v3787
      %3789 = vmatprep.mubr.f32.mxu0 0.0
      %3790 = vmatmul.mubr.f32.gmra.mrb[0].mxu0 %v3212
      %v3791 = vpop.f32.mrb[0].mxu0
      %v3792 = vadd.f32 0.0, %v3791
      %v3793 = vpop.f32.mrb[0].mxu0
      %v3794 = vadd.f32 0.0, %v3793
      %3795 = vmatprep.mubr.f32.mxu0 0.0
      %3796 = vmatmul.mubr.f32.gmra.mrb[0].mxu0 %v3215
      %v3797 = vpop.f32.mrb[0].mxu0
      %v3798 = vadd.f32 0.0, %v3797
      %v3799 = vpop.f32.mrb[0].mxu0
      %v3800 = vadd.f32 0.0, %v3799
      %3801 = vmatprep.mubr.f32.mxu0 0.0
      %3802 = vmatmul.mubr.f32.gmra.mrb[0].mxu0 %v3218
      %v3803 = vpop.f32.mrb[0].mxu0
      %v3804 = vadd.f32 0.0, %v3803
      %v3805 = vpop.f32.mrb[0].mxu0
      %v3806 = vadd.f32 0.0, %v3805
      %3807 = vmatprep.mubr.f32.mxu0 0.0
      %3808 = vmatmul.mubr.f32.gmra.mrb[0].mxu0 %v3221
      %v3809 = vpop.f32.mrb[0].mxu0
      %v3810 = vadd.f32 0.0, %v3809
      %v3811 = vpop.f32.mrb[0].mxu0
      %v3812 = vadd.f32 0.0, %v3811
      %3813 = vmatprep.mubr.f32.mxu0 0.0
      %3814 = vmatmul.mubr.f32.gmra.mrb[0].mxu0 %v3224
      %v3815 = vpop.f32.mrb[0].mxu0
      %v3816 = vadd.f32 0.0, %v3815
      %v3817 = vpop.f32.mrb[0].mxu0
      %v3818 = vadd.f32 0.0, %v3817
      %3819 = vmatprep.mubr.f32.mxu0 0.0
      %3820 = vmatmul.mubr.f32.gmra.mrb[0].mxu0 %v3227
      %v3821 = vpop.f32.mrb[0].mxu0
      %v3822 = vadd.f32 0.0, %v3821
      %v3823 = vpop.f32.mrb[0].mxu0
      %v3824 = vadd.f32 0.0, %v3823
      %3825 = vmatprep.mubr.f32.mxu0 0.0
      %3826 = vmatmul.mubr.f32.gmra.mrb[0].mxu0 %v3230
      %v3827 = vpop.f32.mrb[0].mxu0
      %v3828 = vadd.f32 0.0, %v3827
      %v3829 = vpop.f32.mrb[0].mxu0
      %v3830 = vadd.f32 0.0, %v3829
      %3831 = vmatprep.mubr.f32.mxu0 0.0
      %3832 = vmatmul.mubr.f32.gmra.mrb[0].mxu0 %v3233
      %v3833 = vpop.f32.mrb[0].mxu0
      %v3834 = vadd.f32 0.0, %v3833
      %v3835 = vpop.f32.mrb[0].mxu0
      %v3836 = vadd.f32 0.0, %v3835
      %3837 = vmatprep.mubr.f32.mxu0 0.0
      %3838 = vmatmul.mubr.f32.gmra.mrb[0].mxu0 %v3236
      %v3839 = vpop.f32.mrb[0].mxu0
      %v3840 = vadd.f32 0.0, %v3839
      %v3841 = vpop.f32.mrb[0].mxu0
      %v3842 = vadd.f32 0.0, %v3841
      %3843 = vmatprep.mubr.f32.mxu0 0.0
      %3844 = vmatmul.mubr.f32.gmra.mrb[0].mxu0 %v3239
      %v3845 = vpop.f32.mrb[0].mxu0
      %v3846 = vadd.f32 0.0, %v3845
      %v3847 = vpop.f32.mrb[0].mxu0
      %v3848 = vadd.f32 0.0, %v3847
      %3849 = vmatprep.mubr.f32.mxu0 0.0
      %3850 = vmatmul.mubr.f32.gmra.mrb[0].mxu0 %v3242
      %v3851 = vpop.f32.mrb[0].mxu0
      %v3852 = vadd.f32 0.0, %v3851
      %v3853 = vpop.f32.mrb[0].mxu0
      %v3854 = vadd.f32 0.0, %v3853
      %3855 = vmatprep.mubr.f32.mxu0 0.0
      %3856 = vmatmul.mubr.f32.gmra.mrb[0].mxu0 %v3245
      %v3857 = vpop.f32.mrb[0].mxu0
      %v3858 = vadd.f32 0.0, %v3857
      %v3859 = vpop.f32.mrb[0].mxu0
      %v3860 = vadd.f32 0.0, %v3859
      %3861 = vmatprep.mubr.f32.mxu0 0.0
      %3862 = vmatmul.mubr.f32.gmra.mrb[0].mxu0 %v3248
      %v3863 = vpop.f32.mrb[0].mxu0
      %v3864 = vadd.f32 0.0, %v3863
      %v3865 = vpop.f32.mrb[0].mxu0
      %v3866 = vadd.f32 0.0, %v3865
      %3867 = vmatprep.mubr.f32.mxu0 0.0
      %3868 = vmatmul.mubr.f32.gmra.mrb[0].mxu0 %v3251
      %v3869 = vpop.f32.mrb[0].mxu0
      %v3870 = vadd.f32 0.0, %v3869
      %v3871 = vpop.f32.mrb[0].mxu0
      %v3872 = vadd.f32 0.0, %v3871
      %3873 = vmatprep.mubr.f32.mxu0 0.0
      %3874 = vmatmul.mubr.f32.gmra.mrb[0].mxu0 %v3254
      %v3875 = vpop.f32.mrb[0].mxu0
      %v3876 = vadd.f32 0.0, %v3875
      %v3877 = vpop.f32.mrb[0].mxu0
      %v3878 = vadd.f32 0.0, %v3877
      %3879 = vmatprep.mubr.f32.mxu0 0.0
      %3880 = vmatmul.mubr.f32.gmra.mrb[0].mxu0 %v3257
      %v3881 = vpop.f32.mrb[0].mxu0
      %v3882 = vadd.f32 0.0, %v3881
      %v3883 = vpop.f32.mrb[0].mxu0
      %v3884 = vadd.f32 0.0, %v3883
      %3885 = vmatprep.mubr.f32.mxu0 0.0
      %3886 = vmatmul.mubr.f32.gmra.mrb[0].mxu0 %v3260
      %v3887 = vpop.f32.mrb[0].mxu0
      %v3888 = vadd.f32 0.0, %v3887
      %v3889 = vpop.f32.mrb[0].mxu0
      %v3890 = vadd.f32 0.0, %v3889
      %3891 = vmatprep.mubr.f32.mxu0 0.0
      %3892 = vmatmul.mubr.f32.gmra.mrb[0].mxu0 %v3263
      %v3893 = vpop.f32.mrb[0].mxu0
      %v3894 = vadd.f32 0.0, %v3893
      %v3895 = vpop.f32.mrb[0].mxu0
      %v3896 = vadd.f32 0.0, %v3895
      %3897 = vmatprep.mubr.f32.mxu0 0.0
      %3898 = vmatmul.mubr.f32.gmra.mrb[0].mxu0 %v3266
      %v3899 = vpop.f32.mrb[0].mxu0
      %v3900 = vadd.f32 0.0, %v3899
      %v3901 = vpop.f32.mrb[0].mxu0
      %v3902 = vadd.f32 0.0, %v3901
      %3903 = vmatprep.mubr.f32.mxu0 0.0
      %3904 = vmatmul.mubr.f32.gmra.mrb[0].mxu0 %v3269
      %v3905 = vpop.f32.mrb[0].mxu0
      %v3906 = vadd.f32 0.0, %v3905
      %v3907 = vpop.f32.mrb[0].mxu0
      %v3908 = vadd.f32 0.0, %v3907
      %3909 = vmatprep.mubr.f32.mxu0 0.0
      %3910 = vmatmul.mubr.f32.gmra.mrb[0].mxu0 %v3272
      %v3911 = vpop.f32.mrb[0].mxu0
      %v3912 = vadd.f32 0.0, %v3911
      %v3913 = vpop.f32.mrb[0].mxu0
      %v3914 = vadd.f32 0.0, %v3913
      %3915 = vmatprep.mubr.f32.mxu0 0.0
      %3916 = vmatmul.mubr.f32.gmra.mrb[0].mxu0 %v3275
      %v3917 = vpop.f32.mrb[0].mxu0
      %v3918 = vadd.f32 0.0, %v3917
      %v3919 = vpop.f32.mrb[0].mxu0
      %v3920 = vadd.f32 0.0, %v3919
      %3921 = vdwg.mxu0
      %v3923 = vlaneseq
      %v3924 = vshrl.u32 %v3923, 7
      %v3925 = vsub.s32 0, %v3924
      %v3926 = vrot.slane %v383, %v3925
      %v3927 = vlaneseq
      %v3928 = vshrl.u32 %v3927, 7
      %v3929 = vsub.s32 1, %v3928
      %v3930 = vrot.slane %v383, %v3929
      %v3931 = vlaneseq
      %v3932 = vshrl.u32 %v3931, 7
      %v3933 = vsub.s32 2, %v3932
      %v3934 = vrot.slane %v383, %v3933
      %v3935 = vlaneseq
      %v3936 = vshrl.u32 %v3935, 7
      %v3937 = vsub.s32 3, %v3936
      %v3938 = vrot.slane %v383, %v3937
      %v3939 = vlaneseq
      %v3940 = vshrl.u32 %v3939, 7
      %v3941 = vsub.s32 4, %v3940
      %v3942 = vrot.slane %v383, %v3941
      %v3943 = vlaneseq
      %v3944 = vshrl.u32 %v3943, 7
      %v3945 = vsub.s32 5, %v3944
      %v3946 = vrot.slane %v383, %v3945
      %v3953 = vadd.f32 %v3344, %v3926
      %v3954 = vadd.f32 %v3346, %v3930
      %v3955 = vadd.f32 %v3559, %v3934
      %v3956 = vadd.f32 %v3561, %v3938
      %v3957 = vadd.f32 %v3774, %v3942
      %v3958 = vadd.f32 %v3776, %v3946
      %v3959 = vmul.f32 %v383, 3.0
      %v3961 = vlaneseq
      %v3962 = vshrl.u32 %v3961, 7
      %v3963 = vsub.s32 0, %v3962
      %v3964 = vrot.slane %v3959, %v3963
      %v3965 = vlaneseq
      %v3966 = vshrl.u32 %v3965, 7
      %v3967 = vsub.s32 1, %v3966
      %v3968 = vrot.slane %v3959, %v3967
      %v3969 = vlaneseq
      %v3970 = vshrl.u32 %v3969, 7
      %v3971 = vsub.s32 2, %v3970
      %v3972 = vrot.slane %v3959, %v3971
      %v3973 = vlaneseq
      %v3974 = vshrl.u32 %v3973, 7
      %v3975 = vsub.s32 3, %v3974
      %v3976 = vrot.slane %v3959, %v3975
      %v3977 = vlaneseq
      %v3978 = vshrl.u32 %v3977, 7
      %v3979 = vsub.s32 4, %v3978
      %v3980 = vrot.slane %v3959, %v3979
      %v3981 = vlaneseq
      %v3982 = vshrl.u32 %v3981, 7
      %v3983 = vsub.s32 5, %v3982
      %v3984 = vrot.slane %v3959, %v3983
      %v3991 = vadd.f32 %v3344, %v3964
      %v3992 = vadd.f32 %v3346, %v3968
      %v3993 = vadd.f32 %v3559, %v3972
      %v3994 = vadd.f32 %v3561, %v3976
      %v3995 = vadd.f32 %v3774, %v3980
      %v3996 = vadd.f32 %v3776, %v3984
      %v3997 = vadd.f32 %v3350, %v3964
      %v3998 = vadd.f32 %v3352, %v3968
      %v3999 = vadd.f32 %v3565, %v3972
      %v4000 = vadd.f32 %v3567, %v3976
      %v4001 = vadd.f32 %v3780, %v3980
      %v4002 = vadd.f32 %v3782, %v3984
      %v4003 = vadd.f32 %v3356, %v3964
      %v4004 = vadd.f32 %v3358, %v3968
      %v4005 = vadd.f32 %v3571, %v3972
      %v4006 = vadd.f32 %v3573, %v3976
      %v4007 = vadd.f32 %v3786, %v3980
      %v4008 = vadd.f32 %v3788, %v3984
      %v4009 = vadd.f32 %v3362, %v3964
      %v4010 = vadd.f32 %v3364, %v3968
      %v4011 = vadd.f32 %v3577, %v3972
      %v4012 = vadd.f32 %v3579, %v3976
      %v4013 = vadd.f32 %v3792, %v3980
      %v4014 = vadd.f32 %v3794, %v3984
      %v4015 = vadd.f32 %v3368, %v3964
      %v4016 = vadd.f32 %v3370, %v3968
      %v4017 = vadd.f32 %v3583, %v3972
      %v4018 = vadd.f32 %v3585, %v3976
      %v4019 = vadd.f32 %v3798, %v3980
      %v4020 = vadd.f32 %v3800, %v3984
      %v4021 = vadd.f32 %v3374, %v3964
      %v4022 = vadd.f32 %v3376, %v3968
      %v4023 = vadd.f32 %v3589, %v3972
      %v4024 = vadd.f32 %v3591, %v3976
      %v4025 = vadd.f32 %v3804, %v3980
      %v4026 = vadd.f32 %v3806, %v3984
      %v4027 = vadd.f32 %v3380, %v3964
      %v4028 = vadd.f32 %v3382, %v3968
      %v4029 = vadd.f32 %v3595, %v3972
      %v4030 = vadd.f32 %v3597, %v3976
      %v4031 = vadd.f32 %v3810, %v3980
      %v4032 = vadd.f32 %v3812, %v3984
      %v4033 = vadd.f32 %v3386, %v3964
      %v4034 = vadd.f32 %v3388, %v3968
      %v4035 = vadd.f32 %v3601, %v3972
      %v4036 = vadd.f32 %v3603, %v3976
      %v4037 = vadd.f32 %v3816, %v3980
      %v4038 = vadd.f32 %v3818, %v3984
      %v4039 = vadd.f32 %v3392, %v3964
      %v4040 = vadd.f32 %v3394, %v3968
      %v4041 = vadd.f32 %v3607, %v3972
      %v4042 = vadd.f32 %v3609, %v3976
      %v4043 = vadd.f32 %v3822, %v3980
      %v4044 = vadd.f32 %v3824, %v3984
      %v4045 = vadd.f32 %v3398, %v3964
      %v4046 = vadd.f32 %v3400, %v3968
      %v4047 = vadd.f32 %v3613, %v3972
      %v4048 = vadd.f32 %v3615, %v3976
      %v4049 = vadd.f32 %v3828, %v3980
      %v4050 = vadd.f32 %v3830, %v3984
      %v4051 = vadd.f32 %v3404, %v3964
      %v4052 = vadd.f32 %v3406, %v3968
      %v4053 = vadd.f32 %v3619, %v3972
      %v4054 = vadd.f32 %v3621, %v3976
      %v4055 = vadd.f32 %v3834, %v3980
      %v4056 = vadd.f32 %v3836, %v3984
      %v4057 = vadd.f32 %v3410, %v3964
      %v4058 = vadd.f32 %v3412, %v3968
      %v4059 = vadd.f32 %v3625, %v3972
      %v4060 = vadd.f32 %v3627, %v3976
      %v4061 = vadd.f32 %v3840, %v3980
      %v4062 = vadd.f32 %v3842, %v3984
      %v4063 = vadd.f32 %v3416, %v3964
      %v4064 = vadd.f32 %v3418, %v3968
      %v4065 = vadd.f32 %v3631, %v3972
      %v4066 = vadd.f32 %v3633, %v3976
      %v4067 = vadd.f32 %v3846, %v3980
      %v4068 = vadd.f32 %v3848, %v3984
      %v4069 = vadd.f32 %v3422, %v3964
      %v4070 = vadd.f32 %v3424, %v3968
      %v4071 = vadd.f32 %v3637, %v3972
      %v4072 = vadd.f32 %v3639, %v3976
      %v4073 = vadd.f32 %v3852, %v3980
      %v4074 = vadd.f32 %v3854, %v3984
      %v4075 = vadd.f32 %v3428, %v3964
      %v4076 = vadd.f32 %v3430, %v3968
      %v4077 = vadd.f32 %v3643, %v3972
      %v4078 = vadd.f32 %v3645, %v3976
      %v4079 = vadd.f32 %v3858, %v3980
      %v4080 = vadd.f32 %v3860, %v3984
      %v4081 = vadd.f32 %v3434, %v3964
      %v4082 = vadd.f32 %v3436, %v3968
      %v4083 = vadd.f32 %v3649, %v3972
      %v4084 = vadd.f32 %v3651, %v3976
      %v4085 = vadd.f32 %v3864, %v3980
      %v4086 = vadd.f32 %v3866, %v3984
      %v4087 = vadd.f32 %v3440, %v3964
      %v4088 = vadd.f32 %v3442, %v3968
      %v4089 = vadd.f32 %v3655, %v3972
      %v4090 = vadd.f32 %v3657, %v3976
      %v4091 = vadd.f32 %v3870, %v3980
      %v4092 = vadd.f32 %v3872, %v3984
      %v4093 = vadd.f32 %v3446, %v3964
      %v4094 = vadd.f32 %v3448, %v3968
      %v4095 = vadd.f32 %v3661, %v3972
      %v4096 = vadd.f32 %v3663, %v3976
      %v4097 = vadd.f32 %v3876, %v3980
      %v4098 = vadd.f32 %v3878, %v3984
      %v4099 = vadd.f32 %v3452, %v3964
      %v4100 = vadd.f32 %v3454, %v3968
      %v4101 = vadd.f32 %v3667, %v3972
      %v4102 = vadd.f32 %v3669, %v3976
      %v4103 = vadd.f32 %v3882, %v3980
      %v4104 = vadd.f32 %v3884, %v3984
      %v4105 = vadd.f32 %v3458, %v3964
      %v4106 = vadd.f32 %v3460, %v3968
      %v4107 = vadd.f32 %v3673, %v3972
      %v4108 = vadd.f32 %v3675, %v3976
      %v4109 = vadd.f32 %v3888, %v3980
      %v4110 = vadd.f32 %v3890, %v3984
      %v4111 = vadd.f32 %v3464, %v3964
      %v4112 = vadd.f32 %v3466, %v3968
      %v4113 = vadd.f32 %v3679, %v3972
      %v4114 = vadd.f32 %v3681, %v3976
      %v4115 = vadd.f32 %v3894, %v3980
      %v4116 = vadd.f32 %v3896, %v3984
      %v4117 = vadd.f32 %v3470, %v3964
      %v4118 = vadd.f32 %v3472, %v3968
      %v4119 = vadd.f32 %v3685, %v3972
      %v4120 = vadd.f32 %v3687, %v3976
      %v4121 = vadd.f32 %v3900, %v3980
      %v4122 = vadd.f32 %v3902, %v3984
      %v4123 = vadd.f32 %v3476, %v3964
      %v4124 = vadd.f32 %v3478, %v3968
      %v4125 = vadd.f32 %v3691, %v3972
      %v4126 = vadd.f32 %v3693, %v3976
      %v4127 = vadd.f32 %v3906, %v3980
      %v4128 = vadd.f32 %v3908, %v3984
      %v4129 = vadd.f32 %v3482, %v3964
      %v4130 = vadd.f32 %v3484, %v3968
      %v4131 = vadd.f32 %v3697, %v3972
      %v4132 = vadd.f32 %v3699, %v3976
      %v4133 = vadd.f32 %v3912, %v3980
      %v4134 = vadd.f32 %v3914, %v3984
      %v4135 = vadd.f32 %v3488, %v3964
      %v4136 = vadd.f32 %v3490, %v3968
      %v4137 = vadd.f32 %v3703, %v3972
      %v4138 = vadd.f32 %v3705, %v3976
      %v4139 = vadd.f32 %v3918, %v3980
      %v4140 = vadd.f32 %v3920, %v3984
      %v4147 = vcombine.low %v3953, %v3954
      %v4148 = vcombine.low %v3955, %v3956
      %v4149 = vcombine.low %v3957, %v3958
      %v4151 = vunpack.c.l.s4 1966171168
      %v4152 = vunpack.c.0.s8 %v4151
      %v4153 = vlaneseq
      %v4154 = vshrl.u32 %v4153, 7
      %v4155 = vsub.s32 %v4152, %v4154
      %v4156 = vrot.slane %v4147, %v4155
      %v4158 = vunpack.c.l.s4 1966171168
      %v4159 = vunpack.c.0.s8 %v4158
      %v4160 = vlaneseq
      %v4161 = vshrl.u32 %v4160, 7
      %v4162 = vsub.s32 %v4159, %v4161
      %v4163 = vrot.slane %v4148, %v4162
      %v4165 = vunpack.c.l.s4 1966171168
      %v4166 = vunpack.c.0.s8 %v4165
      %v4167 = vlaneseq
      %v4168 = vshrl.u32 %v4167, 7
      %v4169 = vsub.s32 %v4166, %v4168
      %v4170 = vrot.slane %v4149, %v4169
      %v4171 = vcombine.low %v4156, %v4163
      %v4173 = vunpack.c.l.s4 1966171168
      %v4174 = vunpack.c.0.s8 %v4173
      %v4175 = vlaneseq
      %v4176 = vshrl.u32 %v4175, 7
      %v4177 = vsub.s32 %v4174, %v4176
      %v4178 = vrot.slane %v4171, %v4177
      %v4180 = vunpack.c.l.s4 1966171168
      %v4181 = vunpack.c.0.s8 %v4180
      %v4182 = vlaneseq
      %v4183 = vshrl.u32 %v4182, 7
      %v4184 = vsub.s32 %v4181, %v4183
      %v4185 = vrot.slane %v4170, %v4184
      %v4186 = vcombine.low %v4178, %v4185
      %v4188 = vlaneseq
      %vm4189 = vcmp.ge.s32.totalorder %v4188, 0
      %vm4190 = vcmp.lt.s32.totalorder %v4188, 768
      %vm4191 = vmand %vm4189, %vm4190
      %4192 = vst.msk [vmem:[%s278] ss:$8 sm:$0xf] %vm4191, %v4186
      %4193 = vst.msk [vmem:[%s278] ss:$8 sm:$0x30] %vm4191, %v4186
      %4194 = vst [vmem:[%s278] sm:$0xfe] %v3991
      %4195 = vst [vmem:[%s278 + $0x8] sm:$0xfe] %v3992
      %4196 = vst [vmem:[%s278 + $0x10] sm:$0xfe] %v3993
      %4197 = vst [vmem:[%s278 + $0x18] sm:$0xfe] %v3994
      %4198 = vst [vmem:[%s278 + $0x20] sm:$0xfe] %v3995
      %4199 = vst [vmem:[%s278 + $0x28] sm:$0xfe] %v3996
      %4200 = vst [vmem:[%s278 + $0x30] sm:$0xff] %v3997
      %4201 = vst [vmem:[%s278 + $0x38] sm:$0xff] %v3998
      %4202 = vst [vmem:[%s278 + $0x40] sm:$0xff] %v3999
      %4203 = vst [vmem:[%s278 + $0x48] sm:$0xff] %v4000
      %4204 = vst [vmem:[%s278 + $0x50] sm:$0xff] %v4001
      %4205 = vst [vmem:[%s278 + $0x58] sm:$0xff] %v4002
      %4206 = vst [vmem:[%s278 + $0x60] sm:$0xff] %v4003
      %4207 = vst [vmem:[%s278 + $0x68] sm:$0xff] %v4004
      %4208 = vst [vmem:[%s278 + $0x70] sm:$0xff] %v4005
      %4209 = vst [vmem:[%s278 + $0x78] sm:$0xff] %v4006
      %4210 = vst [vmem:[%s278 + $0x80] sm:$0xff] %v4007
      %4211 = vst [vmem:[%s278 + $0x88] sm:$0xff] %v4008
      %4212 = vst [vmem:[%s278 + $0x90] sm:$0xff] %v4009
      %4213 = vst [vmem:[%s278 + $0x98] sm:$0xff] %v4010
      %4214 = vst [vmem:[%s278 + $0xa0] sm:$0xff] %v4011
      %4215 = vst [vmem:[%s278 + $0xa8] sm:$0xff] %v4012
      %4216 = vst [vmem:[%s278 + $0xb0] sm:$0xff] %v4013
      %4217 = vst [vmem:[%s278 + $0xb8] sm:$0xff] %v4014
      %4218 = vst [vmem:[%s278 + $0xc0] sm:$0xff] %v4015
      %4219 = vst [vmem:[%s278 + $0xc8] sm:$0xff] %v4016
      %4220 = vst [vmem:[%s278 + $0xd0] sm:$0xff] %v4017
      %4221 = vst [vmem:[%s278 + $0xd8] sm:$0xff] %v4018
      %4222 = vst [vmem:[%s278 + $0xe0] sm:$0xff] %v4019
      %4223 = vst [vmem:[%s278 + $0xe8] sm:$0xff] %v4020
      %4224 = vst [vmem:[%s278 + $0xf0] sm:$0xff] %v4021
      %4225 = vst [vmem:[%s278 + $0xf8] sm:$0xff] %v4022
      %4226 = vst [vmem:[%s278 + $0x100] sm:$0xff] %v4023
      %4227 = vst [vmem:[%s278 + $0x108] sm:$0xff] %v4024
      %4228 = vst [vmem:[%s278 + $0x110] sm:$0xff] %v4025
      %4229 = vst [vmem:[%s278 + $0x118] sm:$0xff] %v4026
      %4230 = vst [vmem:[%s278 + $0x120] sm:$0xff] %v4027
      %4231 = vst [vmem:[%s278 + $0x128] sm:$0xff] %v4028
      %4232 = vst [vmem:[%s278 + $0x130] sm:$0xff] %v4029
      %4233 = vst [vmem:[%s278 + $0x138] sm:$0xff] %v4030
      %4234 = vst [vmem:[%s278 + $0x140] sm:$0xff] %v4031
      %4235 = vst [vmem:[%s278 + $0x148] sm:$0xff] %v4032
      %4236 = vst [vmem:[%s278 + $0x150] sm:$0xff] %v4033
      %4237 = vst [vmem:[%s278 + $0x158] sm:$0xff] %v4034
      %4238 = vst [vmem:[%s278 + $0x160] sm:$0xff] %v4035
      %4239 = vst [vmem:[%s278 + $0x168] sm:$0xff] %v4036
      %4240 = vst [vmem:[%s278 + $0x170] sm:$0xff] %v4037
      %4241 = vst [vmem:[%s278 + $0x178] sm:$0xff] %v4038
      %4242 = vst [vmem:[%s278 + $0x180] sm:$0xff] %v4039
      %4243 = vst [vmem:[%s278 + $0x188] sm:$0xff] %v4040
      %4244 = vst [vmem:[%s278 + $0x190] sm:$0xff] %v4041
      %4245 = vst [vmem:[%s278 + $0x198] sm:$0xff] %v4042
      %4246 = vst [vmem:[%s278 + $0x1a0] sm:$0xff] %v4043
      %4247 = vst [vmem:[%s278 + $0x1a8] sm:$0xff] %v4044
      %4248 = vst [vmem:[%s278 + $0x1b0] sm:$0xff] %v4045
      %4249 = vst [vmem:[%s278 + $0x1b8] sm:$0xff] %v4046
      %4250 = vst [vmem:[%s278 + $0x1c0] sm:$0xff] %v4047
      %4251 = vst [vmem:[%s278 + $0x1c8] sm:$0xff] %v4048
      %4252 = vst [vmem:[%s278 + $0x1d0] sm:$0xff] %v4049
      %4253 = vst [vmem:[%s278 + $0x1d8] sm:$0xff] %v4050
      %4254 = vst [vmem:[%s278 + $0x1e0] sm:$0xff] %v4051
      %4255 = vst [vmem:[%s278 + $0x1e8] sm:$0xff] %v4052
      %4256 = vst [vmem:[%s278 + $0x1f0] sm:$0xff] %v4053
      %4257 = vst [vmem:[%s278 + $0x1f8] sm:$0xff] %v4054
      %4258 = vst [vmem:[%s278 + $0x200] sm:$0xff] %v4055
      %4259 = vst [vmem:[%s278 + $0x208] sm:$0xff] %v4056
      %4260 = vst [vmem:[%s278 + $0x210] sm:$0xff] %v4057
      %4261 = vst [vmem:[%s278 + $0x218] sm:$0xff] %v4058
      %4262 = vst [vmem:[%s278 + $0x220] sm:$0xff] %v4059
      %4263 = vst [vmem:[%s278 + $0x228] sm:$0xff] %v4060
      %4264 = vst [vmem:[%s278 + $0x230] sm:$0xff] %v4061
      %4265 = vst [vmem:[%s278 + $0x238] sm:$0xff] %v4062
      %4266 = vst [vmem:[%s278 + $0x240] sm:$0xff] %v4063
      %4267 = vst [vmem:[%s278 + $0x248] sm:$0xff] %v4064
      %4268 = vst [vmem:[%s278 + $0x250] sm:$0xff] %v4065
      %4269 = vst [vmem:[%s278 + $0x258] sm:$0xff] %v4066
      %4270 = vst [vmem:[%s278 + $0x260] sm:$0xff] %v4067
      %4271 = vst [vmem:[%s278 + $0x268] sm:$0xff] %v4068
      %4272 = vst [vmem:[%s278 + $0x270] sm:$0xff] %v4069
      %4273 = vst [vmem:[%s278 + $0x278] sm:$0xff] %v4070
      %4274 = vst [vmem:[%s278 + $0x280] sm:$0xff] %v4071
      %4275 = vst [vmem:[%s278 + $0x288] sm:$0xff] %v4072
      %4276 = vst [vmem:[%s278 + $0x290] sm:$0xff] %v4073
      %4277 = vst [vmem:[%s278 + $0x298] sm:$0xff] %v4074
      %4278 = vst [vmem:[%s278 + $0x2a0] sm:$0xff] %v4075
      %4279 = vst [vmem:[%s278 + $0x2a8] sm:$0xff] %v4076
      %4280 = vst [vmem:[%s278 + $0x2b0] sm:$0xff] %v4077
      %4281 = vst [vmem:[%s278 + $0x2b8] sm:$0xff] %v4078
      %4282 = vst [vmem:[%s278 + $0x2c0] sm:$0xff] %v4079
      %4283 = vst [vmem:[%s278 + $0x2c8] sm:$0xff] %v4080
      %4284 = vst [vmem:[%s278 + $0x2d0] sm:$0xff] %v4081
      %4285 = vst [vmem:[%s278 + $0x2d8] sm:$0xff] %v4082
      %4286 = vst [vmem:[%s278 + $0x2e0] sm:$0xff] %v4083
      %4287 = vst [vmem:[%s278 + $0x2e8] sm:$0xff] %v4084
      %4288 = vst [vmem:[%s278 + $0x2f0] sm:$0xff] %v4085
      %4289 = vst [vmem:[%s278 + $0x2f8] sm:$0xff] %v4086
      %4290 = vst [vmem:[%s278 + $0x300] sm:$0xff] %v4087
      %4291 = vst [vmem:[%s278 + $0x308] sm:$0xff] %v4088
      %4292 = vst [vmem:[%s278 + $0x310] sm:$0xff] %v4089
      %4293 = vst [vmem:[%s278 + $0x318] sm:$0xff] %v4090
      %4294 = vst [vmem:[%s278 + $0x320] sm:$0xff] %v4091
      %4295 = vst [vmem:[%s278 + $0x328] sm:$0xff] %v4092
      %4296 = vst [vmem:[%s278 + $0x330] sm:$0xff] %v4093
      %4297 = vst [vmem:[%s278 + $0x338] sm:$0xff] %v4094
      %4298 = vst [vmem:[%s278 + $0x340] sm:$0xff] %v4095
      %4299 = vst [vmem:[%s278 + $0x348] sm:$0xff] %v4096
      %4300 = vst [vmem:[%s278 + $0x350] sm:$0xff] %v4097
      %4301 = vst [vmem:[%s278 + $0x358] sm:$0xff] %v4098
      %4302 = vst [vmem:[%s278 + $0x360] sm:$0xff] %v4099
      %4303 = vst [vmem:[%s278 + $0x368] sm:$0xff] %v4100
      %4304 = vst [vmem:[%s278 + $0x370] sm:$0xff] %v4101
      %4305 = vst [vmem:[%s278 + $0x378] sm:$0xff] %v4102
      %4306 = vst [vmem:[%s278 + $0x380] sm:$0xff] %v4103
      %4307 = vst [vmem:[%s278 + $0x388] sm:$0xff] %v4104
      %4308 = vst [vmem:[%s278 + $0x390] sm:$0xff] %v4105
      %4309 = vst [vmem:[%s278 + $0x398] sm:$0xff] %v4106
      %4310 = vst [vmem:[%s278 + $0x3a0] sm:$0xff] %v4107
      %4311 = vst [vmem:[%s278 + $0x3a8] sm:$0xff] %v4108
      %4312 = vst [vmem:[%s278 + $0x3b0] sm:$0xff] %v4109
      %4313 = vst [vmem:[%s278 + $0x3b8] sm:$0xff] %v4110
      %4314 = vst [vmem:[%s278 + $0x3c0] sm:$0xff] %v4111
      %4315 = vst [vmem:[%s278 + $0x3c8] sm:$0xff] %v4112
      %4316 = vst [vmem:[%s278 + $0x3d0] sm:$0xff] %v4113
      %4317 = vst [vmem:[%s278 + $0x3d8] sm:$0xff] %v4114
      %4318 = vst [vmem:[%s278 + $0x3e0] sm:$0xff] %v4115
      %4319 = vst [vmem:[%s278 + $0x3e8] sm:$0xff] %v4116
      %4320 = vst [vmem:[%s278 + $0x3f0] sm:$0xff] %v4117
      %4321 = vst [vmem:[%s278 + $0x3f8] sm:$0xff] %v4118
      %4322 = vst [vmem:[%s278 + $0x400] sm:$0xff] %v4119
      %4323 = vst [vmem:[%s278 + $0x408] sm:$0xff] %v4120
      %4324 = vst [vmem:[%s278 + $0x410] sm:$0xff] %v4121
      %4325 = vst [vmem:[%s278 + $0x418] sm:$0xff] %v4122
      %4326 = vst [vmem:[%s278 + $0x420] sm:$0xff] %v4123
      %4327 = vst [vmem:[%s278 + $0x428] sm:$0xff] %v4124
      %4328 = vst [vmem:[%s278 + $0x430] sm:$0xff] %v4125
      %4329 = vst [vmem:[%s278 + $0x438] sm:$0xff] %v4126
      %4330 = vst [vmem:[%s278 + $0x440] sm:$0xff] %v4127
      %4331 = vst [vmem:[%s278 + $0x448] sm:$0xff] %v4128
      %4332 = vst [vmem:[%s278 + $0x450] sm:$0xff] %v4129
      %4333 = vst [vmem:[%s278 + $0x458] sm:$0xff] %v4130
      %4334 = vst [vmem:[%s278 + $0x460] sm:$0xff] %v4131
      %4335 = vst [vmem:[%s278 + $0x468] sm:$0xff] %v4132
      %4336 = vst [vmem:[%s278 + $0x470] sm:$0xff] %v4133
      %4337 = vst [vmem:[%s278 + $0x478] sm:$0xff] %v4134
      %4338 = vst [vmem:[%s278 + $0x480] sm:$0x1f] %v4135
      %4339 = vst [vmem:[%s278 + $0x488] sm:$0x1f] %v4136
      %4340 = vst [vmem:[%s278 + $0x490] sm:$0x1f] %v4137
      %4341 = vst [vmem:[%s278 + $0x498] sm:$0x1f] %v4138
      %4342 = vst [vmem:[%s278 + $0x4a0] sm:$0x1f] %v4139
      %4343 = vst [vmem:[%s278 + $0x4a8] sm:$0x1f] %v4140
      %vm4494 = vcmask 1043456
      %v4495 = vrot.slane %v3991, 4
      %v4496 = vrot.slane %v3992, 4
      %v4497 = vrot.slane %v3993, 4
      %v4498 = vrot.slane %v3994, 4
      %v4499 = vrot.slane %v3995, 4
      %v4500 = vrot.slane %v3996, 4
      %v4501 = vrot.slane %v3997, 4
      %v4502 = vsel %vm4494, %v4495, %v4501
      %v4503 = vrot.slane %v3998, 4
      %v4504 = vsel %vm4494, %v4496, %v4503
      %v4505 = vrot.slane %v3999, 4
      %v4506 = vsel %vm4494, %v4497, %v4505
      %v4507 = vrot.slane %v4000, 4
      %v4508 = vsel %vm4494, %v4498, %v4507
      %v4509 = vrot.slane %v4001, 4
      %v4510 = vsel %vm4494, %v4499, %v4509
      %v4511 = vrot.slane %v4002, 4
      %v4512 = vsel %vm4494, %v4500, %v4511
      %v4513 = vrot.slane %v4003, 4
      %v4514 = vsel %vm4494, %v4501, %v4513
      %v4515 = vrot.slane %v4004, 4
      %v4516 = vsel %vm4494, %v4503, %v4515
      %v4517 = vrot.slane %v4005, 4
      %v4518 = vsel %vm4494, %v4505, %v4517
      %v4519 = vrot.slane %v4006, 4
      %v4520 = vsel %vm4494, %v4507, %v4519
      %v4521 = vrot.slane %v4007, 4
      %v4522 = vsel %vm4494, %v4509, %v4521
      %v4523 = vrot.slane %v4008, 4
      %v4524 = vsel %vm4494, %v4511, %v4523
      %v4525 = vrot.slane %v4009, 4
      %v4526 = vsel %vm4494, %v4513, %v4525
      %v4527 = vrot.slane %v4010, 4
      %v4528 = vsel %vm4494, %v4515, %v4527
      %v4529 = vrot.slane %v4011, 4
      %v4530 = vsel %vm4494, %v4517, %v4529
      %v4531 = vrot.slane %v4012, 4
      %v4532 = vsel %vm4494, %v4519, %v4531
      %v4533 = vrot.slane %v4013, 4
      %v4534 = vsel %vm4494, %v4521, %v4533
      %v4535 = vrot.slane %v4014, 4
      %v4536 = vsel %vm4494, %v4523, %v4535
      %v4537 = vrot.slane %v4015, 4
      %v4538 = vsel %vm4494, %v4525, %v4537
      %v4539 = vrot.slane %v4016, 4
      %v4540 = vsel %vm4494, %v4527, %v4539
      %v4541 = vrot.slane %v4017, 4
      %v4542 = vsel %vm4494, %v4529, %v4541
      %v4543 = vrot.slane %v4018, 4
      %v4544 = vsel %vm4494, %v4531, %v4543
      %v4545 = vrot.slane %v4019, 4
      %v4546 = vsel %vm4494, %v4533, %v4545
      %v4547 = vrot.slane %v4020, 4
      %v4548 = vsel %vm4494, %v4535, %v4547
      %v4549 = vrot.slane %v4021, 4
      %v4550 = vsel %vm4494, %v4537, %v4549
      %v4551 = vrot.slane %v4022, 4
      %v4552 = vsel %vm4494, %v4539, %v4551
      %v4553 = vrot.slane %v4023, 4
      %v4554 = vsel %vm4494, %v4541, %v4553
      %v4555 = vrot.slane %v4024, 4
      %v4556 = vsel %vm4494, %v4543, %v4555
      %v4557 = vrot.slane %v4025, 4
      %v4558 = vsel %vm4494, %v4545, %v4557
      %v4559 = vrot.slane %v4026, 4
      %v4560 = vsel %vm4494, %v4547, %v4559
      %v4561 = vrot.slane %v4027, 4
      %v4562 = vsel %vm4494, %v4549, %v4561
      %v4563 = vrot.slane %v4028, 4
      %v4564 = vsel %vm4494, %v4551, %v4563
      %v4565 = vrot.slane %v4029, 4
      %v4566 = vsel %vm4494, %v4553, %v4565
      %v4567 = vrot.slane %v4030, 4
      %v4568 = vsel %vm4494, %v4555, %v4567
      %v4569 = vrot.slane %v4031, 4
      %v4570 = vsel %vm4494, %v4557, %v4569
      %v4571 = vrot.slane %v4032, 4
      %v4572 = vsel %vm4494, %v4559, %v4571
      %v4573 = vrot.slane %v4033, 4
      %v4574 = vsel %vm4494, %v4561, %v4573
      %v4575 = vrot.slane %v4034, 4
      %v4576 = vsel %vm4494, %v4563, %v4575
      %v4577 = vrot.slane %v4035, 4
      %v4578 = vsel %vm4494, %v4565, %v4577
      %v4579 = vrot.slane %v4036, 4
      %v4580 = vsel %vm4494, %v4567, %v4579
      %v4581 = vrot.slane %v4037, 4
      %v4582 = vsel %vm4494, %v4569, %v4581
      %v4583 = vrot.slane %v4038, 4
      %v4584 = vsel %vm4494, %v4571, %v4583
      %v4585 = vrot.slane %v4039, 4
      %v4586 = vsel %vm4494, %v4573, %v4585
      %v4587 = vrot.slane %v4040, 4
      %v4588 = vsel %vm4494, %v4575, %v4587
      %v4589 = vrot.slane %v4041, 4
      %v4590 = vsel %vm4494, %v4577, %v4589
      %v4591 = vrot.slane %v4042, 4
      %v4592 = vsel %vm4494, %v4579, %v4591
      %v4593 = vrot.slane %v4043, 4
      %v4594 = vsel %vm4494, %v4581, %v4593
      %v4595 = vrot.slane %v4044, 4
      %v4596 = vsel %vm4494, %v4583, %v4595
      %v4597 = vrot.slane %v4045, 4
      %v4598 = vsel %vm4494, %v4585, %v4597
      %v4599 = vrot.slane %v4046, 4
      %v4600 = vsel %vm4494, %v4587, %v4599
      %v4601 = vrot.slane %v4047, 4
      %v4602 = vsel %vm4494, %v4589, %v4601
      %v4603 = vrot.slane %v4048, 4
      %v4604 = vsel %vm4494, %v4591, %v4603
      %v4605 = vrot.slane %v4049, 4
      %v4606 = vsel %vm4494, %v4593, %v4605
      %v4607 = vrot.slane %v4050, 4
      %v4608 = vsel %vm4494, %v4595, %v4607
      %v4609 = vrot.slane %v4051, 4
      %v4610 = vsel %vm4494, %v4597, %v4609
      %v4611 = vrot.slane %v4052, 4
      %v4612 = vsel %vm4494, %v4599, %v4611
      %v4613 = vrot.slane %v4053, 4
      %v4614 = vsel %vm4494, %v4601, %v4613
      %v4615 = vrot.slane %v4054, 4
      %v4616 = vsel %vm4494, %v4603, %v4615
      %v4617 = vrot.slane %v4055, 4
      %v4618 = vsel %vm4494, %v4605, %v4617
      %v4619 = vrot.slane %v4056, 4
      %v4620 = vsel %vm4494, %v4607, %v4619
      %v4621 = vrot.slane %v4057, 4
      %v4622 = vsel %vm4494, %v4609, %v4621
      %v4623 = vrot.slane %v4058, 4
      %v4624 = vsel %vm4494, %v4611, %v4623
      %v4625 = vrot.slane %v4059, 4
      %v4626 = vsel %vm4494, %v4613, %v4625
      %v4627 = vrot.slane %v4060, 4
      %v4628 = vsel %vm4494, %v4615, %v4627
      %v4629 = vrot.slane %v4061, 4
      %v4630 = vsel %vm4494, %v4617, %v4629
      %v4631 = vrot.slane %v4062, 4
      %v4632 = vsel %vm4494, %v4619, %v4631
      %v4633 = vrot.slane %v4063, 4
      %v4634 = vsel %vm4494, %v4621, %v4633
      %v4635 = vrot.slane %v4064, 4
      %v4636 = vsel %vm4494, %v4623, %v4635
      %v4637 = vrot.slane %v4065, 4
      %v4638 = vsel %vm4494, %v4625, %v4637
      %v4639 = vrot.slane %v4066, 4
      %v4640 = vsel %vm4494, %v4627, %v4639
      %v4641 = vrot.slane %v4067, 4
      %v4642 = vsel %vm4494, %v4629, %v4641
      %v4643 = vrot.slane %v4068, 4
      %v4644 = vsel %vm4494, %v4631, %v4643
      %v4645 = vrot.slane %v4069, 4
      %v4646 = vsel %vm4494, %v4633, %v4645
      %v4647 = vrot.slane %v4070, 4
      %v4648 = vsel %vm4494, %v4635, %v4647
      %v4649 = vrot.slane %v4071, 4
      %v4650 = vsel %vm4494, %v4637, %v4649
      %v4651 = vrot.slane %v4072, 4
      %v4652 = vsel %vm4494, %v4639, %v4651
      %v4653 = vrot.slane %v4073, 4
      %v4654 = vsel %vm4494, %v4641, %v4653
      %v4655 = vrot.slane %v4074, 4
      %v4656 = vsel %vm4494, %v4643, %v4655
      %v4657 = vrot.slane %v4075, 4
      %v4658 = vsel %vm4494, %v4645, %v4657
      %v4659 = vrot.slane %v4076, 4
      %v4660 = vsel %vm4494, %v4647, %v4659
      %v4661 = vrot.slane %v4077, 4
      %v4662 = vsel %vm4494, %v4649, %v4661
      %v4663 = vrot.slane %v4078, 4
      %v4664 = vsel %vm4494, %v4651, %v4663
      %v4665 = vrot.slane %v4079, 4
      %v4666 = vsel %vm4494, %v4653, %v4665
      %v4667 = vrot.slane %v4080, 4
      %v4668 = vsel %vm4494, %v4655, %v4667
      %v4669 = vrot.slane %v4081, 4
      %v4670 = vsel %vm4494, %v4657, %v4669
      %v4671 = vrot.slane %v4082, 4
      %v4672 = vsel %vm4494, %v4659, %v4671
      %v4673 = vrot.slane %v4083, 4
      %v4674 = vsel %vm4494, %v4661, %v4673
      %v4675 = vrot.slane %v4084, 4
      %v4676 = vsel %vm4494, %v4663, %v4675
      %v4677 = vrot.slane %v4085, 4
      %v4678 = vsel %vm4494, %v4665, %v4677
      %v4679 = vrot.slane %v4086, 4
      %v4680 = vsel %vm4494, %v4667, %v4679
      %v4681 = vrot.slane %v4087, 4
      %v4682 = vsel %vm4494, %v4669, %v4681
      %v4683 = vrot.slane %v4088, 4
      %v4684 = vsel %vm4494, %v4671, %v4683
      %v4685 = vrot.slane %v4089, 4
      %v4686 = vsel %vm4494, %v4673, %v4685
      %v4687 = vrot.slane %v4090, 4
      %v4688 = vsel %vm4494, %v4675, %v4687
      %v4689 = vrot.slane %v4091, 4
      %v4690 = vsel %vm4494, %v4677, %v4689
      %v4691 = vrot.slane %v4092, 4
      %v4692 = vsel %vm4494, %v4679, %v4691
      %v4693 = vrot.slane %v4093, 4
      %v4694 = vsel %vm4494, %v4681, %v4693
      %v4695 = vrot.slane %v4094, 4
      %v4696 = vsel %vm4494, %v4683, %v4695
      %v4697 = vrot.slane %v4095, 4
      %v4698 = vsel %vm4494, %v4685, %v4697
      %v4699 = vrot.slane %v4096, 4
      %v4700 = vsel %vm4494, %v4687, %v4699
      %v4701 = vrot.slane %v4097, 4
      %v4702 = vsel %vm4494, %v4689, %v4701
      %v4703 = vrot.slane %v4098, 4
      %v4704 = vsel %vm4494, %v4691, %v4703
      %v4705 = vrot.slane %v4099, 4
      %v4706 = vsel %vm4494, %v4693, %v4705
      %v4707 = vrot.slane %v4100, 4
      %v4708 = vsel %vm4494, %v4695, %v4707
      %v4709 = vrot.slane %v4101, 4
      %v4710 = vsel %vm4494, %v4697, %v4709
      %v4711 = vrot.slane %v4102, 4
      %v4712 = vsel %vm4494, %v4699, %v4711
      %v4713 = vrot.slane %v4103, 4
      %v4714 = vsel %vm4494, %v4701, %v4713
      %v4715 = vrot.slane %v4104, 4
      %v4716 = vsel %vm4494, %v4703, %v4715
      %v4717 = vrot.slane %v4105, 4
      %v4718 = vsel %vm4494, %v4705, %v4717
      %v4719 = vrot.slane %v4106, 4
      %v4720 = vsel %vm4494, %v4707, %v4719
      %v4721 = vrot.slane %v4107, 4
      %v4722 = vsel %vm4494, %v4709, %v4721
      %v4723 = vrot.slane %v4108, 4
      %v4724 = vsel %vm4494, %v4711, %v4723
      %v4725 = vrot.slane %v4109, 4
      %v4726 = vsel %vm4494, %v4713, %v4725
      %v4727 = vrot.slane %v4110, 4
      %v4728 = vsel %vm4494, %v4715, %v4727
      %v4729 = vrot.slane %v4111, 4
      %v4730 = vsel %vm4494, %v4717, %v4729
      %v4731 = vrot.slane %v4112, 4
      %v4732 = vsel %vm4494, %v4719, %v4731
      %v4733 = vrot.slane %v4113, 4
      %v4734 = vsel %vm4494, %v4721, %v4733
      %v4735 = vrot.slane %v4114, 4
      %v4736 = vsel %vm4494, %v4723, %v4735
      %v4737 = vrot.slane %v4115, 4
      %v4738 = vsel %vm4494, %v4725, %v4737
      %v4739 = vrot.slane %v4116, 4
      %v4740 = vsel %vm4494, %v4727, %v4739
      %v4741 = vrot.slane %v4117, 4
      %v4742 = vsel %vm4494, %v4729, %v4741
      %v4743 = vrot.slane %v4118, 4
      %v4744 = vsel %vm4494, %v4731, %v4743
      %v4745 = vrot.slane %v4119, 4
      %v4746 = vsel %vm4494, %v4733, %v4745
      %v4747 = vrot.slane %v4120, 4
      %v4748 = vsel %vm4494, %v4735, %v4747
      %v4749 = vrot.slane %v4121, 4
      %v4750 = vsel %vm4494, %v4737, %v4749
      %v4751 = vrot.slane %v4122, 4
      %v4752 = vsel %vm4494, %v4739, %v4751
      %v4753 = vrot.slane %v4123, 4
      %v4754 = vsel %vm4494, %v4741, %v4753
      %v4755 = vrot.slane %v4124, 4
      %v4756 = vsel %vm4494, %v4743, %v4755
      %v4757 = vrot.slane %v4125, 4
      %v4758 = vsel %vm4494, %v4745, %v4757
      %v4759 = vrot.slane %v4126, 4
      %v4760 = vsel %vm4494, %v4747, %v4759
      %v4761 = vrot.slane %v4127, 4
      %v4762 = vsel %vm4494, %v4749, %v4761
      %v4763 = vrot.slane %v4128, 4
      %v4764 = vsel %vm4494, %v4751, %v4763
      %v4765 = vrot.slane %v4129, 4
      %v4766 = vsel %vm4494, %v4753, %v4765
      %v4767 = vrot.slane %v4130, 4
      %v4768 = vsel %vm4494, %v4755, %v4767
      %v4769 = vrot.slane %v4131, 4
      %v4770 = vsel %vm4494, %v4757, %v4769
      %v4771 = vrot.slane %v4132, 4
      %v4772 = vsel %vm4494, %v4759, %v4771
      %v4773 = vrot.slane %v4133, 4
      %v4774 = vsel %vm4494, %v4761, %v4773
      %v4775 = vrot.slane %v4134, 4
      %v4776 = vsel %vm4494, %v4763, %v4775
      %v4777 = vrot.slane %v4135, 4
      %v4778 = vsel %vm4494, %v4765, %v4777
      %v4779 = vrot.slane %v4136, 4
      %v4780 = vsel %vm4494, %v4767, %v4779
      %v4781 = vrot.slane %v4137, 4
      %v4782 = vsel %vm4494, %v4769, %v4781
      %v4783 = vrot.slane %v4138, 4
      %v4784 = vsel %vm4494, %v4771, %v4783
      %v4785 = vrot.slane %v4139, 4
      %v4786 = vsel %vm4494, %v4773, %v4785
      %v4787 = vrot.slane %v4140, 4
      %v4788 = vsel %vm4494, %v4775, %v4787
      %4945 = vst [vmem:[%s278 + $0x480] sm:$0xe0] %v4495
      %4946 = vst [vmem:[%s278 + $0x488] sm:$0xe0] %v4496
      %4947 = vst [vmem:[%s278 + $0x490] sm:$0xe0] %v4497
      %4948 = vst [vmem:[%s278 + $0x498] sm:$0xe0] %v4498
      %4949 = vst [vmem:[%s278 + $0x4a0] sm:$0xe0] %v4499
      %4950 = vst [vmem:[%s278 + $0x4a8] sm:$0xe0] %v4500
      %4951 = vst [vmem:[%s278 + $0x4b0] sm:$0xff] %v4502
      %4952 = vst [vmem:[%s278 + $0x4b8] sm:$0xff] %v4504
      %4953 = vst [vmem:[%s278 + $0x4c0] sm:$0xff] %v4506
      %4954 = vst [vmem:[%s278 + $0x4c8] sm:$0xff] %v4508
      %4955 = vst [vmem:[%s278 + $0x4d0] sm:$0xff] %v4510
      %4956 = vst [vmem:[%s278 + $0x4d8] sm:$0xff] %v4512
      %4957 = vst [vmem:[%s278 + $0x4e0] sm:$0xff] %v4514
      %4958 = vst [vmem:[%s278 + $0x4e8] sm:$0xff] %v4516
      %4959 = vst [vmem:[%s278 + $0x4f0] sm:$0xff] %v4518
      %4960 = vst [vmem:[%s278 + $0x4f8] sm:$0xff] %v4520
      %4961 = vst [vmem:[%s278 + $0x500] sm:$0xff] %v4522
      %4962 = vst [vmem:[%s278 + $0x508] sm:$0xff] %v4524
      %4963 = vst [vmem:[%s278 + $0x510] sm:$0xff] %v4526
      %4964 = vst [vmem:[%s278 + $0x518] sm:$0xff] %v4528
      %4965 = vst [vmem:[%s278 + $0x520] sm:$0xff] %v4530
      %4966 = vst [vmem:[%s278 + $0x528] sm:$0xff] %v4532
      %4967 = vst [vmem:[%s278 + $0x530] sm:$0xff] %v4534
      %4968 = vst [vmem:[%s278 + $0x538] sm:$0xff] %v4536
      %4969 = vst [vmem:[%s278 + $0x540] sm:$0xff] %v4538
      %4970 = vst [vmem:[%s278 + $0x548] sm:$0xff] %v4540
      %4971 = vst [vmem:[%s278 + $0x550] sm:$0xff] %v4542
      %4972 = vst [vmem:[%s278 + $0x558] sm:$0xff] %v4544
      %4973 = vst [vmem:[%s278 + $0x560] sm:$0xff] %v4546
      %4974 = vst [vmem:[%s278 + $0x568] sm:$0xff] %v4548
      %4975 = vst [vmem:[%s278 + $0x570] sm:$0xff] %v4550
      %4976 = vst [vmem:[%s278 + $0x578] sm:$0xff] %v4552
      %4977 = vst [vmem:[%s278 + $0x580] sm:$0xff] %v4554
      %4978 = vst [vmem:[%s278 + $0x588] sm:$0xff] %v4556
      %4979 = vst [vmem:[%s278 + $0x590] sm:$0xff] %v4558
      %4980 = vst [vmem:[%s278 + $0x598] sm:$0xff] %v4560
      %4981 = vst [vmem:[%s278 + $0x5a0] sm:$0xff] %v4562
      %4982 = vst [vmem:[%s278 + $0x5a8] sm:$0xff] %v4564
      %4983 = vst [vmem:[%s278 + $0x5b0] sm:$0xff] %v4566
      %4984 = vst [vmem:[%s278 + $0x5b8] sm:$0xff] %v4568
      %4985 = vst [vmem:[%s278 + $0x5c0] sm:$0xff] %v4570
      %4986 = vst [vmem:[%s278 + $0x5c8] sm:$0xff] %v4572
      %4987 = vst [vmem:[%s278 + $0x5d0] sm:$0xff] %v4574
      %4988 = vst [vmem:[%s278 + $0x5d8] sm:$0xff] %v4576
      %4989 = vst [vmem:[%s278 + $0x5e0] sm:$0xff] %v4578
      %4990 = vst [vmem:[%s278 + $0x5e8] sm:$0xff] %v4580
      %4991 = vst [vmem:[%s278 + $0x5f0] sm:$0xff] %v4582
      %4992 = vst [vmem:[%s278 + $0x5f8] sm:$0xff] %v4584
      %4993 = vst [vmem:[%s278 + $0x600] sm:$0xff] %v4586
      %4994 = vst [vmem:[%s278 + $0x608] sm:$0xff] %v4588
      %4995 = vst [vmem:[%s278 + $0x610] sm:$0xff] %v4590
      %4996 = vst [vmem:[%s278 + $0x618] sm:$0xff] %v4592
      %4997 = vst [vmem:[%s278 + $0x620] sm:$0xff] %v4594
      %4998 = vst [vmem:[%s278 + $0x628] sm:$0xff] %v4596
      %4999 = vst [vmem:[%s278 + $0x630] sm:$0xff] %v4598
      %5000 = vst [vmem:[%s278 + $0x638] sm:$0xff] %v4600
      %5001 = vst [vmem:[%s278 + $0x640] sm:$0xff] %v4602
      %5002 = vst [vmem:[%s278 + $0x648] sm:$0xff] %v4604
      %5003 = vst [vmem:[%s278 + $0x650] sm:$0xff] %v4606
      %5004 = vst [vmem:[%s278 + $0x658] sm:$0xff] %v4608
      %5005 = vst [vmem:[%s278 + $0x660] sm:$0xff] %v4610
      %5006 = vst [vmem:[%s278 + $0x668] sm:$0xff] %v4612
      %5007 = vst [vmem:[%s278 + $0x670] sm:$0xff] %v4614
      %5008 = vst [vmem:[%s278 + $0x678] sm:$0xff] %v4616
      %5009 = vst [vmem:[%s278 + $0x680] sm:$0xff] %v4618
      %5010 = vst [vmem:[%s278 + $0x688] sm:$0xff] %v4620
      %5011 = vst [vmem:[%s278 + $0x690] sm:$0xff] %v4622
      %5012 = vst [vmem:[%s278 + $0x698] sm:$0xff] %v4624
      %5013 = vst [vmem:[%s278 + $0x6a0] sm:$0xff] %v4626
      %5014 = vst [vmem:[%s278 + $0x6a8] sm:$0xff] %v4628
      %5015 = vst [vmem:[%s278 + $0x6b0] sm:$0xff] %v4630
      %5016 = vst [vmem:[%s278 + $0x6b8] sm:$0xff] %v4632
      %5017 = vst [vmem:[%s278 + $0x6c0] sm:$0xff] %v4634
      %5018 = vst [vmem:[%s278 + $0x6c8] sm:$0xff] %v4636
      %5019 = vst [vmem:[%s278 + $0x6d0] sm:$0xff] %v4638
      %5020 = vst [vmem:[%s278 + $0x6d8] sm:$0xff] %v4640
      %5021 = vst [vmem:[%s278 + $0x6e0] sm:$0xff] %v4642
      %5022 = vst [vmem:[%s278 + $0x6e8] sm:$0xff] %v4644
      %5023 = vst [vmem:[%s278 + $0x6f0] sm:$0xff] %v4646
      %5024 = vst [vmem:[%s278 + $0x6f8] sm:$0xff] %v4648
      %5025 = vst [vmem:[%s278 + $0x700] sm:$0xff] %v4650
      %5026 = vst [vmem:[%s278 + $0x708] sm:$0xff] %v4652
      %5027 = vst [vmem:[%s278 + $0x710] sm:$0xff] %v4654
      %5028 = vst [vmem:[%s278 + $0x718] sm:$0xff] %v4656
      %5029 = vst [vmem:[%s278 + $0x720] sm:$0xff] %v4658
      %5030 = vst [vmem:[%s278 + $0x728] sm:$0xff] %v4660
      %5031 = vst [vmem:[%s278 + $0x730] sm:$0xff] %v4662
      %5032 = vst [vmem:[%s278 + $0x738] sm:$0xff] %v4664
      %5033 = vst [vmem:[%s278 + $0x740] sm:$0xff] %v4666
      %5034 = vst [vmem:[%s278 + $0x748] sm:$0xff] %v4668
      %5035 = vst [vmem:[%s278 + $0x750] sm:$0xff] %v4670
      %5036 = vst [vmem:[%s278 + $0x758] sm:$0xff] %v4672
      %5037 = vst [vmem:[%s278 + $0x760] sm:$0xff] %v4674
      %5038 = vst [vmem:[%s278 + $0x768] sm:$0xff] %v4676
      %5039 = vst [vmem:[%s278 + $0x770] sm:$0xff] %v4678
      %5040 = vst [vmem:[%s278 + $0x778] sm:$0xff] %v4680
      %5041 = vst [vmem:[%s278 + $0x780] sm:$0xff] %v4682
      %5042 = vst [vmem:[%s278 + $0x788] sm:$0xff] %v4684
      %5043 = vst [vmem:[%s278 + $0x790] sm:$0xff] %v4686
      %5044 = vst [vmem:[%s278 + $0x798] sm:$0xff] %v4688
      %5045 = vst [vmem:[%s278 + $0x7a0] sm:$0xff] %v4690
      %5046 = vst [vmem:[%s278 + $0x7a8] sm:$0xff] %v4692
      %5047 = vst [vmem:[%s278 + $0x7b0] sm:$0xff] %v4694
      %5048 = vst [vmem:[%s278 + $0x7b8] sm:$0xff] %v4696
      %5049 = vst [vmem:[%s278 + $0x7c0] sm:$0xff] %v4698
      %5050 = vst [vmem:[%s278 + $0x7c8] sm:$0xff] %v4700
      %5051 = vst [vmem:[%s278 + $0x7d0] sm:$0xff] %v4702
      %5052 = vst [vmem:[%s278 + $0x7d8] sm:$0xff] %v4704
      %5053 = vst [vmem:[%s278 + $0x7e0] sm:$0xff] %v4706
      %5054 = vst [vmem:[%s278 + $0x7e8] sm:$0xff] %v4708
      %5055 = vst [vmem:[%s278 + $0x7f0] sm:$0xff] %v4710
      %5056 = vst [vmem:[%s278 + $0x7f8] sm:$0xff] %v4712
      %5057 = vst [vmem:[%s278 + $0x800] sm:$0xff] %v4714
      %5058 = vst [vmem:[%s278 + $0x808] sm:$0xff] %v4716
      %5059 = vst [vmem:[%s278 + $0x810] sm:$0xff] %v4718
      %5060 = vst [vmem:[%s278 + $0x818] sm:$0xff] %v4720
      %5061 = vst [vmem:[%s278 + $0x820] sm:$0xff] %v4722
      %5062 = vst [vmem:[%s278 + $0x828] sm:$0xff] %v4724
      %5063 = vst [vmem:[%s278 + $0x830] sm:$0xff] %v4726
      %5064 = vst [vmem:[%s278 + $0x838] sm:$0xff] %v4728
      %5065 = vst [vmem:[%s278 + $0x840] sm:$0xff] %v4730
      %5066 = vst [vmem:[%s278 + $0x848] sm:$0xff] %v4732
      %5067 = vst [vmem:[%s278 + $0x850] sm:$0xff] %v4734
      %5068 = vst [vmem:[%s278 + $0x858] sm:$0xff] %v4736
      %5069 = vst [vmem:[%s278 + $0x860] sm:$0xff] %v4738
      %5070 = vst [vmem:[%s278 + $0x868] sm:$0xff] %v4740
      %5071 = vst [vmem:[%s278 + $0x870] sm:$0xff] %v4742
      %5072 = vst [vmem:[%s278 + $0x878] sm:$0xff] %v4744
      %5073 = vst [vmem:[%s278 + $0x880] sm:$0xff] %v4746
      %5074 = vst [vmem:[%s278 + $0x888] sm:$0xff] %v4748
      %5075 = vst [vmem:[%s278 + $0x890] sm:$0xff] %v4750
      %5076 = vst [vmem:[%s278 + $0x898] sm:$0xff] %v4752
      %5077 = vst [vmem:[%s278 + $0x8a0] sm:$0xff] %v4754
      %5078 = vst [vmem:[%s278 + $0x8a8] sm:$0xff] %v4756
      %5079 = vst [vmem:[%s278 + $0x8b0] sm:$0xff] %v4758
      %5080 = vst [vmem:[%s278 + $0x8b8] sm:$0xff] %v4760
      %5081 = vst [vmem:[%s278 + $0x8c0] sm:$0xff] %v4762
      %5082 = vst [vmem:[%s278 + $0x8c8] sm:$0xff] %v4764
      %5083 = vst [vmem:[%s278 + $0x8d0] sm:$0xff] %v4766
      %5084 = vst [vmem:[%s278 + $0x8d8] sm:$0xff] %v4768
      %5085 = vst [vmem:[%s278 + $0x8e0] sm:$0xff] %v4770
      %5086 = vst [vmem:[%s278 + $0x8e8] sm:$0xff] %v4772
      %5087 = vst [vmem:[%s278 + $0x8f0] sm:$0xff] %v4774
      %5088 = vst [vmem:[%s278 + $0x8f8] sm:$0xff] %v4776
      %5089 = vst [vmem:[%s278 + $0x900] sm:$0xff] %v4778
      %5090 = vst [vmem:[%s278 + $0x908] sm:$0xff] %v4780
      %5091 = vst [vmem:[%s278 + $0x910] sm:$0xff] %v4782
      %5092 = vst [vmem:[%s278 + $0x918] sm:$0xff] %v4784
      %5093 = vst [vmem:[%s278 + $0x920] sm:$0xff] %v4786
      %5094 = vst [vmem:[%s278 + $0x928] sm:$0xff] %v4788
      %5095 = vst [vmem:[%s278 + $0x930] sm:$0x1] %v4777
      %5096 = vst [vmem:[%s278 + $0x938] sm:$0x1] %v4779
      %5097 = vst [vmem:[%s278 + $0x940] sm:$0x1] %v4781
      %5098 = vst [vmem:[%s278 + $0x948] sm:$0x1] %v4783
      %5099 = vst [vmem:[%s278 + $0x950] sm:$0x1] %v4785
      %5100 = vst [vmem:[%s278 + $0x958] sm:$0x1] %v4787
      %5101 = vst [vmem:[%s278 + $0x930] sm:$0xfe] %v3991
      %5102 = vst [vmem:[%s278 + $0x938] sm:$0xfe] %v3992
      %5103 = vst [vmem:[%s278 + $0x940] sm:$0xfe] %v3993
      %5104 = vst [vmem:[%s278 + $0x948] sm:$0xfe] %v3994
      %5105 = vst [vmem:[%s278 + $0x950] sm:$0xfe] %v3995
      %5106 = vst [vmem:[%s278 + $0x958] sm:$0xfe] %v3996
      %5107 = vst [vmem:[%s278 + $0x960] sm:$0xff] %v3997
      %5108 = vst [vmem:[%s278 + $0x968] sm:$0xff] %v3998
      %5109 = vst [vmem:[%s278 + $0x970] sm:$0xff] %v3999
      %5110 = vst [vmem:[%s278 + $0x978] sm:$0xff] %v4000
      %5111 = vst [vmem:[%s278 + $0x980] sm:$0xff] %v4001
      %5112 = vst [vmem:[%s278 + $0x988] sm:$0xff] %v4002
      %5113 = vst [vmem:[%s278 + $0x990] sm:$0xff] %v4003
      %5114 = vst [vmem:[%s278 + $0x998] sm:$0xff] %v4004
      %5115 = vst [vmem:[%s278 + $0x9a0] sm:$0xff] %v4005
      %5116 = vst [vmem:[%s278 + $0x9a8] sm:$0xff] %v4006
      %5117 = vst [vmem:[%s278 + $0x9b0] sm:$0xff] %v4007
      %5118 = vst [vmem:[%s278 + $0x9b8] sm:$0xff] %v4008
      %5119 = vst [vmem:[%s278 + $0x9c0] sm:$0xff] %v4009
      %5120 = vst [vmem:[%s278 + $0x9c8] sm:$0xff] %v4010
      %5121 = vst [vmem:[%s278 + $0x9d0] sm:$0xff] %v4011
      %5122 = vst [vmem:[%s278 + $0x9d8] sm:$0xff] %v4012
      %5123 = vst [vmem:[%s278 + $0x9e0] sm:$0xff] %v4013
      %5124 = vst [vmem:[%s278 + $0x9e8] sm:$0xff] %v4014
      %5125 = vst [vmem:[%s278 + $0x9f0] sm:$0xff] %v4015
      %5126 = vst [vmem:[%s278 + $0x9f8] sm:$0xff] %v4016
      %5127 = vst [vmem:[%s278 + $0xa00] sm:$0xff] %v4017
      %5128 = vst [vmem:[%s278 + $0xa08] sm:$0xff] %v4018
      %5129 = vst [vmem:[%s278 + $0xa10] sm:$0xff] %v4019
      %5130 = vst [vmem:[%s278 + $0xa18] sm:$0xff] %v4020
      %5131 = vst [vmem:[%s278 + $0xa20] sm:$0xff] %v4021
      %5132 = vst [vmem:[%s278 + $0xa28] sm:$0xff] %v4022
      %5133 = vst [vmem:[%s278 + $0xa30] sm:$0xff] %v4023
      %5134 = vst [vmem:[%s278 + $0xa38] sm:$0xff] %v4024
      %5135 = vst [vmem:[%s278 + $0xa40] sm:$0xff] %v4025
      %5136 = vst [vmem:[%s278 + $0xa48] sm:$0xff] %v4026
      %5137 = vst [vmem:[%s278 + $0xa50] sm:$0xff] %v4027
      %5138 = vst [vmem:[%s278 + $0xa58] sm:$0xff] %v4028
      %5139 = vst [vmem:[%s278 + $0xa60] sm:$0xff] %v4029
      %5140 = vst [vmem:[%s278 + $0xa68] sm:$0xff] %v4030
      %5141 = vst [vmem:[%s278 + $0xa70] sm:$0xff] %v4031
      %5142 = vst [vmem:[%s278 + $0xa78] sm:$0xff] %v4032
      %5143 = vst [vmem:[%s278 + $0xa80] sm:$0xff] %v4033
      %5144 = vst [vmem:[%s278 + $0xa88] sm:$0xff] %v4034
      %5145 = vst [vmem:[%s278 + $0xa90] sm:$0xff] %v4035
      %5146 = vst [vmem:[%s278 + $0xa98] sm:$0xff] %v4036
      %5147 = vst [vmem:[%s278 + $0xaa0] sm:$0xff] %v4037
      %5148 = vst [vmem:[%s278 + $0xaa8] sm:$0xff] %v4038
      %5149 = vst [vmem:[%s278 + $0xab0] sm:$0xff] %v4039
      %5150 = vst [vmem:[%s278 + $0xab8] sm:$0xff] %v4040
      %5151 = vst [vmem:[%s278 + $0xac0] sm:$0xff] %v4041
      %5152 = vst [vmem:[%s278 + $0xac8] sm:$0xff] %v4042
      %5153 = vst [vmem:[%s278 + $0xad0] sm:$0xff] %v4043
      %5154 = vst [vmem:[%s278 + $0xad8] sm:$0xff] %v4044
      %5155 = vst [vmem:[%s278 + $0xae0] sm:$0xff] %v4045
      %5156 = vst [vmem:[%s278 + $0xae8] sm:$0xff] %v4046
      %5157 = vst [vmem:[%s278 + $0xaf0] sm:$0xff] %v4047
      %5158 = vst [vmem:[%s278 + $0xaf8] sm:$0xff] %v4048
      %5159 = vst [vmem:[%s278 + $0xb00] sm:$0xff] %v4049
      %5160 = vst [vmem:[%s278 + $0xb08] sm:$0xff] %v4050
      %5161 = vst [vmem:[%s278 + $0xb10] sm:$0xff] %v4051
      %5162 = vst [vmem:[%s278 + $0xb18] sm:$0xff] %v4052
      %5163 = vst [vmem:[%s278 + $0xb20] sm:$0xff] %v4053
      %5164 = vst [vmem:[%s278 + $0xb28] sm:$0xff] %v4054
      %5165 = vst [vmem:[%s278 + $0xb30] sm:$0xff] %v4055
      %5166 = vst [vmem:[%s278 + $0xb38] sm:$0xff] %v4056
      %5167 = vst [vmem:[%s278 + $0xb40] sm:$0xff] %v4057
      %5168 = vst [vmem:[%s278 + $0xb48] sm:$0xff] %v4058
      %5169 = vst [vmem:[%s278 + $0xb50] sm:$0xff] %v4059
      %5170 = vst [vmem:[%s278 + $0xb58] sm:$0xff] %v4060
      %5171 = vst [vmem:[%s278 + $0xb60] sm:$0xff] %v4061
      %5172 = vst [vmem:[%s278 + $0xb68] sm:$0xff] %v4062
      %5173 = vst [vmem:[%s278 + $0xb70] sm:$0xff] %v4063
      %5174 = vst [vmem:[%s278 + $0xb78] sm:$0xff] %v4064
      %5175 = vst [vmem:[%s278 + $0xb80] sm:$0xff] %v4065
      %5176 = vst [vmem:[%s278 + $0xb88] sm:$0xff] %v4066
      %5177 = vst [vmem:[%s278 + $0xb90] sm:$0xff] %v4067
      %5178 = vst [vmem:[%s278 + $0xb98] sm:$0xff] %v4068
      %5179 = vst [vmem:[%s278 + $0xba0] sm:$0xff] %v4069
      %5180 = vst [vmem:[%s278 + $0xba8] sm:$0xff] %v4070
      %5181 = vst [vmem:[%s278 + $0xbb0] sm:$0xff] %v4071
      %5182 = vst [vmem:[%s278 + $0xbb8] sm:$0xff] %v4072
      %5183 = vst [vmem:[%s278 + $0xbc0] sm:$0xff] %v4073
      %5184 = vst [vmem:[%s278 + $0xbc8] sm:$0xff] %v4074
      %5185 = vst [vmem:[%s278 + $0xbd0] sm:$0xff] %v4075
      %5186 = vst [vmem:[%s278 + $0xbd8] sm:$0xff] %v4076
      %5187 = vst [vmem:[%s278 + $0xbe0] sm:$0xff] %v4077
      %5188 = vst [vmem:[%s278 + $0xbe8] sm:$0xff] %v4078
      %5189 = vst [vmem:[%s278 + $0xbf0] sm:$0xff] %v4079
      %5190 = vst [vmem:[%s278 + $0xbf8] sm:$0xff] %v4080
      %5191 = vst [vmem:[%s278 + $0xc00] sm:$0xff] %v4081
      %5192 = vst [vmem:[%s278 + $0xc08] sm:$0xff] %v4082
      %5193 = vst [vmem:[%s278 + $0xc10] sm:$0xff] %v4083
      %5194 = vst [vmem:[%s278 + $0xc18] sm:$0xff] %v4084
      %5195 = vst [vmem:[%s278 + $0xc20] sm:$0xff] %v4085
      %5196 = vst [vmem:[%s278 + $0xc28] sm:$0xff] %v4086
      %5197 = vst [vmem:[%s278 + $0xc30] sm:$0xff] %v4087
      %5198 = vst [vmem:[%s278 + $0xc38] sm:$0xff] %v4088
      %5199 = vst [vmem:[%s278 + $0xc40] sm:$0xff] %v4089
      %5200 = vst [vmem:[%s278 + $0xc48] sm:$0xff] %v4090
      %5201 = vst [vmem:[%s278 + $0xc50] sm:$0xff] %v4091
      %5202 = vst [vmem:[%s278 + $0xc58] sm:$0xff] %v4092
      %5203 = vst [vmem:[%s278 + $0xc60] sm:$0xff] %v4093
      %5204 = vst [vmem:[%s278 + $0xc68] sm:$0xff] %v4094
      %5205 = vst [vmem:[%s278 + $0xc70] sm:$0xff] %v4095
      %5206 = vst [vmem:[%s278 + $0xc78] sm:$0xff] %v4096
      %5207 = vst [vmem:[%s278 + $0xc80] sm:$0xff] %v4097
      %5208 = vst [vmem:[%s278 + $0xc88] sm:$0xff] %v4098
      %5209 = vst [vmem:[%s278 + $0xc90] sm:$0xff] %v4099
      %5210 = vst [vmem:[%s278 + $0xc98] sm:$0xff] %v4100
      %5211 = vst [vmem:[%s278 + $0xca0] sm:$0xff] %v4101
      %5212 = vst [vmem:[%s278 + $0xca8] sm:$0xff] %v4102
      %5213 = vst [vmem:[%s278 + $0xcb0] sm:$0xff] %v4103
      %5214 = vst [vmem:[%s278 + $0xcb8] sm:$0xff] %v4104
      %5215 = vst [vmem:[%s278 + $0xcc0] sm:$0xff] %v4105
      %5216 = vst [vmem:[%s278 + $0xcc8] sm:$0xff] %v4106
      %5217 = vst [vmem:[%s278 + $0xcd0] sm:$0xff] %v4107
      %5218 = vst [vmem:[%s278 + $0xcd8] sm:$0xff] %v4108
      %5219 = vst [vmem:[%s278 + $0xce0] sm:$0xff] %v4109
      %5220 = vst [vmem:[%s278 + $0xce8] sm:$0xff] %v4110
      %5221 = vst [vmem:[%s278 + $0xcf0] sm:$0xff] %v4111
      %5222 = vst [vmem:[%s278 + $0xcf8] sm:$0xff] %v4112
      %5223 = vst [vmem:[%s278 + $0xd00] sm:$0xff] %v4113
      %5224 = vst [vmem:[%s278 + $0xd08] sm:$0xff] %v4114
      %5225 = vst [vmem:[%s278 + $0xd10] sm:$0xff] %v4115
      %5226 = vst [vmem:[%s278 + $0xd18] sm:$0xff] %v4116
      %5227 = vst [vmem:[%s278 + $0xd20] sm:$0xff] %v4117
      %5228 = vst [vmem:[%s278 + $0xd28] sm:$0xff] %v4118
      %5229 = vst [vmem:[%s278 + $0xd30] sm:$0xff] %v4119
      %5230 = vst [vmem:[%s278 + $0xd38] sm:$0xff] %v4120
      %5231 = vst [vmem:[%s278 + $0xd40] sm:$0xff] %v4121
      %5232 = vst [vmem:[%s278 + $0xd48] sm:$0xff] %v4122
      %5233 = vst [vmem:[%s278 + $0xd50] sm:$0xff] %v4123
      %5234 = vst [vmem:[%s278 + $0xd58] sm:$0xff] %v4124
      %5235 = vst [vmem:[%s278 + $0xd60] sm:$0xff] %v4125
      %5236 = vst [vmem:[%s278 + $0xd68] sm:$0xff] %v4126
      %5237 = vst [vmem:[%s278 + $0xd70] sm:$0xff] %v4127
      %5238 = vst [vmem:[%s278 + $0xd78] sm:$0xff] %v4128
      %5239 = vst [vmem:[%s278 + $0xd80] sm:$0xff] %v4129
      %5240 = vst [vmem:[%s278 + $0xd88] sm:$0xff] %v4130
      %5241 = vst [vmem:[%s278 + $0xd90] sm:$0xff] %v4131
      %5242 = vst [vmem:[%s278 + $0xd98] sm:$0xff] %v4132
      %5243 = vst [vmem:[%s278 + $0xda0] sm:$0xff] %v4133
      %5244 = vst [vmem:[%s278 + $0xda8] sm:$0xff] %v4134
      %5245 = vst [vmem:[%s278 + $0xdb0] sm:$0x1f] %v4135
      %5246 = vst [vmem:[%s278 + $0xdb8] sm:$0x1f] %v4136
      %5247 = vst [vmem:[%s278 + $0xdc0] sm:$0x1f] %v4137
      %5248 = vst [vmem:[%s278 + $0xdc8] sm:$0x1f] %v4138
      %5249 = vst [vmem:[%s278 + $0xdd0] sm:$0x1f] %v4139
      %5250 = vst [vmem:[%s278 + $0xdd8] sm:$0x1f] %v4140
      %p5251 = scmp.lt.s32.totalorder %s18, 1
      %s5252 = scalar_select %p5251, %s18, 1
      %s5253 = smul.addr %s5252, 444
      %s5254 = smul.addr %s5253, 8
      %s5255 = scalar_lea.vmem %s7, %s5254
      // Predicated region
      $region49: #{tpu_custom_call.1} parent=47 // pred_check
        %p5256 = pneg %p188
      $region50: #{tpu_custom_call.1} parent=47 // pred_check_branch
        %5258 = sbr.rel (%p5256) target = $region52
      $region51: #{tpu_custom_call.1} parent=47 // pred_region
        _
      $region52: #{tpu_custom_call.1} parent=47 // pred_fallthru
        _
    $region48: #{tpu_custom_call.1} parent=5 // pred_fallthru
      _
    %p5259 = scmp.le.s32.totalorder 2, %s13
    // Predicated region
    $region53: #{tpu_custom_call.1} parent=5 // pred_check
      %p5260 = pneg %p5259
    $region54: #{tpu_custom_call.1} parent=5 // pred_check_branch
      %5262 = sbr.rel (%p5260) target = $region56
    $region55: #{tpu_custom_call.1} parent=5 // pred_region
      %s5263 = ssub.s32 %s13, 2
      // Predicated region
      $region57: #{tpu_custom_call.1} parent=55 // pred_check
        %p5264 = pneg %p194
      $region58: #{tpu_custom_call.1} parent=55 // pred_check_branch
        %5266 = sbr.rel (%p5264) target = $region60
      $region59: #{tpu_custom_call.1} parent=55 // pred_region
        %p5267 = scmp.lt.s32.totalorder %s19, 1
        %s5268 = scalar_select %p5267, %s19, 1
        %s5269 = smul.addr %s5268, 444
        %s5270 = smul.addr %s5269, 8
        %s5271 = scalar_lea.vmem %s7, %s5270
      $region60: #{tpu_custom_call.1} parent=55 // pred_fallthru
        _
    $region56: #{tpu_custom_call.1} parent=5 // pred_fallthru
      _
  $region6: #{tpu_custom_call.1} parent=0 // loop_footer
    %s17 = sadd.s32 1, %s13
  $region7: #{tpu_custom_call.1} parent=0 // loop_footer_branch
    %12 = sbr.rel target = $region3
  $region8: #{tpu_custom_call.1} parent=0 // loop_exit
    _

</llo_original>
